<compile_context>
chip_gen: v7x
topology: tpu7x:2x2x1
jax: 0.10.0
libtpu: 0.0.40
codegen_flags: <defaults>
</compile_context>

<pallas_src>
import functools

import jax
import jax.numpy as jnp
import numpy as np
from jax.experimental import pallas as pl
from jax.experimental.pallas import tpu as pltpu


def _fused_residual_lstm_kernel(x_ref, wih_ref, whh_ref, b_ref, y_ref,
                                act_scr, gx_scr, *, seq_len, batch):
    """Fused 3-layer residual LSTM over a VMEM-resident sequence.

    x_ref:   (T*B, H)      flattened seq-first input
    wih_ref: (L, H, 4H)    transposed input-hidden weights
    whh_ref: (L, H, 4H)    transposed hidden-hidden weights
    b_ref:   (L, 1, 4H)    summed biases (b_ih + b_hh)
    y_ref:   (T*B, H)      output
    act_scr: (T*B, H) f32  current layer's input / next layer's input
    gx_scr:  (T*B, 4H) f32 hoisted x-projection of the gates
    """
    T, B = seq_len, batch
    H = x_ref.shape[-1]
    L = wih_ref.shape[0]

    # Dense load of the full sequence once.
    act_scr[...] = x_ref[...].astype(jnp.float32)

    for layer in range(L):                       # static: fully unrolled (L=3)
        w_hh = whh_ref[layer]                    # (H, 4H) — loaded once per layer

        # Hoisted input projection for ALL timesteps: one (T*B,H)@(H,4H) matmul.
        gx_scr[...] = (
            jnp.dot(act_scr[...], wih_ref[layer],
                    preferred_element_type=jnp.float32)
            + b_ref[layer]
        )

        h = jnp.zeros((B, H), jnp.float32)
        c = jnp.zeros((B, H), jnp.float32)

        for t in range(T):                       # static: fully unrolled (T=8)
            r = t * B
            # Only the recurrent matmul remains on the serial path.
            gates = (gx_scr[r:r + B, :]
                     + jnp.dot(h, w_hh, preferred_element_type=jnp.float32))
            i_g = jax.nn.sigmoid(gates[:, 0 * H:1 * H])
            f_g = jax.nn.sigmoid(gates[:, 1 * H:2 * H])
            g_g = jnp.tanh(gates[:, 2 * H:3 * H])
            o_g = jax.nn.sigmoid(gates[:, 3 * H:4 * H])
            c = f_g * c + i_g * g_g
            h = o_g * jnp.tanh(c)
            # Residual connection; result becomes the next layer's input.
            act_scr[r:r + B, :] = h + act_scr[r:r + B, :]

    # One dense store of the full sequence.
    y_ref[...] = act_scr[...].astype(y_ref.dtype)


@jax.jit
def residual_lstm_forward(x, wih_all, whh_all, b_all):
    """x: (T, B, H); wih_all/whh_all: (L, H, 4H); b_all: (L, 1, 4H)."""
    T, B, H = x.shape
    x2 = x.reshape(T * B, H)   # flatten outside the kernel (free in XLA)

    kernel = functools.partial(_fused_residual_lstm_kernel,
                               seq_len=T, batch=B)
    # NOTE: at H=32 everything (x, 3x weights, scratch) is a few tens of KiB;
    # if H is scaled up (e.g. 512+) store weights in bf16 and set
    # pltpu.CompilerParams(vmem_limit_bytes=...) — not needed here.
    y2 = pl.pallas_call(
        kernel,
        out_shape=jax.ShapeDtypeStruct((T * B, H), x.dtype),
        in_specs=[pl.BlockSpec(memory_space=pltpu.MemorySpace.VMEM)] * 4,
        out_specs=pl.BlockSpec(memory_space=pltpu.MemorySpace.VMEM),
        scratch_shapes=[
            pltpu.VMEM((T * B, H), jnp.float32),       # activations
            pltpu.VMEM((T * B, 4 * H), jnp.float32),   # hoisted gate x-projection
        ],
    )(x2, wih_all, whh_all, b_all)
    return y2.reshape(T, B, H)


def init_residual_lstm_params(key, layer_num, rnn_size):
    """Parameters mimicking nn.LSTM init, stacked across layers.

    Returns (wih_all, whh_all, b_all) with shapes
    (L, H, 4H), (L, H, 4H), (L, 1, 4H); weights are transposed, biases summed
    (the kernel only ever needs b_ih + b_hh).
    """
    bound = 1.0 / np.sqrt(rnn_size)
    wih, whh, bias = [], [], []
    for _ in range(layer_num):
        key, k1, k2, k3, k4 = jax.random.split(key, 5)
        w_ih = jax.random.uniform(k1, (4 * rnn_size, rnn_size),
                                  jnp.float32, -bound, bound)
        w_hh = jax.random.uniform(k2, (4 * rnn_size, rnn_size),
                                  jnp.float32, -bound, bound)
        b_ih = jax.random.uniform(k3, (4 * rnn_size,),
                                  jnp.float32, -bound, bound)
        b_hh = jax.random.uniform(k4, (4 * rnn_size,),
                                  jnp.float32, -bound, bound)
        wih.append(w_ih.T)                    # (H, 4H)
        whh.append(w_hh.T)                    # (H, 4H)
        bias.append((b_ih + b_hh)[None, :])   # (1, 4H)
    return jnp.stack(wih, 0), jnp.stack(whh, 0), jnp.stack(bias, 0)


# ---------------- pure-JAX reference (for correctness check) ----------------
def _lstm_layer_ref(x, w_ih_t, w_hh_t, b):
    T, B, H = x.shape

    def step(carry, x_t):
        h, c = carry
        gates = x_t @ w_ih_t + h @ w_hh_t + b
        i = jax.nn.sigmoid(gates[:, 0 * H:1 * H])
        f = jax.nn.sigmoid(gates[:, 1 * H:2 * H])
        g = jnp.tanh(gates[:, 2 * H:3 * H])
        o = jax.nn.sigmoid(gates[:, 3 * H:4 * H])
        c_new = f * c + i * g
        h_new = o * jnp.tanh(c_new)
        return (h_new, c_new), h_new + x_t

    h0 = jnp.zeros((B, H), jnp.float32)
    c0 = jnp.zeros((B, H), jnp.float32)
    _, ys = jax.lax.scan(step, (h0, c0), x)
    return ys


def _residual_lstm_ref(x, wih_all, whh_all, b_all):
    out = x
    for l in range(wih_all.shape[0]):
        out = _lstm_layer_ref(out, wih_all[l], whh_all[l], b_all[l])
    return out


if __name__ == "__main__":
    T, B, H = 8, 2, 32            # seq=8, batch=2, rnn_size=32
    LAYER_NUM = 3

    # TODO(synk): training-mode dropout with p>0 not implemented (identity for p=0.0).
    key = jax.random.PRNGKey(0)
    key, kx, kp = jax.random.split(key, 3)
    x = jax.random.normal(kx, (T, B, H), jnp.float32)
    wih_all, whh_all, b_all = init_residual_lstm_params(kp, LAYER_NUM, H)

    out = residual_lstm_forward(x, wih_all, whh_all, b_all)
    out = jax.block_until_ready(out)

    ref = jax.block_until_ready(_residual_lstm_ref(x, wih_all, whh_all, b_all))
    np.testing.assert_allclose(np.asarray(out), np.asarray(ref),
                               rtol=1e-5, atol=1e-5)

    print("KERNEL_OK")
</pallas_src>

<mosaic_0001>
module attributes {stable_mosaic.version = 11 : i64} {
  func.func @_fused_residual_lstm_kernel(%arg0: memref<16x32xf32, #tpu.memory_space<vmem>>, %arg1: memref<3x32x128xf32, #tpu.memory_space<vmem>>, %arg2: memref<3x32x128xf32, #tpu.memory_space<vmem>>, %arg3: memref<3x1x128xf32, #tpu.memory_space<vmem>>, %arg4: memref<16x32xf32, #tpu.memory_space<vmem>>, %arg5: memref<16x32xf32, #tpu.memory_space<vmem>>, %arg6: memref<16x128xf32, #tpu.memory_space<vmem>>) attributes {dimension_semantics = [], scalar_prefetch = 0 : i64, scratch_operands = 2 : i64, tpu.core_type = #tpu.core_type<tc>} {
    %c0 = arith.constant 0 : index
    %c0_0 = arith.constant 0 : index
    %0 = vector.load %arg0[%c0, %c0_0] : memref<16x32xf32, #tpu.memory_space<vmem>>, vector<16x32xf32>
    %c0_1 = arith.constant 0 : index
    %c0_2 = arith.constant 0 : index
    %1 = vector.load %arg5[%c0_1, %c0_2] : memref<16x32xf32, #tpu.memory_space<vmem>>, vector<16x32xf32>
    tpu.vector_store %arg5[%c0_1, %c0_2], %0 {strides = array<i32>} : memref<16x32xf32, #tpu.memory_space<vmem>>, vector<16x32xf32>,
    %c0_3 = arith.constant 0 : index
    %c0_4 = arith.constant 0 : index
    %c0_5 = arith.constant 0 : index
    %2 = vector.load %arg2[%c0_3, %c0_4, %c0_5] : memref<3x32x128xf32, #tpu.memory_space<vmem>>, vector<1x32x128xf32>
    %3 = vector.shape_cast %2 : vector<1x32x128xf32> to vector<32x128xf32>
    %c0_6 = arith.constant 0 : index
    %c0_7 = arith.constant 0 : index
    %4 = vector.load %arg5[%c0_6, %c0_7] : memref<16x32xf32, #tpu.memory_space<vmem>>, vector<16x32xf32>
    %c0_8 = arith.constant 0 : index
    %c0_9 = arith.constant 0 : index
    %c0_10 = arith.constant 0 : index
    %5 = vector.load %arg1[%c0_8, %c0_9, %c0_10] : memref<3x32x128xf32, #tpu.memory_space<vmem>>, vector<1x32x128xf32>
    %6 = vector.shape_cast %5 : vector<1x32x128xf32> to vector<32x128xf32>
    %cst = arith.constant dense<0.000000e+00> : vector<16x128xf32>
    %7 = tpu.matmul %4, %6, %cst {dimension_numbers = #tpu.dot_dimension_numbers<[1], [0], [0], [1], [0, 0, 1, 1], [], []>} : vector<16x32xf32>, vector<32x128xf32>, vector<16x128xf32> -> vector<16x128xf32>
    %c0_11 = arith.constant 0 : index
    %c0_12 = arith.constant 0 : index
    %c0_13 = arith.constant 0 : index
    %8 = vector.load %arg3[%c0_11, %c0_12, %c0_13] : memref<3x1x128xf32, #tpu.memory_space<vmem>>, vector<1x1x128xf32>
    %9 = vector.shape_cast %8 : vector<1x1x128xf32> to vector<1x128xf32>
    %10 = vector.broadcast %9 : vector<1x128xf32> to vector<16x128xf32>
    %11 = arith.addf %7, %10 : vector<16x128xf32>
    %c0_14 = arith.constant 0 : index
    %c0_15 = arith.constant 0 : index
    %12 = vector.load %arg6[%c0_14, %c0_15] : memref<16x128xf32, #tpu.memory_space<vmem>>, vector<16x128xf32>
    tpu.vector_store %arg6[%c0_14, %c0_15], %11 {strides = array<i32>} : memref<16x128xf32, #tpu.memory_space<vmem>>, vector<16x128xf32>,
    %cst_16 = arith.constant 0.000000e+00 : f32
    %13 = vector.broadcast %cst_16 : f32 to vector<2x32xf32>
    %cst_17 = arith.constant 0.000000e+00 : f32
    %14 = vector.broadcast %cst_17 : f32 to vector<2x32xf32>
    %c0_18 = arith.constant 0 : index
    %c0_19 = arith.constant 0 : index
    %15 = vector.load %arg6[%c0_18, %c0_19] : memref<16x128xf32, #tpu.memory_space<vmem>>, vector<2x128xf32>
    %cst_20 = arith.constant dense<0.000000e+00> : vector<2x128xf32>
    %16 = tpu.matmul %13, %3, %cst_20 {dimension_numbers = #tpu.dot_dimension_numbers<[1], [0], [0], [1], [0, 0, 1, 1], [], []>} : vector<2x32xf32>, vector<32x128xf32>, vector<2x128xf32> -> vector<2x128xf32>
    %17 = arith.addf %15, %16 : vector<2x128xf32>
    %18 = vector.extract_strided_slice %17 {offsets = [0, 0], sizes = [2, 32], strides = [1, 1]} : vector<2x128xf32> to vector<2x32xf32>
    %19 = arith.negf %18 : vector<2x32xf32>
    %20 = math.exp %19 : vector<2x32xf32>
    %cst_21 = arith.constant 1.000000e+00 : f32
    %21 = vector.broadcast %cst_21 : f32 to vector<2x32xf32>
    %22 = arith.addf %21, %20 : vector<2x32xf32>
    %23 = arith.divf %21, %22 : vector<2x32xf32>
    %24 = vector.extract_strided_slice %17 {offsets = [0, 32], sizes = [2, 32], strides = [1, 1]} : vector<2x128xf32> to vector<2x32xf32>
    %25 = arith.negf %24 : vector<2x32xf32>
    %26 = math.exp %25 : vector<2x32xf32>
    %cst_22 = arith.constant 1.000000e+00 : f32
    %27 = vector.broadcast %cst_22 : f32 to vector<2x32xf32>
    %28 = arith.addf %27, %26 : vector<2x32xf32>
    %29 = arith.divf %27, %28 : vector<2x32xf32>
    %30 = vector.extract_strided_slice %17 {offsets = [0, 64], sizes = [2, 32], strides = [1, 1]} : vector<2x128xf32> to vector<2x32xf32>
    %31 = math.tanh %30 : vector<2x32xf32>
    %32 = vector.extract_strided_slice %17 {offsets = [0, 96], sizes = [2, 32], strides = [1, 1]} : vector<2x128xf32> to vector<2x32xf32>
    %33 = arith.negf %32 : vector<2x32xf32>
    %34 = math.exp %33 : vector<2x32xf32>
    %cst_23 = arith.constant 1.000000e+00 : f32
    %35 = vector.broadcast %cst_23 : f32 to vector<2x32xf32>
    %36 = arith.addf %35, %34 : vector<2x32xf32>
    %37 = arith.divf %35, %36 : vector<2x32xf32>
    %38 = arith.mulf %29, %14 : vector<2x32xf32>
    %39 = arith.mulf %23, %31 : vector<2x32xf32>
    %40 = arith.addf %38, %39 : vector<2x32xf32>
    %41 = math.tanh %40 : vector<2x32xf32>
    %42 = arith.mulf %37, %41 : vector<2x32xf32>
    %c0_24 = arith.constant 0 : index
    %c0_25 = arith.constant 0 : index
    %43 = vector.load %arg5[%c0_24, %c0_25] : memref<16x32xf32, #tpu.memory_space<vmem>>, vector<2x32xf32>
    %44 = arith.addf %42, %43 : vector<2x32xf32>
    %c0_26 = arith.constant 0 : index
    %c0_27 = arith.constant 0 : index
    %45 = vector.load %arg5[%c0_26, %c0_27] : memref<16x32xf32, #tpu.memory_space<vmem>>, vector<2x32xf32>
    tpu.vector_store %arg5[%c0_26, %c0_27], %44 {strides = array<i32>} : memref<16x32xf32, #tpu.memory_space<vmem>>, vector<2x32xf32>,
    %c2 = arith.constant 2 : index
    %c0_28 = arith.constant 0 : index
    %46 = vector.load %arg6[%c2, %c0_28] : memref<16x128xf32, #tpu.memory_space<vmem>>, vector<2x128xf32>
    %cst_29 = arith.constant dense<0.000000e+00> : vector<2x128xf32>
    %47 = tpu.matmul %42, %3, %cst_29 {dimension_numbers = #tpu.dot_dimension_numbers<[1], [0], [0], [1], [0, 0, 1, 1], [], []>} : vector<2x32xf32>, vector<32x128xf32>, vector<2x128xf32> -> vector<2x128xf32>
    %48 = arith.addf %46, %47 : vector<2x128xf32>
    %49 = vector.extract_strided_slice %48 {offsets = [0, 0], sizes = [2, 32], strides = [1, 1]} : vector<2x128xf32> to vector<2x32xf32>
    %50 = arith.negf %49 : vector<2x32xf32>
    %51 = math.exp %50 : vector<2x32xf32>
    %cst_30 = arith.constant 1.000000e+00 : f32
    %52 = vector.broadcast %cst_30 : f32 to vector<2x32xf32>
    %53 = arith.addf %52, %51 : vector<2x32xf32>
    %54 = arith.divf %52, %53 : vector<2x32xf32>
    %55 = vector.extract_strided_slice %48 {offsets = [0, 32], sizes = [2, 32], strides = [1, 1]} : vector<2x128xf32> to vector<2x32xf32>
    %56 = arith.negf %55 : vector<2x32xf32>
    %57 = math.exp %56 : vector<2x32xf32>
    %cst_31 = arith.constant 1.000000e+00 : f32
    %58 = vector.broadcast %cst_31 : f32 to vector<2x32xf32>
    %59 = arith.addf %58, %57 : vector<2x32xf32>
    %60 = arith.divf %58, %59 : vector<2x32xf32>
    %61 = vector.extract_strided_slice %48 {offsets = [0, 64], sizes = [2, 32], strides = [1, 1]} : vector<2x128xf32> to vector<2x32xf32>
    %62 = math.tanh %61 : vector<2x32xf32>
    %63 = vector.extract_strided_slice %48 {offsets = [0, 96], sizes = [2, 32], strides = [1, 1]} : vector<2x128xf32> to vector<2x32xf32>
    %64 = arith.negf %63 : vector<2x32xf32>
    %65 = math.exp %64 : vector<2x32xf32>
    %cst_32 = arith.constant 1.000000e+00 : f32
    %66 = vector.broadcast %cst_32 : f32 to vector<2x32xf32>
    %67 = arith.addf %66, %65 : vector<2x32xf32>
    %68 = arith.divf %66, %67 : vector<2x32xf32>
    %69 = arith.mulf %60, %40 : vector<2x32xf32>
    %70 = arith.mulf %54, %62 : vector<2x32xf32>
    %71 = arith.addf %69, %70 : vector<2x32xf32>
    %72 = math.tanh %71 : vector<2x32xf32>
    %73 = arith.mulf %68, %72 : vector<2x32xf32>
    %c2_33 = arith.constant 2 : index
    %c0_34 = arith.constant 0 : index
    %74 = vector.load %arg5[%c2_33, %c0_34] : memref<16x32xf32, #tpu.memory_space<vmem>>, vector<2x32xf32>
    %75 = arith.addf %73, %74 : vector<2x32xf32>
    %c2_35 = arith.constant 2 : index
    %c0_36 = arith.constant 0 : index
    %76 = vector.load %arg5[%c2_35, %c0_36] : memref<16x32xf32, #tpu.memory_space<vmem>>, vector<2x32xf32>
    tpu.vector_store %arg5[%c2_35, %c0_36], %75 {strides = array<i32>} : memref<16x32xf32, #tpu.memory_space<vmem>>, vector<2x32xf32>,
    %c4 = arith.constant 4 : index
    %c0_37 = arith.constant 0 : index
    %77 = vector.load %arg6[%c4, %c0_37] : memref<16x128xf32, #tpu.memory_space<vmem>>, vector<2x128xf32>
    %cst_38 = arith.constant dense<0.000000e+00> : vector<2x128xf32>
    %78 = tpu.matmul %73, %3, %cst_38 {dimension_numbers = #tpu.dot_dimension_numbers<[1], [0], [0], [1], [0, 0, 1, 1], [], []>} : vector<2x32xf32>, vector<32x128xf32>, vector<2x128xf32> -> vector<2x128xf32>
    %79 = arith.addf %77, %78 : vector<2x128xf32>
    %80 = vector.extract_strided_slice %79 {offsets = [0, 0], sizes = [2, 32], strides = [1, 1]} : vector<2x128xf32> to vector<2x32xf32>
    %81 = arith.negf %80 : vector<2x32xf32>
    %82 = math.exp %81 : vector<2x32xf32>
    %cst_39 = arith.constant 1.000000e+00 : f32
    %83 = vector.broadcast %cst_39 : f32 to vector<2x32xf32>
    %84 = arith.addf %83, %82 : vector<2x32xf32>
    %85 = arith.divf %83, %84 : vector<2x32xf32>
    %86 = vector.extract_strided_slice %79 {offsets = [0, 32], sizes = [2, 32], strides = [1, 1]} : vector<2x128xf32> to vector<2x32xf32>
    %87 = arith.negf %86 : vector<2x32xf32>
    %88 = math.exp %87 : vector<2x32xf32>
    %cst_40 = arith.constant 1.000000e+00 : f32
    %89 = vector.broadcast %cst_40 : f32 to vector<2x32xf32>
    %90 = arith.addf %89, %88 : vector<2x32xf32>
    %91 = arith.divf %89, %90 : vector<2x32xf32>
    %92 = vector.extract_strided_slice %79 {offsets = [0, 64], sizes = [2, 32], strides = [1, 1]} : vector<2x128xf32> to vector<2x32xf32>
    %93 = math.tanh %92 : vector<2x32xf32>
    %94 = vector.extract_strided_slice %79 {offsets = [0, 96], sizes = [2, 32], strides = [1, 1]} : vector<2x128xf32> to vector<2x32xf32>
    %95 = arith.negf %94 : vector<2x32xf32>
    %96 = math.exp %95 : vector<2x32xf32>
    %cst_41 = arith.constant 1.000000e+00 : f32
    %97 = vector.broadcast %cst_41 : f32 to vector<2x32xf32>
    %98 = arith.addf %97, %96 : vector<2x32xf32>
    %99 = arith.divf %97, %98 : vector<2x32xf32>
    %100 = arith.mulf %91, %71 : vector<2x32xf32>
    %101 = arith.mulf %85, %93 : vector<2x32xf32>
    %102 = arith.addf %100, %101 : vector<2x32xf32>
    %103 = math.tanh %102 : vector<2x32xf32>
    %104 = arith.mulf %99, %103 : vector<2x32xf32>
    %c4_42 = arith.constant 4 : index
    %c0_43 = arith.constant 0 : index
    %105 = vector.load %arg5[%c4_42, %c0_43] : memref<16x32xf32, #tpu.memory_space<vmem>>, vector<2x32xf32>
    %106 = arith.addf %104, %105 : vector<2x32xf32>
    %c4_44 = arith.constant 4 : index
    %c0_45 = arith.constant 0 : index
    %107 = vector.load %arg5[%c4_44, %c0_45] : memref<16x32xf32, #tpu.memory_space<vmem>>, vector<2x32xf32>
    tpu.vector_store %arg5[%c4_44, %c0_45], %106 {strides = array<i32>} : memref<16x32xf32, #tpu.memory_space<vmem>>, vector<2x32xf32>,
    %c6 = arith.constant 6 : index
    %c0_46 = arith.constant 0 : index
    %108 = vector.load %arg6[%c6, %c0_46] : memref<16x128xf32, #tpu.memory_space<vmem>>, vector<2x128xf32>
    %cst_47 = arith.constant dense<0.000000e+00> : vector<2x128xf32>
    %109 = tpu.matmul %104, %3, %cst_47 {dimension_numbers = #tpu.dot_dimension_numbers<[1], [0], [0], [1], [0, 0, 1, 1], [], []>} : vector<2x32xf32>, vector<32x128xf32>, vector<2x128xf32> -> vector<2x128xf32>
    %110 = arith.addf %108, %109 : vector<2x128xf32>
    %111 = vector.extract_strided_slice %110 {offsets = [0, 0], sizes = [2, 32], strides = [1, 1]} : vector<2x128xf32> to vector<2x32xf32>
    %112 = arith.negf %111 : vector<2x32xf32>
    %113 = math.exp %112 : vector<2x32xf32>
    %cst_48 = arith.constant 1.000000e+00 : f32
    %114 = vector.broadcast %cst_48 : f32 to vector<2x32xf32>
    %115 = arith.addf %114, %113 : vector<2x32xf32>
    %116 = arith.divf %114, %115 : vector<2x32xf32>
    %117 = vector.extract_strided_slice %110 {offsets = [0, 32], sizes = [2, 32], strides = [1, 1]} : vector<2x128xf32> to vector<2x32xf32>
    %118 = arith.negf %117 : vector<2x32xf32>
    %119 = math.exp %118 : vector<2x32xf32>
    %cst_49 = arith.constant 1.000000e+00 : f32
    %120 = vector.broadcast %cst_49 : f32 to vector<2x32xf32>
    %121 = arith.addf %120, %119 : vector<2x32xf32>
    %122 = arith.divf %120, %121 : vector<2x32xf32>
    %123 = vector.extract_strided_slice %110 {offsets = [0, 64], sizes = [2, 32], strides = [1, 1]} : vector<2x128xf32> to vector<2x32xf32>
    %124 = math.tanh %123 : vector<2x32xf32>
    %125 = vector.extract_strided_slice %110 {offsets = [0, 96], sizes = [2, 32], strides = [1, 1]} : vector<2x128xf32> to vector<2x32xf32>
    %126 = arith.negf %125 : vector<2x32xf32>
    %127 = math.exp %126 : vector<2x32xf32>
    %cst_50 = arith.constant 1.000000e+00 : f32
    %128 = vector.broadcast %cst_50 : f32 to vector<2x32xf32>
    %129 = arith.addf %128, %127 : vector<2x32xf32>
    %130 = arith.divf %128, %129 : vector<2x32xf32>
    %131 = arith.mulf %122, %102 : vector<2x32xf32>
    %132 = arith.mulf %116, %124 : vector<2x32xf32>
    %133 = arith.addf %131, %132 : vector<2x32xf32>
    %134 = math.tanh %133 : vector<2x32xf32>
    %135 = arith.mulf %130, %134 : vector<2x32xf32>
    %c6_51 = arith.constant 6 : index
    %c0_52 = arith.constant 0 : index
    %136 = vector.load %arg5[%c6_51, %c0_52] : memref<16x32xf32, #tpu.memory_space<vmem>>, vector<2x32xf32>
    %137 = arith.addf %135, %136 : vector<2x32xf32>
    %c6_53 = arith.constant 6 : index
    %c0_54 = arith.constant 0 : index
    %138 = vector.load %arg5[%c6_53, %c0_54] : memref<16x32xf32, #tpu.memory_space<vmem>>, vector<2x32xf32>
    tpu.vector_store %arg5[%c6_53, %c0_54], %137 {strides = array<i32>} : memref<16x32xf32, #tpu.memory_space<vmem>>, vector<2x32xf32>,
    %c8 = arith.constant 8 : index
    %c0_55 = arith.constant 0 : index
    %139 = vector.load %arg6[%c8, %c0_55] : memref<16x128xf32, #tpu.memory_space<vmem>>, vector<2x128xf32>
    %cst_56 = arith.constant dense<0.000000e+00> : vector<2x128xf32>
    %140 = tpu.matmul %135, %3, %cst_56 {dimension_numbers = #tpu.dot_dimension_numbers<[1], [0], [0], [1], [0, 0, 1, 1], [], []>} : vector<2x32xf32>, vector<32x128xf32>, vector<2x128xf32> -> vector<2x128xf32>
    %141 = arith.addf %139, %140 : vector<2x128xf32>
    %142 = vector.extract_strided_slice %141 {offsets = [0, 0], sizes = [2, 32], strides = [1, 1]} : vector<2x128xf32> to vector<2x32xf32>
    %143 = arith.negf %142 : vector<2x32xf32>
    %144 = math.exp %143 : vector<2x32xf32>
    %cst_57 = arith.constant 1.000000e+00 : f32
    %145 = vector.broadcast %cst_57 : f32 to vector<2x32xf32>
    %146 = arith.addf %145, %144 : vector<2x32xf32>
    %147 = arith.divf %145, %146 : vector<2x32xf32>
    %148 = vector.extract_strided_slice %141 {offsets = [0, 32], sizes = [2, 32], strides = [1, 1]} : vector<2x128xf32> to vector<2x32xf32>
    %149 = arith.negf %148 : vector<2x32xf32>
    %150 = math.exp %149 : vector<2x32xf32>
    %cst_58 = arith.constant 1.000000e+00 : f32
    %151 = vector.broadcast %cst_58 : f32 to vector<2x32xf32>
    %152 = arith.addf %151, %150 : vector<2x32xf32>
    %153 = arith.divf %151, %152 : vector<2x32xf32>
    %154 = vector.extract_strided_slice %141 {offsets = [0, 64], sizes = [2, 32], strides = [1, 1]} : vector<2x128xf32> to vector<2x32xf32>
    %155 = math.tanh %154 : vector<2x32xf32>
    %156 = vector.extract_strided_slice %141 {offsets = [0, 96], sizes = [2, 32], strides = [1, 1]} : vector<2x128xf32> to vector<2x32xf32>
    %157 = arith.negf %156 : vector<2x32xf32>
    %158 = math.exp %157 : vector<2x32xf32>
    %cst_59 = arith.constant 1.000000e+00 : f32
    %159 = vector.broadcast %cst_59 : f32 to vector<2x32xf32>
    %160 = arith.addf %159, %158 : vector<2x32xf32>
    %161 = arith.divf %159, %160 : vector<2x32xf32>
    %162 = arith.mulf %153, %133 : vector<2x32xf32>
    %163 = arith.mulf %147, %155 : vector<2x32xf32>
    %164 = arith.addf %162, %163 : vector<2x32xf32>
    %165 = math.tanh %164 : vector<2x32xf32>
    %166 = arith.mulf %161, %165 : vector<2x32xf32>
    %c8_60 = arith.constant 8 : index
    %c0_61 = arith.constant 0 : index
    %167 = vector.load %arg5[%c8_60, %c0_61] : memref<16x32xf32, #tpu.memory_space<vmem>>, vector<2x32xf32>
    %168 = arith.addf %166, %167 : vector<2x32xf32>
    %c8_62 = arith.constant 8 : index
    %c0_63 = arith.constant 0 : index
    %169 = vector.load %arg5[%c8_62, %c0_63] : memref<16x32xf32, #tpu.memory_space<vmem>>, vector<2x32xf32>
    tpu.vector_store %arg5[%c8_62, %c0_63], %168 {strides = array<i32>} : memref<16x32xf32, #tpu.memory_space<vmem>>, vector<2x32xf32>,
    %c10 = arith.constant 10 : index
    %c0_64 = arith.constant 0 : index
    %170 = vector.load %arg6[%c10, %c0_64] : memref<16x128xf32, #tpu.memory_space<vmem>>, vector<2x128xf32>
    %cst_65 = arith.constant dense<0.000000e+00> : vector<2x128xf32>
    %171 = tpu.matmul %166, %3, %cst_65 {dimension_numbers = #tpu.dot_dimension_numbers<[1], [0], [0], [1], [0, 0, 1, 1], [], []>} : vector<2x32xf32>, vector<32x128xf32>, vector<2x128xf32> -> vector<2x128xf32>
    %172 = arith.addf %170, %171 : vector<2x128xf32>
    %173 = vector.extract_strided_slice %172 {offsets = [0, 0], sizes = [2, 32], strides = [1, 1]} : vector<2x128xf32> to vector<2x32xf32>
    %174 = arith.negf %173 : vector<2x32xf32>
    %175 = math.exp %174 : vector<2x32xf32>
    %cst_66 = arith.constant 1.000000e+00 : f32
    %176 = vector.broadcast %cst_66 : f32 to vector<2x32xf32>
    %177 = arith.addf %176, %175 : vector<2x32xf32>
    %178 = arith.divf %176, %177 : vector<2x32xf32>
    %179 = vector.extract_strided_slice %172 {offsets = [0, 32], sizes = [2, 32], strides = [1, 1]} : vector<2x128xf32> to vector<2x32xf32>
    %180 = arith.negf %179 : vector<2x32xf32>
    %181 = math.exp %180 : vector<2x32xf32>
    %cst_67 = arith.constant 1.000000e+00 : f32
    %182 = vector.broadcast %cst_67 : f32 to vector<2x32xf32>
    %183 = arith.addf %182, %181 : vector<2x32xf32>
    %184 = arith.divf %182, %183 : vector<2x32xf32>
    %185 = vector.extract_strided_slice %172 {offsets = [0, 64], sizes = [2, 32], strides = [1, 1]} : vector<2x128xf32> to vector<2x32xf32>
    %186 = math.tanh %185 : vector<2x32xf32>
    %187 = vector.extract_strided_slice %172 {offsets = [0, 96], sizes = [2, 32], strides = [1, 1]} : vector<2x128xf32> to vector<2x32xf32>
    %188 = arith.negf %187 : vector<2x32xf32>
    %189 = math.exp %188 : vector<2x32xf32>
    %cst_68 = arith.constant 1.000000e+00 : f32
    %190 = vector.broadcast %cst_68 : f32 to vector<2x32xf32>
    %191 = arith.addf %190, %189 : vector<2x32xf32>
    %192 = arith.divf %190, %191 : vector<2x32xf32>
    %193 = arith.mulf %184, %164 : vector<2x32xf32>
    %194 = arith.mulf %178, %186 : vector<2x32xf32>
    %195 = arith.addf %193, %194 : vector<2x32xf32>
    %196 = math.tanh %195 : vector<2x32xf32>
    %197 = arith.mulf %192, %196 : vector<2x32xf32>
    %c10_69 = arith.constant 10 : index
    %c0_70 = arith.constant 0 : index
    %198 = vector.load %arg5[%c10_69, %c0_70] : memref<16x32xf32, #tpu.memory_space<vmem>>, vector<2x32xf32>
    %199 = arith.addf %197, %198 : vector<2x32xf32>
    %c10_71 = arith.constant 10 : index
    %c0_72 = arith.constant 0 : index
    %200 = vector.load %arg5[%c10_71, %c0_72] : memref<16x32xf32, #tpu.memory_space<vmem>>, vector<2x32xf32>
    tpu.vector_store %arg5[%c10_71, %c0_72], %199 {strides = array<i32>} : memref<16x32xf32, #tpu.memory_space<vmem>>, vector<2x32xf32>,
    %c12 = arith.constant 12 : index
    %c0_73 = arith.constant 0 : index
    %201 = vector.load %arg6[%c12, %c0_73] : memref<16x128xf32, #tpu.memory_space<vmem>>, vector<2x128xf32>
    %cst_74 = arith.constant dense<0.000000e+00> : vector<2x128xf32>
    %202 = tpu.matmul %197, %3, %cst_74 {dimension_numbers = #tpu.dot_dimension_numbers<[1], [0], [0], [1], [0, 0, 1, 1], [], []>} : vector<2x32xf32>, vector<32x128xf32>, vector<2x128xf32> -> vector<2x128xf32>
    %203 = arith.addf %201, %202 : vector<2x128xf32>
    %204 = vector.extract_strided_slice %203 {offsets = [0, 0], sizes = [2, 32], strides = [1, 1]} : vector<2x128xf32> to vector<2x32xf32>
    %205 = arith.negf %204 : vector<2x32xf32>
    %206 = math.exp %205 : vector<2x32xf32>
    %cst_75 = arith.constant 1.000000e+00 : f32
    %207 = vector.broadcast %cst_75 : f32 to vector<2x32xf32>
    %208 = arith.addf %207, %206 : vector<2x32xf32>
    %209 = arith.divf %207, %208 : vector<2x32xf32>
    %210 = vector.extract_strided_slice %203 {offsets = [0, 32], sizes = [2, 32], strides = [1, 1]} : vector<2x128xf32> to vector<2x32xf32>
    %211 = arith.negf %210 : vector<2x32xf32>
    %212 = math.exp %211 : vector<2x32xf32>
    %cst_76 = arith.constant 1.000000e+00 : f32
    %213 = vector.broadcast %cst_76 : f32 to vector<2x32xf32>
    %214 = arith.addf %213, %212 : vector<2x32xf32>
    %215 = arith.divf %213, %214 : vector<2x32xf32>
    %216 = vector.extract_strided_slice %203 {offsets = [0, 64], sizes = [2, 32], strides = [1, 1]} : vector<2x128xf32> to vector<2x32xf32>
    %217 = math.tanh %216 : vector<2x32xf32>
    %218 = vector.extract_strided_slice %203 {offsets = [0, 96], sizes = [2, 32], strides = [1, 1]} : vector<2x128xf32> to vector<2x32xf32>
    %219 = arith.negf %218 : vector<2x32xf32>
    %220 = math.exp %219 : vector<2x32xf32>
    %cst_77 = arith.constant 1.000000e+00 : f32
    %221 = vector.broadcast %cst_77 : f32 to vector<2x32xf32>
    %222 = arith.addf %221, %220 : vector<2x32xf32>
    %223 = arith.divf %221, %222 : vector<2x32xf32>
    %224 = arith.mulf %215, %195 : vector<2x32xf32>
    %225 = arith.mulf %209, %217 : vector<2x32xf32>
    %226 = arith.addf %224, %225 : vector<2x32xf32>
    %227 = math.tanh %226 : vector<2x32xf32>
    %228 = arith.mulf %223, %227 : vector<2x32xf32>
    %c12_78 = arith.constant 12 : index
    %c0_79 = arith.constant 0 : index
    %229 = vector.load %arg5[%c12_78, %c0_79] : memref<16x32xf32, #tpu.memory_space<vmem>>, vector<2x32xf32>
    %230 = arith.addf %228, %229 : vector<2x32xf32>
    %c12_80 = arith.constant 12 : index
    %c0_81 = arith.constant 0 : index
    %231 = vector.load %arg5[%c12_80, %c0_81] : memref<16x32xf32, #tpu.memory_space<vmem>>, vector<2x32xf32>
    tpu.vector_store %arg5[%c12_80, %c0_81], %230 {strides = array<i32>} : memref<16x32xf32, #tpu.memory_space<vmem>>, vector<2x32xf32>,
    %c14 = arith.constant 14 : index
    %c0_82 = arith.constant 0 : index
    %232 = vector.load %arg6[%c14, %c0_82] : memref<16x128xf32, #tpu.memory_space<vmem>>, vector<2x128xf32>
    %cst_83 = arith.constant dense<0.000000e+00> : vector<2x128xf32>
    %233 = tpu.matmul %228, %3, %cst_83 {dimension_numbers = #tpu.dot_dimension_numbers<[1], [0], [0], [1], [0, 0, 1, 1], [], []>} : vector<2x32xf32>, vector<32x128xf32>, vector<2x128xf32> -> vector<2x128xf32>
    %234 = arith.addf %232, %233 : vector<2x128xf32>
    %235 = vector.extract_strided_slice %234 {offsets = [0, 0], sizes = [2, 32], strides = [1, 1]} : vector<2x128xf32> to vector<2x32xf32>
    %236 = arith.negf %235 : vector<2x32xf32>
    %237 = math.exp %236 : vector<2x32xf32>
    %cst_84 = arith.constant 1.000000e+00 : f32
    %238 = vector.broadcast %cst_84 : f32 to vector<2x32xf32>
    %239 = arith.addf %238, %237 : vector<2x32xf32>
    %240 = arith.divf %238, %239 : vector<2x32xf32>
    %241 = vector.extract_strided_slice %234 {offsets = [0, 32], sizes = [2, 32], strides = [1, 1]} : vector<2x128xf32> to vector<2x32xf32>
    %242 = arith.negf %241 : vector<2x32xf32>
    %243 = math.exp %242 : vector<2x32xf32>
    %cst_85 = arith.constant 1.000000e+00 : f32
    %244 = vector.broadcast %cst_85 : f32 to vector<2x32xf32>
    %245 = arith.addf %244, %243 : vector<2x32xf32>
    %246 = arith.divf %244, %245 : vector<2x32xf32>
    %247 = vector.extract_strided_slice %234 {offsets = [0, 64], sizes = [2, 32], strides = [1, 1]} : vector<2x128xf32> to vector<2x32xf32>
    %248 = math.tanh %247 : vector<2x32xf32>
    %249 = vector.extract_strided_slice %234 {offsets = [0, 96], sizes = [2, 32], strides = [1, 1]} : vector<2x128xf32> to vector<2x32xf32>
    %250 = arith.negf %249 : vector<2x32xf32>
    %251 = math.exp %250 : vector<2x32xf32>
    %cst_86 = arith.constant 1.000000e+00 : f32
    %252 = vector.broadcast %cst_86 : f32 to vector<2x32xf32>
    %253 = arith.addf %252, %251 : vector<2x32xf32>
    %254 = arith.divf %252, %253 : vector<2x32xf32>
    %255 = arith.mulf %246, %226 : vector<2x32xf32>
    %256 = arith.mulf %240, %248 : vector<2x32xf32>
    %257 = arith.addf %255, %256 : vector<2x32xf32>
    %258 = math.tanh %257 : vector<2x32xf32>
    %259 = arith.mulf %254, %258 : vector<2x32xf32>
    %c14_87 = arith.constant 14 : index
    %c0_88 = arith.constant 0 : index
    %260 = vector.load %arg5[%c14_87, %c0_88] : memref<16x32xf32, #tpu.memory_space<vmem>>, vector<2x32xf32>
    %261 = arith.addf %259, %260 : vector<2x32xf32>
    %c14_89 = arith.constant 14 : index
    %c0_90 = arith.constant 0 : index
    %262 = vector.load %arg5[%c14_89, %c0_90] : memref<16x32xf32, #tpu.memory_space<vmem>>, vector<2x32xf32>
    tpu.vector_store %arg5[%c14_89, %c0_90], %261 {strides = array<i32>} : memref<16x32xf32, #tpu.memory_space<vmem>>, vector<2x32xf32>,
    %c1 = arith.constant 1 : index
    %c0_91 = arith.constant 0 : index
    %c0_92 = arith.constant 0 : index
    %263 = vector.load %arg2[%c1, %c0_91, %c0_92] : memref<3x32x128xf32, #tpu.memory_space<vmem>>, vector<1x32x128xf32>
    %264 = vector.shape_cast %263 : vector<1x32x128xf32> to vector<32x128xf32>
    %c0_93 = arith.constant 0 : index
    %c0_94 = arith.constant 0 : index
    %265 = vector.load %arg5[%c0_93, %c0_94] : memref<16x32xf32, #tpu.memory_space<vmem>>, vector<16x32xf32>
    %c1_95 = arith.constant 1 : index
    %c0_96 = arith.constant 0 : index
    %c0_97 = arith.constant 0 : index
    %266 = vector.load %arg1[%c1_95, %c0_96, %c0_97] : memref<3x32x128xf32, #tpu.memory_space<vmem>>, vector<1x32x128xf32>
    %267 = vector.shape_cast %266 : vector<1x32x128xf32> to vector<32x128xf32>
    %cst_98 = arith.constant dense<0.000000e+00> : vector<16x128xf32>
    %268 = tpu.matmul %265, %267, %cst_98 {dimension_numbers = #tpu.dot_dimension_numbers<[1], [0], [0], [1], [0, 0, 1, 1], [], []>} : vector<16x32xf32>, vector<32x128xf32>, vector<16x128xf32> -> vector<16x128xf32>
    %c1_99 = arith.constant 1 : index
    %c0_100 = arith.constant 0 : index
    %c0_101 = arith.constant 0 : index
    %269 = vector.load %arg3[%c1_99, %c0_100, %c0_101] : memref<3x1x128xf32, #tpu.memory_space<vmem>>, vector<1x1x128xf32>
    %270 = vector.shape_cast %269 : vector<1x1x128xf32> to vector<1x128xf32>
    %271 = vector.broadcast %270 : vector<1x128xf32> to vector<16x128xf32>
    %272 = arith.addf %268, %271 : vector<16x128xf32>
    %c0_102 = arith.constant 0 : index
    %c0_103 = arith.constant 0 : index
    %273 = vector.load %arg6[%c0_102, %c0_103] : memref<16x128xf32, #tpu.memory_space<vmem>>, vector<16x128xf32>
    tpu.vector_store %arg6[%c0_102, %c0_103], %272 {strides = array<i32>} : memref<16x128xf32, #tpu.memory_space<vmem>>, vector<16x128xf32>,
    %cst_104 = arith.constant 0.000000e+00 : f32
    %274 = vector.broadcast %cst_104 : f32 to vector<2x32xf32>
    %cst_105 = arith.constant 0.000000e+00 : f32
    %275 = vector.broadcast %cst_105 : f32 to vector<2x32xf32>
    %c0_106 = arith.constant 0 : index
    %c0_107 = arith.constant 0 : index
    %276 = vector.load %arg6[%c0_106, %c0_107] : memref<16x128xf32, #tpu.memory_space<vmem>>, vector<2x128xf32>
    %cst_108 = arith.constant dense<0.000000e+00> : vector<2x128xf32>
    %277 = tpu.matmul %274, %264, %cst_108 {dimension_numbers = #tpu.dot_dimension_numbers<[1], [0], [0], [1], [0, 0, 1, 1], [], []>} : vector<2x32xf32>, vector<32x128xf32>, vector<2x128xf32> -> vector<2x128xf32>
    %278 = arith.addf %276, %277 : vector<2x128xf32>
    %279 = vector.extract_strided_slice %278 {offsets = [0, 0], sizes = [2, 32], strides = [1, 1]} : vector<2x128xf32> to vector<2x32xf32>
    %280 = arith.negf %279 : vector<2x32xf32>
    %281 = math.exp %280 : vector<2x32xf32>
    %cst_109 = arith.constant 1.000000e+00 : f32
    %282 = vector.broadcast %cst_109 : f32 to vector<2x32xf32>
    %283 = arith.addf %282, %281 : vector<2x32xf32>
    %284 = arith.divf %282, %283 : vector<2x32xf32>
    %285 = vector.extract_strided_slice %278 {offsets = [0, 32], sizes = [2, 32], strides = [1, 1]} : vector<2x128xf32> to vector<2x32xf32>
    %286 = arith.negf %285 : vector<2x32xf32>
    %287 = math.exp %286 : vector<2x32xf32>
    %cst_110 = arith.constant 1.000000e+00 : f32
    %288 = vector.broadcast %cst_110 : f32 to vector<2x32xf32>
    %289 = arith.addf %288, %287 : vector<2x32xf32>
    %290 = arith.divf %288, %289 : vector<2x32xf32>
    %291 = vector.extract_strided_slice %278 {offsets = [0, 64], sizes = [2, 32], strides = [1, 1]} : vector<2x128xf32> to vector<2x32xf32>
    %292 = math.tanh %291 : vector<2x32xf32>
    %293 = vector.extract_strided_slice %278 {offsets = [0, 96], sizes = [2, 32], strides = [1, 1]} : vector<2x128xf32> to vector<2x32xf32>
    %294 = arith.negf %293 : vector<2x32xf32>
    %295 = math.exp %294 : vector<2x32xf32>
    %cst_111 = arith.constant 1.000000e+00 : f32
    %296 = vector.broadcast %cst_111 : f32 to vector<2x32xf32>
    %297 = arith.addf %296, %295 : vector<2x32xf32>
    %298 = arith.divf %296, %297 : vector<2x32xf32>
    %299 = arith.mulf %290, %275 : vector<2x32xf32>
    %300 = arith.mulf %284, %292 : vector<2x32xf32>
    %301 = arith.addf %299, %300 : vector<2x32xf32>
    %302 = math.tanh %301 : vector<2x32xf32>
    %303 = arith.mulf %298, %302 : vector<2x32xf32>
    %c0_112 = arith.constant 0 : index
    %c0_113 = arith.constant 0 : index
    %304 = vector.load %arg5[%c0_112, %c0_113] : memref<16x32xf32, #tpu.memory_space<vmem>>, vector<2x32xf32>
    %305 = arith.addf %303, %304 : vector<2x32xf32>
    %c0_114 = arith.constant 0 : index
    %c0_115 = arith.constant 0 : index
    %306 = vector.load %arg5[%c0_114, %c0_115] : memref<16x32xf32, #tpu.memory_space<vmem>>, vector<2x32xf32>
    tpu.vector_store %arg5[%c0_114, %c0_115], %305 {strides = array<i32>} : memref<16x32xf32, #tpu.memory_space<vmem>>, vector<2x32xf32>,
    %c2_116 = arith.constant 2 : index
    %c0_117 = arith.constant 0 : index
    %307 = vector.load %arg6[%c2_116, %c0_117] : memref<16x128xf32, #tpu.memory_space<vmem>>, vector<2x128xf32>
    %cst_118 = arith.constant dense<0.000000e+00> : vector<2x128xf32>
    %308 = tpu.matmul %303, %264, %cst_118 {dimension_numbers = #tpu.dot_dimension_numbers<[1], [0], [0], [1], [0, 0, 1, 1], [], []>} : vector<2x32xf32>, vector<32x128xf32>, vector<2x128xf32> -> vector<2x128xf32>
    %309 = arith.addf %307, %308 : vector<2x128xf32>
    %310 = vector.extract_strided_slice %309 {offsets = [0, 0], sizes = [2, 32], strides = [1, 1]} : vector<2x128xf32> to vector<2x32xf32>
    %311 = arith.negf %310 : vector<2x32xf32>
    %312 = math.exp %311 : vector<2x32xf32>
    %cst_119 = arith.constant 1.000000e+00 : f32
    %313 = vector.broadcast %cst_119 : f32 to vector<2x32xf32>
    %314 = arith.addf %313, %312 : vector<2x32xf32>
    %315 = arith.divf %313, %314 : vector<2x32xf32>
    %316 = vector.extract_strided_slice %309 {offsets = [0, 32], sizes = [2, 32], strides = [1, 1]} : vector<2x128xf32> to vector<2x32xf32>
    %317 = arith.negf %316 : vector<2x32xf32>
    %318 = math.exp %317 : vector<2x32xf32>
    %cst_120 = arith.constant 1.000000e+00 : f32
    %319 = vector.broadcast %cst_120 : f32 to vector<2x32xf32>
    %320 = arith.addf %319, %318 : vector<2x32xf32>
    %321 = arith.divf %319, %320 : vector<2x32xf32>
    %322 = vector.extract_strided_slice %309 {offsets = [0, 64], sizes = [2, 32], strides = [1, 1]} : vector<2x128xf32> to vector<2x32xf32>
    %323 = math.tanh %322 : vector<2x32xf32>
    %324 = vector.extract_strided_slice %309 {offsets = [0, 96], sizes = [2, 32], strides = [1, 1]} : vector<2x128xf32> to vector<2x32xf32>
    %325 = arith.negf %324 : vector<2x32xf32>
    %326 = math.exp %325 : vector<2x32xf32>
    %cst_121 = arith.constant 1.000000e+00 : f32
    %327 = vector.broadcast %cst_121 : f32 to vector<2x32xf32>
    %328 = arith.addf %327, %326 : vector<2x32xf32>
    %329 = arith.divf %327, %328 : vector<2x32xf32>
    %330 = arith.mulf %321, %301 : vector<2x32xf32>
    %331 = arith.mulf %315, %323 : vector<2x32xf32>
    %332 = arith.addf %330, %331 : vector<2x32xf32>
    %333 = math.tanh %332 : vector<2x32xf32>
    %334 = arith.mulf %329, %333 : vector<2x32xf32>
    %c2_122 = arith.constant 2 : index
    %c0_123 = arith.constant 0 : index
    %335 = vector.load %arg5[%c2_122, %c0_123] : memref<16x32xf32, #tpu.memory_space<vmem>>, vector<2x32xf32>
    %336 = arith.addf %334, %335 : vector<2x32xf32>
    %c2_124 = arith.constant 2 : index
    %c0_125 = arith.constant 0 : index
    %337 = vector.load %arg5[%c2_124, %c0_125] : memref<16x32xf32, #tpu.memory_space<vmem>>, vector<2x32xf32>
    tpu.vector_store %arg5[%c2_124, %c0_125], %336 {strides = array<i32>} : memref<16x32xf32, #tpu.memory_space<vmem>>, vector<2x32xf32>,
    %c4_126 = arith.constant 4 : index
    %c0_127 = arith.constant 0 : index
    %338 = vector.load %arg6[%c4_126, %c0_127] : memref<16x128xf32, #tpu.memory_space<vmem>>, vector<2x128xf32>
    %cst_128 = arith.constant dense<0.000000e+00> : vector<2x128xf32>
    %339 = tpu.matmul %334, %264, %cst_128 {dimension_numbers = #tpu.dot_dimension_numbers<[1], [0], [0], [1], [0, 0, 1, 1], [], []>} : vector<2x32xf32>, vector<32x128xf32>, vector<2x128xf32> -> vector<2x128xf32>
    %340 = arith.addf %338, %339 : vector<2x128xf32>
    %341 = vector.extract_strided_slice %340 {offsets = [0, 0], sizes = [2, 32], strides = [1, 1]} : vector<2x128xf32> to vector<2x32xf32>
    %342 = arith.negf %341 : vector<2x32xf32>
    %343 = math.exp %342 : vector<2x32xf32>
    %cst_129 = arith.constant 1.000000e+00 : f32
    %344 = vector.broadcast %cst_129 : f32 to vector<2x32xf32>
    %345 = arith.addf %344, %343 : vector<2x32xf32>
    %346 = arith.divf %344, %345 : vector<2x32xf32>
    %347 = vector.extract_strided_slice %340 {offsets = [0, 32], sizes = [2, 32], strides = [1, 1]} : vector<2x128xf32> to vector<2x32xf32>
    %348 = arith.negf %347 : vector<2x32xf32>
    %349 = math.exp %348 : vector<2x32xf32>
    %cst_130 = arith.constant 1.000000e+00 : f32
    %350 = vector.broadcast %cst_130 : f32 to vector<2x32xf32>
    %351 = arith.addf %350, %349 : vector<2x32xf32>
    %352 = arith.divf %350, %351 : vector<2x32xf32>
    %353 = vector.extract_strided_slice %340 {offsets = [0, 64], sizes = [2, 32], strides = [1, 1]} : vector<2x128xf32> to vector<2x32xf32>
    %354 = math.tanh %353 : vector<2x32xf32>
    %355 = vector.extract_strided_slice %340 {offsets = [0, 96], sizes = [2, 32], strides = [1, 1]} : vector<2x128xf32> to vector<2x32xf32>
    %356 = arith.negf %355 : vector<2x32xf32>
    %357 = math.exp %356 : vector<2x32xf32>
    %cst_131 = arith.constant 1.000000e+00 : f32
    %358 = vector.broadcast %cst_131 : f32 to vector<2x32xf32>
    %359 = arith.addf %358, %357 : vector<2x32xf32>
    %360 = arith.divf %358, %359 : vector<2x32xf32>
    %361 = arith.mulf %352, %332 : vector<2x32xf32>
    %362 = arith.mulf %346, %354 : vector<2x32xf32>
    %363 = arith.addf %361, %362 : vector<2x32xf32>
    %364 = math.tanh %363 : vector<2x32xf32>
    %365 = arith.mulf %360, %364 : vector<2x32xf32>
    %c4_132 = arith.constant 4 : index
    %c0_133 = arith.constant 0 : index
    %366 = vector.load %arg5[%c4_132, %c0_133] : memref<16x32xf32, #tpu.memory_space<vmem>>, vector<2x32xf32>
    %367 = arith.addf %365, %366 : vector<2x32xf32>
    %c4_134 = arith.constant 4 : index
    %c0_135 = arith.constant 0 : index
    %368 = vector.load %arg5[%c4_134, %c0_135] : memref<16x32xf32, #tpu.memory_space<vmem>>, vector<2x32xf32>
    tpu.vector_store %arg5[%c4_134, %c0_135], %367 {strides = array<i32>} : memref<16x32xf32, #tpu.memory_space<vmem>>, vector<2x32xf32>,
    %c6_136 = arith.constant 6 : index
    %c0_137 = arith.constant 0 : index
    %369 = vector.load %arg6[%c6_136, %c0_137] : memref<16x128xf32, #tpu.memory_space<vmem>>, vector<2x128xf32>
    %cst_138 = arith.constant dense<0.000000e+00> : vector<2x128xf32>
    %370 = tpu.matmul %365, %264, %cst_138 {dimension_numbers = #tpu.dot_dimension_numbers<[1], [0], [0], [1], [0, 0, 1, 1], [], []>} : vector<2x32xf32>, vector<32x128xf32>, vector<2x128xf32> -> vector<2x128xf32>
    %371 = arith.addf %369, %370 : vector<2x128xf32>
    %372 = vector.extract_strided_slice %371 {offsets = [0, 0], sizes = [2, 32], strides = [1, 1]} : vector<2x128xf32> to vector<2x32xf32>
    %373 = arith.negf %372 : vector<2x32xf32>
    %374 = math.exp %373 : vector<2x32xf32>
    %cst_139 = arith.constant 1.000000e+00 : f32
    %375 = vector.broadcast %cst_139 : f32 to vector<2x32xf32>
    %376 = arith.addf %375, %374 : vector<2x32xf32>
    %377 = arith.divf %375, %376 : vector<2x32xf32>
    %378 = vector.extract_strided_slice %371 {offsets = [0, 32], sizes = [2, 32], strides = [1, 1]} : vector<2x128xf32> to vector<2x32xf32>
    %379 = arith.negf %378 : vector<2x32xf32>
    %380 = math.exp %379 : vector<2x32xf32>
    %cst_140 = arith.constant 1.000000e+00 : f32
    %381 = vector.broadcast %cst_140 : f32 to vector<2x32xf32>
    %382 = arith.addf %381, %380 : vector<2x32xf32>
    %383 = arith.divf %381, %382 : vector<2x32xf32>
    %384 = vector.extract_strided_slice %371 {offsets = [0, 64], sizes = [2, 32], strides = [1, 1]} : vector<2x128xf32> to vector<2x32xf32>
    %385 = math.tanh %384 : vector<2x32xf32>
    %386 = vector.extract_strided_slice %371 {offsets = [0, 96], sizes = [2, 32], strides = [1, 1]} : vector<2x128xf32> to vector<2x32xf32>
    %387 = arith.negf %386 : vector<2x32xf32>
    %388 = math.exp %387 : vector<2x32xf32>
    %cst_141 = arith.constant 1.000000e+00 : f32
    %389 = vector.broadcast %cst_141 : f32 to vector<2x32xf32>
    %390 = arith.addf %389, %388 : vector<2x32xf32>
    %391 = arith.divf %389, %390 : vector<2x32xf32>
    %392 = arith.mulf %383, %363 : vector<2x32xf32>
    %393 = arith.mulf %377, %385 : vector<2x32xf32>
    %394 = arith.addf %392, %393 : vector<2x32xf32>
    %395 = math.tanh %394 : vector<2x32xf32>
    %396 = arith.mulf %391, %395 : vector<2x32xf32>
    %c6_142 = arith.constant 6 : index
    %c0_143 = arith.constant 0 : index
    %397 = vector.load %arg5[%c6_142, %c0_143] : memref<16x32xf32, #tpu.memory_space<vmem>>, vector<2x32xf32>
    %398 = arith.addf %396, %397 : vector<2x32xf32>
    %c6_144 = arith.constant 6 : index
    %c0_145 = arith.constant 0 : index
    %399 = vector.load %arg5[%c6_144, %c0_145] : memref<16x32xf32, #tpu.memory_space<vmem>>, vector<2x32xf32>
    tpu.vector_store %arg5[%c6_144, %c0_145], %398 {strides = array<i32>} : memref<16x32xf32, #tpu.memory_space<vmem>>, vector<2x32xf32>,
    %c8_146 = arith.constant 8 : index
    %c0_147 = arith.constant 0 : index
    %400 = vector.load %arg6[%c8_146, %c0_147] : memref<16x128xf32, #tpu.memory_space<vmem>>, vector<2x128xf32>
    %cst_148 = arith.constant dense<0.000000e+00> : vector<2x128xf32>
    %401 = tpu.matmul %396, %264, %cst_148 {dimension_numbers = #tpu.dot_dimension_numbers<[1], [0], [0], [1], [0, 0, 1, 1], [], []>} : vector<2x32xf32>, vector<32x128xf32>, vector<2x128xf32> -> vector<2x128xf32>
    %402 = arith.addf %400, %401 : vector<2x128xf32>
    %403 = vector.extract_strided_slice %402 {offsets = [0, 0], sizes = [2, 32], strides = [1, 1]} : vector<2x128xf32> to vector<2x32xf32>
    %404 = arith.negf %403 : vector<2x32xf32>
    %405 = math.exp %404 : vector<2x32xf32>
    %cst_149 = arith.constant 1.000000e+00 : f32
    %406 = vector.broadcast %cst_149 : f32 to vector<2x32xf32>
    %407 = arith.addf %406, %405 : vector<2x32xf32>
    %408 = arith.divf %406, %407 : vector<2x32xf32>
    %409 = vector.extract_strided_slice %402 {offsets = [0, 32], sizes = [2, 32], strides = [1, 1]} : vector<2x128xf32> to vector<2x32xf32>
    %410 = arith.negf %409 : vector<2x32xf32>
    %411 = math.exp %410 : vector<2x32xf32>
    %cst_150 = arith.constant 1.000000e+00 : f32
    %412 = vector.broadcast %cst_150 : f32 to vector<2x32xf32>
    %413 = arith.addf %412, %411 : vector<2x32xf32>
    %414 = arith.divf %412, %413 : vector<2x32xf32>
    %415 = vector.extract_strided_slice %402 {offsets = [0, 64], sizes = [2, 32], strides = [1, 1]} : vector<2x128xf32> to vector<2x32xf32>
    %416 = math.tanh %415 : vector<2x32xf32>
    %417 = vector.extract_strided_slice %402 {offsets = [0, 96], sizes = [2, 32], strides = [1, 1]} : vector<2x128xf32> to vector<2x32xf32>
    %418 = arith.negf %417 : vector<2x32xf32>
    %419 = math.exp %418 : vector<2x32xf32>
    %cst_151 = arith.constant 1.000000e+00 : f32
    %420 = vector.broadcast %cst_151 : f32 to vector<2x32xf32>
    %421 = arith.addf %420, %419 : vector<2x32xf32>
    %422 = arith.divf %420, %421 : vector<2x32xf32>
    %423 = arith.mulf %414, %394 : vector<2x32xf32>
    %424 = arith.mulf %408, %416 : vector<2x32xf32>
    %425 = arith.addf %423, %424 : vector<2x32xf32>
    %426 = math.tanh %425 : vector<2x32xf32>
    %427 = arith.mulf %422, %426 : vector<2x32xf32>
    %c8_152 = arith.constant 8 : index
    %c0_153 = arith.constant 0 : index
    %428 = vector.load %arg5[%c8_152, %c0_153] : memref<16x32xf32, #tpu.memory_space<vmem>>, vector<2x32xf32>
    %429 = arith.addf %427, %428 : vector<2x32xf32>
    %c8_154 = arith.constant 8 : index
    %c0_155 = arith.constant 0 : index
    %430 = vector.load %arg5[%c8_154, %c0_155] : memref<16x32xf32, #tpu.memory_space<vmem>>, vector<2x32xf32>
    tpu.vector_store %arg5[%c8_154, %c0_155], %429 {strides = array<i32>} : memref<16x32xf32, #tpu.memory_space<vmem>>, vector<2x32xf32>,
    %c10_156 = arith.constant 10 : index
    %c0_157 = arith.constant 0 : index
    %431 = vector.load %arg6[%c10_156, %c0_157] : memref<16x128xf32, #tpu.memory_space<vmem>>, vector<2x128xf32>
    %cst_158 = arith.constant dense<0.000000e+00> : vector<2x128xf32>
    %432 = tpu.matmul %427, %264, %cst_158 {dimension_numbers = #tpu.dot_dimension_numbers<[1], [0], [0], [1], [0, 0, 1, 1], [], []>} : vector<2x32xf32>, vector<32x128xf32>, vector<2x128xf32> -> vector<2x128xf32>
    %433 = arith.addf %431, %432 : vector<2x128xf32>
    %434 = vector.extract_strided_slice %433 {offsets = [0, 0], sizes = [2, 32], strides = [1, 1]} : vector<2x128xf32> to vector<2x32xf32>
    %435 = arith.negf %434 : vector<2x32xf32>
    %436 = math.exp %435 : vector<2x32xf32>
    %cst_159 = arith.constant 1.000000e+00 : f32
    %437 = vector.broadcast %cst_159 : f32 to vector<2x32xf32>
    %438 = arith.addf %437, %436 : vector<2x32xf32>
    %439 = arith.divf %437, %438 : vector<2x32xf32>
    %440 = vector.extract_strided_slice %433 {offsets = [0, 32], sizes = [2, 32], strides = [1, 1]} : vector<2x128xf32> to vector<2x32xf32>
    %441 = arith.negf %440 : vector<2x32xf32>
    %442 = math.exp %441 : vector<2x32xf32>
    %cst_160 = arith.constant 1.000000e+00 : f32
    %443 = vector.broadcast %cst_160 : f32 to vector<2x32xf32>
    %444 = arith.addf %443, %442 : vector<2x32xf32>
    %445 = arith.divf %443, %444 : vector<2x32xf32>
    %446 = vector.extract_strided_slice %433 {offsets = [0, 64], sizes = [2, 32], strides = [1, 1]} : vector<2x128xf32> to vector<2x32xf32>
    %447 = math.tanh %446 : vector<2x32xf32>
    %448 = vector.extract_strided_slice %433 {offsets = [0, 96], sizes = [2, 32], strides = [1, 1]} : vector<2x128xf32> to vector<2x32xf32>
    %449 = arith.negf %448 : vector<2x32xf32>
    %450 = math.exp %449 : vector<2x32xf32>
    %cst_161 = arith.constant 1.000000e+00 : f32
    %451 = vector.broadcast %cst_161 : f32 to vector<2x32xf32>
    %452 = arith.addf %451, %450 : vector<2x32xf32>
    %453 = arith.divf %451, %452 : vector<2x32xf32>
    %454 = arith.mulf %445, %425 : vector<2x32xf32>
    %455 = arith.mulf %439, %447 : vector<2x32xf32>
    %456 = arith.addf %454, %455 : vector<2x32xf32>
    %457 = math.tanh %456 : vector<2x32xf32>
    %458 = arith.mulf %453, %457 : vector<2x32xf32>
    %c10_162 = arith.constant 10 : index
    %c0_163 = arith.constant 0 : index
    %459 = vector.load %arg5[%c10_162, %c0_163] : memref<16x32xf32, #tpu.memory_space<vmem>>, vector<2x32xf32>
    %460 = arith.addf %458, %459 : vector<2x32xf32>
    %c10_164 = arith.constant 10 : index
    %c0_165 = arith.constant 0 : index
    %461 = vector.load %arg5[%c10_164, %c0_165] : memref<16x32xf32, #tpu.memory_space<vmem>>, vector<2x32xf32>
    tpu.vector_store %arg5[%c10_164, %c0_165], %460 {strides = array<i32>} : memref<16x32xf32, #tpu.memory_space<vmem>>, vector<2x32xf32>,
    %c12_166 = arith.constant 12 : index
    %c0_167 = arith.constant 0 : index
    %462 = vector.load %arg6[%c12_166, %c0_167] : memref<16x128xf32, #tpu.memory_space<vmem>>, vector<2x128xf32>
    %cst_168 = arith.constant dense<0.000000e+00> : vector<2x128xf32>
    %463 = tpu.matmul %458, %264, %cst_168 {dimension_numbers = #tpu.dot_dimension_numbers<[1], [0], [0], [1], [0, 0, 1, 1], [], []>} : vector<2x32xf32>, vector<32x128xf32>, vector<2x128xf32> -> vector<2x128xf32>
    %464 = arith.addf %462, %463 : vector<2x128xf32>
    %465 = vector.extract_strided_slice %464 {offsets = [0, 0], sizes = [2, 32], strides = [1, 1]} : vector<2x128xf32> to vector<2x32xf32>
    %466 = arith.negf %465 : vector<2x32xf32>
    %467 = math.exp %466 : vector<2x32xf32>
    %cst_169 = arith.constant 1.000000e+00 : f32
    %468 = vector.broadcast %cst_169 : f32 to vector<2x32xf32>
    %469 = arith.addf %468, %467 : vector<2x32xf32>
    %470 = arith.divf %468, %469 : vector<2x32xf32>
    %471 = vector.extract_strided_slice %464 {offsets = [0, 32], sizes = [2, 32], strides = [1, 1]} : vector<2x128xf32> to vector<2x32xf32>
    %472 = arith.negf %471 : vector<2x32xf32>
    %473 = math.exp %472 : vector<2x32xf32>
    %cst_170 = arith.constant 1.000000e+00 : f32
    %474 = vector.broadcast %cst_170 : f32 to vector<2x32xf32>
    %475 = arith.addf %474, %473 : vector<2x32xf32>
    %476 = arith.divf %474, %475 : vector<2x32xf32>
    %477 = vector.extract_strided_slice %464 {offsets = [0, 64], sizes = [2, 32], strides = [1, 1]} : vector<2x128xf32> to vector<2x32xf32>
    %478 = math.tanh %477 : vector<2x32xf32>
    %479 = vector.extract_strided_slice %464 {offsets = [0, 96], sizes = [2, 32], strides = [1, 1]} : vector<2x128xf32> to vector<2x32xf32>
    %480 = arith.negf %479 : vector<2x32xf32>
    %481 = math.exp %480 : vector<2x32xf32>
    %cst_171 = arith.constant 1.000000e+00 : f32
    %482 = vector.broadcast %cst_171 : f32 to vector<2x32xf32>
    %483 = arith.addf %482, %481 : vector<2x32xf32>
    %484 = arith.divf %482, %483 : vector<2x32xf32>
    %485 = arith.mulf %476, %456 : vector<2x32xf32>
    %486 = arith.mulf %470, %478 : vector<2x32xf32>
    %487 = arith.addf %485, %486 : vector<2x32xf32>
    %488 = math.tanh %487 : vector<2x32xf32>
    %489 = arith.mulf %484, %488 : vector<2x32xf32>
    %c12_172 = arith.constant 12 : index
    %c0_173 = arith.constant 0 : index
    %490 = vector.load %arg5[%c12_172, %c0_173] : memref<16x32xf32, #tpu.memory_space<vmem>>, vector<2x32xf32>
    %491 = arith.addf %489, %490 : vector<2x32xf32>
    %c12_174 = arith.constant 12 : index
    %c0_175 = arith.constant 0 : index
    %492 = vector.load %arg5[%c12_174, %c0_175] : memref<16x32xf32, #tpu.memory_space<vmem>>, vector<2x32xf32>
    tpu.vector_store %arg5[%c12_174, %c0_175], %491 {strides = array<i32>} : memref<16x32xf32, #tpu.memory_space<vmem>>, vector<2x32xf32>,
    %c14_176 = arith.constant 14 : index
    %c0_177 = arith.constant 0 : index
    %493 = vector.load %arg6[%c14_176, %c0_177] : memref<16x128xf32, #tpu.memory_space<vmem>>, vector<2x128xf32>
    %cst_178 = arith.constant dense<0.000000e+00> : vector<2x128xf32>
    %494 = tpu.matmul %489, %264, %cst_178 {dimension_numbers = #tpu.dot_dimension_numbers<[1], [0], [0], [1], [0, 0, 1, 1], [], []>} : vector<2x32xf32>, vector<32x128xf32>, vector<2x128xf32> -> vector<2x128xf32>
    %495 = arith.addf %493, %494 : vector<2x128xf32>
    %496 = vector.extract_strided_slice %495 {offsets = [0, 0], sizes = [2, 32], strides = [1, 1]} : vector<2x128xf32> to vector<2x32xf32>
    %497 = arith.negf %496 : vector<2x32xf32>
    %498 = math.exp %497 : vector<2x32xf32>
    %cst_179 = arith.constant 1.000000e+00 : f32
    %499 = vector.broadcast %cst_179 : f32 to vector<2x32xf32>
    %500 = arith.addf %499, %498 : vector<2x32xf32>
    %501 = arith.divf %499, %500 : vector<2x32xf32>
    %502 = vector.extract_strided_slice %495 {offsets = [0, 32], sizes = [2, 32], strides = [1, 1]} : vector<2x128xf32> to vector<2x32xf32>
    %503 = arith.negf %502 : vector<2x32xf32>
    %504 = math.exp %503 : vector<2x32xf32>
    %cst_180 = arith.constant 1.000000e+00 : f32
    %505 = vector.broadcast %cst_180 : f32 to vector<2x32xf32>
    %506 = arith.addf %505, %504 : vector<2x32xf32>
    %507 = arith.divf %505, %506 : vector<2x32xf32>
    %508 = vector.extract_strided_slice %495 {offsets = [0, 64], sizes = [2, 32], strides = [1, 1]} : vector<2x128xf32> to vector<2x32xf32>
    %509 = math.tanh %508 : vector<2x32xf32>
    %510 = vector.extract_strided_slice %495 {offsets = [0, 96], sizes = [2, 32], strides = [1, 1]} : vector<2x128xf32> to vector<2x32xf32>
    %511 = arith.negf %510 : vector<2x32xf32>
    %512 = math.exp %511 : vector<2x32xf32>
    %cst_181 = arith.constant 1.000000e+00 : f32
    %513 = vector.broadcast %cst_181 : f32 to vector<2x32xf32>
    %514 = arith.addf %513, %512 : vector<2x32xf32>
    %515 = arith.divf %513, %514 : vector<2x32xf32>
    %516 = arith.mulf %507, %487 : vector<2x32xf32>
    %517 = arith.mulf %501, %509 : vector<2x32xf32>
    %518 = arith.addf %516, %517 : vector<2x32xf32>
    %519 = math.tanh %518 : vector<2x32xf32>
    %520 = arith.mulf %515, %519 : vector<2x32xf32>
    %c14_182 = arith.constant 14 : index
    %c0_183 = arith.constant 0 : index
    %521 = vector.load %arg5[%c14_182, %c0_183] : memref<16x32xf32, #tpu.memory_space<vmem>>, vector<2x32xf32>
    %522 = arith.addf %520, %521 : vector<2x32xf32>
    %c14_184 = arith.constant 14 : index
    %c0_185 = arith.constant 0 : index
    %523 = vector.load %arg5[%c14_184, %c0_185] : memref<16x32xf32, #tpu.memory_space<vmem>>, vector<2x32xf32>
    tpu.vector_store %arg5[%c14_184, %c0_185], %522 {strides = array<i32>} : memref<16x32xf32, #tpu.memory_space<vmem>>, vector<2x32xf32>,
    %c2_186 = arith.constant 2 : index
    %c0_187 = arith.constant 0 : index
    %c0_188 = arith.constant 0 : index
    %524 = vector.load %arg2[%c2_186, %c0_187, %c0_188] : memref<3x32x128xf32, #tpu.memory_space<vmem>>, vector<1x32x128xf32>
    %525 = vector.shape_cast %524 : vector<1x32x128xf32> to vector<32x128xf32>
    %c0_189 = arith.constant 0 : index
    %c0_190 = arith.constant 0 : index
    %526 = vector.load %arg5[%c0_189, %c0_190] : memref<16x32xf32, #tpu.memory_space<vmem>>, vector<16x32xf32>
    %c2_191 = arith.constant 2 : index
    %c0_192 = arith.constant 0 : index
    %c0_193 = arith.constant 0 : index
    %527 = vector.load %arg1[%c2_191, %c0_192, %c0_193] : memref<3x32x128xf32, #tpu.memory_space<vmem>>, vector<1x32x128xf32>
    %528 = vector.shape_cast %527 : vector<1x32x128xf32> to vector<32x128xf32>
    %cst_194 = arith.constant dense<0.000000e+00> : vector<16x128xf32>
    %529 = tpu.matmul %526, %528, %cst_194 {dimension_numbers = #tpu.dot_dimension_numbers<[1], [0], [0], [1], [0, 0, 1, 1], [], []>} : vector<16x32xf32>, vector<32x128xf32>, vector<16x128xf32> -> vector<16x128xf32>
    %c2_195 = arith.constant 2 : index
    %c0_196 = arith.constant 0 : index
    %c0_197 = arith.constant 0 : index
    %530 = vector.load %arg3[%c2_195, %c0_196, %c0_197] : memref<3x1x128xf32, #tpu.memory_space<vmem>>, vector<1x1x128xf32>
    %531 = vector.shape_cast %530 : vector<1x1x128xf32> to vector<1x128xf32>
    %532 = vector.broadcast %531 : vector<1x128xf32> to vector<16x128xf32>
    %533 = arith.addf %529, %532 : vector<16x128xf32>
    %c0_198 = arith.constant 0 : index
    %c0_199 = arith.constant 0 : index
    %534 = vector.load %arg6[%c0_198, %c0_199] : memref<16x128xf32, #tpu.memory_space<vmem>>, vector<16x128xf32>
    tpu.vector_store %arg6[%c0_198, %c0_199], %533 {strides = array<i32>} : memref<16x128xf32, #tpu.memory_space<vmem>>, vector<16x128xf32>,
    %cst_200 = arith.constant 0.000000e+00 : f32
    %535 = vector.broadcast %cst_200 : f32 to vector<2x32xf32>
    %cst_201 = arith.constant 0.000000e+00 : f32
    %536 = vector.broadcast %cst_201 : f32 to vector<2x32xf32>
    %c0_202 = arith.constant 0 : index
    %c0_203 = arith.constant 0 : index
    %537 = vector.load %arg6[%c0_202, %c0_203] : memref<16x128xf32, #tpu.memory_space<vmem>>, vector<2x128xf32>
    %cst_204 = arith.constant dense<0.000000e+00> : vector<2x128xf32>
    %538 = tpu.matmul %535, %525, %cst_204 {dimension_numbers = #tpu.dot_dimension_numbers<[1], [0], [0], [1], [0, 0, 1, 1], [], []>} : vector<2x32xf32>, vector<32x128xf32>, vector<2x128xf32> -> vector<2x128xf32>
    %539 = arith.addf %537, %538 : vector<2x128xf32>
    %540 = vector.extract_strided_slice %539 {offsets = [0, 0], sizes = [2, 32], strides = [1, 1]} : vector<2x128xf32> to vector<2x32xf32>
    %541 = arith.negf %540 : vector<2x32xf32>
    %542 = math.exp %541 : vector<2x32xf32>
    %cst_205 = arith.constant 1.000000e+00 : f32
    %543 = vector.broadcast %cst_205 : f32 to vector<2x32xf32>
    %544 = arith.addf %543, %542 : vector<2x32xf32>
    %545 = arith.divf %543, %544 : vector<2x32xf32>
    %546 = vector.extract_strided_slice %539 {offsets = [0, 32], sizes = [2, 32], strides = [1, 1]} : vector<2x128xf32> to vector<2x32xf32>
    %547 = arith.negf %546 : vector<2x32xf32>
    %548 = math.exp %547 : vector<2x32xf32>
    %cst_206 = arith.constant 1.000000e+00 : f32
    %549 = vector.broadcast %cst_206 : f32 to vector<2x32xf32>
    %550 = arith.addf %549, %548 : vector<2x32xf32>
    %551 = arith.divf %549, %550 : vector<2x32xf32>
    %552 = vector.extract_strided_slice %539 {offsets = [0, 64], sizes = [2, 32], strides = [1, 1]} : vector<2x128xf32> to vector<2x32xf32>
    %553 = math.tanh %552 : vector<2x32xf32>
    %554 = vector.extract_strided_slice %539 {offsets = [0, 96], sizes = [2, 32], strides = [1, 1]} : vector<2x128xf32> to vector<2x32xf32>
    %555 = arith.negf %554 : vector<2x32xf32>
    %556 = math.exp %555 : vector<2x32xf32>
    %cst_207 = arith.constant 1.000000e+00 : f32
    %557 = vector.broadcast %cst_207 : f32 to vector<2x32xf32>
    %558 = arith.addf %557, %556 : vector<2x32xf32>
    %559 = arith.divf %557, %558 : vector<2x32xf32>
    %560 = arith.mulf %551, %536 : vector<2x32xf32>
    %561 = arith.mulf %545, %553 : vector<2x32xf32>
    %562 = arith.addf %560, %561 : vector<2x32xf32>
    %563 = math.tanh %562 : vector<2x32xf32>
    %564 = arith.mulf %559, %563 : vector<2x32xf32>
    %c0_208 = arith.constant 0 : index
    %c0_209 = arith.constant 0 : index
    %565 = vector.load %arg5[%c0_208, %c0_209] : memref<16x32xf32, #tpu.memory_space<vmem>>, vector<2x32xf32>
    %566 = arith.addf %564, %565 : vector<2x32xf32>
    %c0_210 = arith.constant 0 : index
    %c0_211 = arith.constant 0 : index
    %567 = vector.load %arg5[%c0_210, %c0_211] : memref<16x32xf32, #tpu.memory_space<vmem>>, vector<2x32xf32>
    tpu.vector_store %arg5[%c0_210, %c0_211], %566 {strides = array<i32>} : memref<16x32xf32, #tpu.memory_space<vmem>>, vector<2x32xf32>,
    %c2_212 = arith.constant 2 : index
    %c0_213 = arith.constant 0 : index
    %568 = vector.load %arg6[%c2_212, %c0_213] : memref<16x128xf32, #tpu.memory_space<vmem>>, vector<2x128xf32>
    %cst_214 = arith.constant dense<0.000000e+00> : vector<2x128xf32>
    %569 = tpu.matmul %564, %525, %cst_214 {dimension_numbers = #tpu.dot_dimension_numbers<[1], [0], [0], [1], [0, 0, 1, 1], [], []>} : vector<2x32xf32>, vector<32x128xf32>, vector<2x128xf32> -> vector<2x128xf32>
    %570 = arith.addf %568, %569 : vector<2x128xf32>
    %571 = vector.extract_strided_slice %570 {offsets = [0, 0], sizes = [2, 32], strides = [1, 1]} : vector<2x128xf32> to vector<2x32xf32>
    %572 = arith.negf %571 : vector<2x32xf32>
    %573 = math.exp %572 : vector<2x32xf32>
    %cst_215 = arith.constant 1.000000e+00 : f32
    %574 = vector.broadcast %cst_215 : f32 to vector<2x32xf32>
    %575 = arith.addf %574, %573 : vector<2x32xf32>
    %576 = arith.divf %574, %575 : vector<2x32xf32>
    %577 = vector.extract_strided_slice %570 {offsets = [0, 32], sizes = [2, 32], strides = [1, 1]} : vector<2x128xf32> to vector<2x32xf32>
    %578 = arith.negf %577 : vector<2x32xf32>
    %579 = math.exp %578 : vector<2x32xf32>
    %cst_216 = arith.constant 1.000000e+00 : f32
    %580 = vector.broadcast %cst_216 : f32 to vector<2x32xf32>
    %581 = arith.addf %580, %579 : vector<2x32xf32>
    %582 = arith.divf %580, %581 : vector<2x32xf32>
    %583 = vector.extract_strided_slice %570 {offsets = [0, 64], sizes = [2, 32], strides = [1, 1]} : vector<2x128xf32> to vector<2x32xf32>
    %584 = math.tanh %583 : vector<2x32xf32>
    %585 = vector.extract_strided_slice %570 {offsets = [0, 96], sizes = [2, 32], strides = [1, 1]} : vector<2x128xf32> to vector<2x32xf32>
    %586 = arith.negf %585 : vector<2x32xf32>
    %587 = math.exp %586 : vector<2x32xf32>
    %cst_217 = arith.constant 1.000000e+00 : f32
    %588 = vector.broadcast %cst_217 : f32 to vector<2x32xf32>
    %589 = arith.addf %588, %587 : vector<2x32xf32>
    %590 = arith.divf %588, %589 : vector<2x32xf32>
    %591 = arith.mulf %582, %562 : vector<2x32xf32>
    %592 = arith.mulf %576, %584 : vector<2x32xf32>
    %593 = arith.addf %591, %592 : vector<2x32xf32>
    %594 = math.tanh %593 : vector<2x32xf32>
    %595 = arith.mulf %590, %594 : vector<2x32xf32>
    %c2_218 = arith.constant 2 : index
    %c0_219 = arith.constant 0 : index
    %596 = vector.load %arg5[%c2_218, %c0_219] : memref<16x32xf32, #tpu.memory_space<vmem>>, vector<2x32xf32>
    %597 = arith.addf %595, %596 : vector<2x32xf32>
    %c2_220 = arith.constant 2 : index
    %c0_221 = arith.constant 0 : index
    %598 = vector.load %arg5[%c2_220, %c0_221] : memref<16x32xf32, #tpu.memory_space<vmem>>, vector<2x32xf32>
    tpu.vector_store %arg5[%c2_220, %c0_221], %597 {strides = array<i32>} : memref<16x32xf32, #tpu.memory_space<vmem>>, vector<2x32xf32>,
    %c4_222 = arith.constant 4 : index
    %c0_223 = arith.constant 0 : index
    %599 = vector.load %arg6[%c4_222, %c0_223] : memref<16x128xf32, #tpu.memory_space<vmem>>, vector<2x128xf32>
    %cst_224 = arith.constant dense<0.000000e+00> : vector<2x128xf32>
    %600 = tpu.matmul %595, %525, %cst_224 {dimension_numbers = #tpu.dot_dimension_numbers<[1], [0], [0], [1], [0, 0, 1, 1], [], []>} : vector<2x32xf32>, vector<32x128xf32>, vector<2x128xf32> -> vector<2x128xf32>
    %601 = arith.addf %599, %600 : vector<2x128xf32>
    %602 = vector.extract_strided_slice %601 {offsets = [0, 0], sizes = [2, 32], strides = [1, 1]} : vector<2x128xf32> to vector<2x32xf32>
    %603 = arith.negf %602 : vector<2x32xf32>
    %604 = math.exp %603 : vector<2x32xf32>
    %cst_225 = arith.constant 1.000000e+00 : f32
    %605 = vector.broadcast %cst_225 : f32 to vector<2x32xf32>
    %606 = arith.addf %605, %604 : vector<2x32xf32>
    %607 = arith.divf %605, %606 : vector<2x32xf32>
    %608 = vector.extract_strided_slice %601 {offsets = [0, 32], sizes = [2, 32], strides = [1, 1]} : vector<2x128xf32> to vector<2x32xf32>
    %609 = arith.negf %608 : vector<2x32xf32>
    %610 = math.exp %609 : vector<2x32xf32>
    %cst_226 = arith.constant 1.000000e+00 : f32
    %611 = vector.broadcast %cst_226 : f32 to vector<2x32xf32>
    %612 = arith.addf %611, %610 : vector<2x32xf32>
    %613 = arith.divf %611, %612 : vector<2x32xf32>
    %614 = vector.extract_strided_slice %601 {offsets = [0, 64], sizes = [2, 32], strides = [1, 1]} : vector<2x128xf32> to vector<2x32xf32>
    %615 = math.tanh %614 : vector<2x32xf32>
    %616 = vector.extract_strided_slice %601 {offsets = [0, 96], sizes = [2, 32], strides = [1, 1]} : vector<2x128xf32> to vector<2x32xf32>
    %617 = arith.negf %616 : vector<2x32xf32>
    %618 = math.exp %617 : vector<2x32xf32>
    %cst_227 = arith.constant 1.000000e+00 : f32
    %619 = vector.broadcast %cst_227 : f32 to vector<2x32xf32>
    %620 = arith.addf %619, %618 : vector<2x32xf32>
    %621 = arith.divf %619, %620 : vector<2x32xf32>
    %622 = arith.mulf %613, %593 : vector<2x32xf32>
    %623 = arith.mulf %607, %615 : vector<2x32xf32>
    %624 = arith.addf %622, %623 : vector<2x32xf32>
    %625 = math.tanh %624 : vector<2x32xf32>
    %626 = arith.mulf %621, %625 : vector<2x32xf32>
    %c4_228 = arith.constant 4 : index
    %c0_229 = arith.constant 0 : index
    %627 = vector.load %arg5[%c4_228, %c0_229] : memref<16x32xf32, #tpu.memory_space<vmem>>, vector<2x32xf32>
    %628 = arith.addf %626, %627 : vector<2x32xf32>
    %c4_230 = arith.constant 4 : index
    %c0_231 = arith.constant 0 : index
    %629 = vector.load %arg5[%c4_230, %c0_231] : memref<16x32xf32, #tpu.memory_space<vmem>>, vector<2x32xf32>
    tpu.vector_store %arg5[%c4_230, %c0_231], %628 {strides = array<i32>} : memref<16x32xf32, #tpu.memory_space<vmem>>, vector<2x32xf32>,
    %c6_232 = arith.constant 6 : index
    %c0_233 = arith.constant 0 : index
    %630 = vector.load %arg6[%c6_232, %c0_233] : memref<16x128xf32, #tpu.memory_space<vmem>>, vector<2x128xf32>
    %cst_234 = arith.constant dense<0.000000e+00> : vector<2x128xf32>
    %631 = tpu.matmul %626, %525, %cst_234 {dimension_numbers = #tpu.dot_dimension_numbers<[1], [0], [0], [1], [0, 0, 1, 1], [], []>} : vector<2x32xf32>, vector<32x128xf32>, vector<2x128xf32> -> vector<2x128xf32>
    %632 = arith.addf %630, %631 : vector<2x128xf32>
    %633 = vector.extract_strided_slice %632 {offsets = [0, 0], sizes = [2, 32], strides = [1, 1]} : vector<2x128xf32> to vector<2x32xf32>
    %634 = arith.negf %633 : vector<2x32xf32>
    %635 = math.exp %634 : vector<2x32xf32>
    %cst_235 = arith.constant 1.000000e+00 : f32
    %636 = vector.broadcast %cst_235 : f32 to vector<2x32xf32>
    %637 = arith.addf %636, %635 : vector<2x32xf32>
    %638 = arith.divf %636, %637 : vector<2x32xf32>
    %639 = vector.extract_strided_slice %632 {offsets = [0, 32], sizes = [2, 32], strides = [1, 1]} : vector<2x128xf32> to vector<2x32xf32>
    %640 = arith.negf %639 : vector<2x32xf32>
    %641 = math.exp %640 : vector<2x32xf32>
    %cst_236 = arith.constant 1.000000e+00 : f32
    %642 = vector.broadcast %cst_236 : f32 to vector<2x32xf32>
    %643 = arith.addf %642, %641 : vector<2x32xf32>
    %644 = arith.divf %642, %643 : vector<2x32xf32>
    %645 = vector.extract_strided_slice %632 {offsets = [0, 64], sizes = [2, 32], strides = [1, 1]} : vector<2x128xf32> to vector<2x32xf32>
    %646 = math.tanh %645 : vector<2x32xf32>
    %647 = vector.extract_strided_slice %632 {offsets = [0, 96], sizes = [2, 32], strides = [1, 1]} : vector<2x128xf32> to vector<2x32xf32>
    %648 = arith.negf %647 : vector<2x32xf32>
    %649 = math.exp %648 : vector<2x32xf32>
    %cst_237 = arith.constant 1.000000e+00 : f32
    %650 = vector.broadcast %cst_237 : f32 to vector<2x32xf32>
    %651 = arith.addf %650, %649 : vector<2x32xf32>
    %652 = arith.divf %650, %651 : vector<2x32xf32>
    %653 = arith.mulf %644, %624 : vector<2x32xf32>
    %654 = arith.mulf %638, %646 : vector<2x32xf32>
    %655 = arith.addf %653, %654 : vector<2x32xf32>
    %656 = math.tanh %655 : vector<2x32xf32>
    %657 = arith.mulf %652, %656 : vector<2x32xf32>
    %c6_238 = arith.constant 6 : index
    %c0_239 = arith.constant 0 : index
    %658 = vector.load %arg5[%c6_238, %c0_239] : memref<16x32xf32, #tpu.memory_space<vmem>>, vector<2x32xf32>
    %659 = arith.addf %657, %658 : vector<2x32xf32>
    %c6_240 = arith.constant 6 : index
    %c0_241 = arith.constant 0 : index
    %660 = vector.load %arg5[%c6_240, %c0_241] : memref<16x32xf32, #tpu.memory_space<vmem>>, vector<2x32xf32>
    tpu.vector_store %arg5[%c6_240, %c0_241], %659 {strides = array<i32>} : memref<16x32xf32, #tpu.memory_space<vmem>>, vector<2x32xf32>,
    %c8_242 = arith.constant 8 : index
    %c0_243 = arith.constant 0 : index
    %661 = vector.load %arg6[%c8_242, %c0_243] : memref<16x128xf32, #tpu.memory_space<vmem>>, vector<2x128xf32>
    %cst_244 = arith.constant dense<0.000000e+00> : vector<2x128xf32>
    %662 = tpu.matmul %657, %525, %cst_244 {dimension_numbers = #tpu.dot_dimension_numbers<[1], [0], [0], [1], [0, 0, 1, 1], [], []>} : vector<2x32xf32>, vector<32x128xf32>, vector<2x128xf32> -> vector<2x128xf32>
    %663 = arith.addf %661, %662 : vector<2x128xf32>
    %664 = vector.extract_strided_slice %663 {offsets = [0, 0], sizes = [2, 32], strides = [1, 1]} : vector<2x128xf32> to vector<2x32xf32>
    %665 = arith.negf %664 : vector<2x32xf32>
    %666 = math.exp %665 : vector<2x32xf32>
    %cst_245 = arith.constant 1.000000e+00 : f32
    %667 = vector.broadcast %cst_245 : f32 to vector<2x32xf32>
    %668 = arith.addf %667, %666 : vector<2x32xf32>
    %669 = arith.divf %667, %668 : vector<2x32xf32>
    %670 = vector.extract_strided_slice %663 {offsets = [0, 32], sizes = [2, 32], strides = [1, 1]} : vector<2x128xf32> to vector<2x32xf32>
    %671 = arith.negf %670 : vector<2x32xf32>
    %672 = math.exp %671 : vector<2x32xf32>
    %cst_246 = arith.constant 1.000000e+00 : f32
    %673 = vector.broadcast %cst_246 : f32 to vector<2x32xf32>
    %674 = arith.addf %673, %672 : vector<2x32xf32>
    %675 = arith.divf %673, %674 : vector<2x32xf32>
    %676 = vector.extract_strided_slice %663 {offsets = [0, 64], sizes = [2, 32], strides = [1, 1]} : vector<2x128xf32> to vector<2x32xf32>
    %677 = math.tanh %676 : vector<2x32xf32>
    %678 = vector.extract_strided_slice %663 {offsets = [0, 96], sizes = [2, 32], strides = [1, 1]} : vector<2x128xf32> to vector<2x32xf32>
    %679 = arith.negf %678 : vector<2x32xf32>
    %680 = math.exp %679 : vector<2x32xf32>
    %cst_247 = arith.constant 1.000000e+00 : f32
    %681 = vector.broadcast %cst_247 : f32 to vector<2x32xf32>
    %682 = arith.addf %681, %680 : vector<2x32xf32>
    %683 = arith.divf %681, %682 : vector<2x32xf32>
    %684 = arith.mulf %675, %655 : vector<2x32xf32>
    %685 = arith.mulf %669, %677 : vector<2x32xf32>
    %686 = arith.addf %684, %685 : vector<2x32xf32>
    %687 = math.tanh %686 : vector<2x32xf32>
    %688 = arith.mulf %683, %687 : vector<2x32xf32>
    %c8_248 = arith.constant 8 : index
    %c0_249 = arith.constant 0 : index
    %689 = vector.load %arg5[%c8_248, %c0_249] : memref<16x32xf32, #tpu.memory_space<vmem>>, vector<2x32xf32>
    %690 = arith.addf %688, %689 : vector<2x32xf32>
    %c8_250 = arith.constant 8 : index
    %c0_251 = arith.constant 0 : index
    %691 = vector.load %arg5[%c8_250, %c0_251] : memref<16x32xf32, #tpu.memory_space<vmem>>, vector<2x32xf32>
    tpu.vector_store %arg5[%c8_250, %c0_251], %690 {strides = array<i32>} : memref<16x32xf32, #tpu.memory_space<vmem>>, vector<2x32xf32>,
    %c10_252 = arith.constant 10 : index
    %c0_253 = arith.constant 0 : index
    %692 = vector.load %arg6[%c10_252, %c0_253] : memref<16x128xf32, #tpu.memory_space<vmem>>, vector<2x128xf32>
    %cst_254 = arith.constant dense<0.000000e+00> : vector<2x128xf32>
    %693 = tpu.matmul %688, %525, %cst_254 {dimension_numbers = #tpu.dot_dimension_numbers<[1], [0], [0], [1], [0, 0, 1, 1], [], []>} : vector<2x32xf32>, vector<32x128xf32>, vector<2x128xf32> -> vector<2x128xf32>
    %694 = arith.addf %692, %693 : vector<2x128xf32>
    %695 = vector.extract_strided_slice %694 {offsets = [0, 0], sizes = [2, 32], strides = [1, 1]} : vector<2x128xf32> to vector<2x32xf32>
    %696 = arith.negf %695 : vector<2x32xf32>
    %697 = math.exp %696 : vector<2x32xf32>
    %cst_255 = arith.constant 1.000000e+00 : f32
    %698 = vector.broadcast %cst_255 : f32 to vector<2x32xf32>
    %699 = arith.addf %698, %697 : vector<2x32xf32>
    %700 = arith.divf %698, %699 : vector<2x32xf32>
    %701 = vector.extract_strided_slice %694 {offsets = [0, 32], sizes = [2, 32], strides = [1, 1]} : vector<2x128xf32> to vector<2x32xf32>
    %702 = arith.negf %701 : vector<2x32xf32>
    %703 = math.exp %702 : vector<2x32xf32>
    %cst_256 = arith.constant 1.000000e+00 : f32
    %704 = vector.broadcast %cst_256 : f32 to vector<2x32xf32>
    %705 = arith.addf %704, %703 : vector<2x32xf32>
    %706 = arith.divf %704, %705 : vector<2x32xf32>
    %707 = vector.extract_strided_slice %694 {offsets = [0, 64], sizes = [2, 32], strides = [1, 1]} : vector<2x128xf32> to vector<2x32xf32>
    %708 = math.tanh %707 : vector<2x32xf32>
    %709 = vector.extract_strided_slice %694 {offsets = [0, 96], sizes = [2, 32], strides = [1, 1]} : vector<2x128xf32> to vector<2x32xf32>
    %710 = arith.negf %709 : vector<2x32xf32>
    %711 = math.exp %710 : vector<2x32xf32>
    %cst_257 = arith.constant 1.000000e+00 : f32
    %712 = vector.broadcast %cst_257 : f32 to vector<2x32xf32>
    %713 = arith.addf %712, %711 : vector<2x32xf32>
    %714 = arith.divf %712, %713 : vector<2x32xf32>
    %715 = arith.mulf %706, %686 : vector<2x32xf32>
    %716 = arith.mulf %700, %708 : vector<2x32xf32>
    %717 = arith.addf %715, %716 : vector<2x32xf32>
    %718 = math.tanh %717 : vector<2x32xf32>
    %719 = arith.mulf %714, %718 : vector<2x32xf32>
    %c10_258 = arith.constant 10 : index
    %c0_259 = arith.constant 0 : index
    %720 = vector.load %arg5[%c10_258, %c0_259] : memref<16x32xf32, #tpu.memory_space<vmem>>, vector<2x32xf32>
    %721 = arith.addf %719, %720 : vector<2x32xf32>
    %c10_260 = arith.constant 10 : index
    %c0_261 = arith.constant 0 : index
    %722 = vector.load %arg5[%c10_260, %c0_261] : memref<16x32xf32, #tpu.memory_space<vmem>>, vector<2x32xf32>
    tpu.vector_store %arg5[%c10_260, %c0_261], %721 {strides = array<i32>} : memref<16x32xf32, #tpu.memory_space<vmem>>, vector<2x32xf32>,
    %c12_262 = arith.constant 12 : index
    %c0_263 = arith.constant 0 : index
    %723 = vector.load %arg6[%c12_262, %c0_263] : memref<16x128xf32, #tpu.memory_space<vmem>>, vector<2x128xf32>
    %cst_264 = arith.constant dense<0.000000e+00> : vector<2x128xf32>
    %724 = tpu.matmul %719, %525, %cst_264 {dimension_numbers = #tpu.dot_dimension_numbers<[1], [0], [0], [1], [0, 0, 1, 1], [], []>} : vector<2x32xf32>, vector<32x128xf32>, vector<2x128xf32> -> vector<2x128xf32>
    %725 = arith.addf %723, %724 : vector<2x128xf32>
    %726 = vector.extract_strided_slice %725 {offsets = [0, 0], sizes = [2, 32], strides = [1, 1]} : vector<2x128xf32> to vector<2x32xf32>
    %727 = arith.negf %726 : vector<2x32xf32>
    %728 = math.exp %727 : vector<2x32xf32>
    %cst_265 = arith.constant 1.000000e+00 : f32
    %729 = vector.broadcast %cst_265 : f32 to vector<2x32xf32>
    %730 = arith.addf %729, %728 : vector<2x32xf32>
    %731 = arith.divf %729, %730 : vector<2x32xf32>
    %732 = vector.extract_strided_slice %725 {offsets = [0, 32], sizes = [2, 32], strides = [1, 1]} : vector<2x128xf32> to vector<2x32xf32>
    %733 = arith.negf %732 : vector<2x32xf32>
    %734 = math.exp %733 : vector<2x32xf32>
    %cst_266 = arith.constant 1.000000e+00 : f32
    %735 = vector.broadcast %cst_266 : f32 to vector<2x32xf32>
    %736 = arith.addf %735, %734 : vector<2x32xf32>
    %737 = arith.divf %735, %736 : vector<2x32xf32>
    %738 = vector.extract_strided_slice %725 {offsets = [0, 64], sizes = [2, 32], strides = [1, 1]} : vector<2x128xf32> to vector<2x32xf32>
    %739 = math.tanh %738 : vector<2x32xf32>
    %740 = vector.extract_strided_slice %725 {offsets = [0, 96], sizes = [2, 32], strides = [1, 1]} : vector<2x128xf32> to vector<2x32xf32>
    %741 = arith.negf %740 : vector<2x32xf32>
    %742 = math.exp %741 : vector<2x32xf32>
    %cst_267 = arith.constant 1.000000e+00 : f32
    %743 = vector.broadcast %cst_267 : f32 to vector<2x32xf32>
    %744 = arith.addf %743, %742 : vector<2x32xf32>
    %745 = arith.divf %743, %744 : vector<2x32xf32>
    %746 = arith.mulf %737, %717 : vector<2x32xf32>
    %747 = arith.mulf %731, %739 : vector<2x32xf32>
    %748 = arith.addf %746, %747 : vector<2x32xf32>
    %749 = math.tanh %748 : vector<2x32xf32>
    %750 = arith.mulf %745, %749 : vector<2x32xf32>
    %c12_268 = arith.constant 12 : index
    %c0_269 = arith.constant 0 : index
    %751 = vector.load %arg5[%c12_268, %c0_269] : memref<16x32xf32, #tpu.memory_space<vmem>>, vector<2x32xf32>
    %752 = arith.addf %750, %751 : vector<2x32xf32>
    %c12_270 = arith.constant 12 : index
    %c0_271 = arith.constant 0 : index
    %753 = vector.load %arg5[%c12_270, %c0_271] : memref<16x32xf32, #tpu.memory_space<vmem>>, vector<2x32xf32>
    tpu.vector_store %arg5[%c12_270, %c0_271], %752 {strides = array<i32>} : memref<16x32xf32, #tpu.memory_space<vmem>>, vector<2x32xf32>,
    %c14_272 = arith.constant 14 : index
    %c0_273 = arith.constant 0 : index
    %754 = vector.load %arg6[%c14_272, %c0_273] : memref<16x128xf32, #tpu.memory_space<vmem>>, vector<2x128xf32>
    %cst_274 = arith.constant dense<0.000000e+00> : vector<2x128xf32>
    %755 = tpu.matmul %750, %525, %cst_274 {dimension_numbers = #tpu.dot_dimension_numbers<[1], [0], [0], [1], [0, 0, 1, 1], [], []>} : vector<2x32xf32>, vector<32x128xf32>, vector<2x128xf32> -> vector<2x128xf32>
    %756 = arith.addf %754, %755 : vector<2x128xf32>
    %757 = vector.extract_strided_slice %756 {offsets = [0, 0], sizes = [2, 32], strides = [1, 1]} : vector<2x128xf32> to vector<2x32xf32>
    %758 = arith.negf %757 : vector<2x32xf32>
    %759 = math.exp %758 : vector<2x32xf32>
    %cst_275 = arith.constant 1.000000e+00 : f32
    %760 = vector.broadcast %cst_275 : f32 to vector<2x32xf32>
    %761 = arith.addf %760, %759 : vector<2x32xf32>
    %762 = arith.divf %760, %761 : vector<2x32xf32>
    %763 = vector.extract_strided_slice %756 {offsets = [0, 32], sizes = [2, 32], strides = [1, 1]} : vector<2x128xf32> to vector<2x32xf32>
    %764 = arith.negf %763 : vector<2x32xf32>
    %765 = math.exp %764 : vector<2x32xf32>
    %cst_276 = arith.constant 1.000000e+00 : f32
    %766 = vector.broadcast %cst_276 : f32 to vector<2x32xf32>
    %767 = arith.addf %766, %765 : vector<2x32xf32>
    %768 = arith.divf %766, %767 : vector<2x32xf32>
    %769 = vector.extract_strided_slice %756 {offsets = [0, 64], sizes = [2, 32], strides = [1, 1]} : vector<2x128xf32> to vector<2x32xf32>
    %770 = math.tanh %769 : vector<2x32xf32>
    %771 = vector.extract_strided_slice %756 {offsets = [0, 96], sizes = [2, 32], strides = [1, 1]} : vector<2x128xf32> to vector<2x32xf32>
    %772 = arith.negf %771 : vector<2x32xf32>
    %773 = math.exp %772 : vector<2x32xf32>
    %cst_277 = arith.constant 1.000000e+00 : f32
    %774 = vector.broadcast %cst_277 : f32 to vector<2x32xf32>
    %775 = arith.addf %774, %773 : vector<2x32xf32>
    %776 = arith.divf %774, %775 : vector<2x32xf32>
    %777 = arith.mulf %768, %748 : vector<2x32xf32>
    %778 = arith.mulf %762, %770 : vector<2x32xf32>
    %779 = arith.addf %777, %778 : vector<2x32xf32>
    %780 = math.tanh %779 : vector<2x32xf32>
    %781 = arith.mulf %776, %780 : vector<2x32xf32>
    %c14_278 = arith.constant 14 : index
    %c0_279 = arith.constant 0 : index
    %782 = vector.load %arg5[%c14_278, %c0_279] : memref<16x32xf32, #tpu.memory_space<vmem>>, vector<2x32xf32>
    %783 = arith.addf %781, %782 : vector<2x32xf32>
    %c14_280 = arith.constant 14 : index
    %c0_281 = arith.constant 0 : index
    %784 = vector.load %arg5[%c14_280, %c0_281] : memref<16x32xf32, #tpu.memory_space<vmem>>, vector<2x32xf32>
    tpu.vector_store %arg5[%c14_280, %c0_281], %783 {strides = array<i32>} : memref<16x32xf32, #tpu.memory_space<vmem>>, vector<2x32xf32>,
    %c0_282 = arith.constant 0 : index
    %c0_283 = arith.constant 0 : index
    %785 = vector.load %arg5[%c0_282, %c0_283] : memref<16x32xf32, #tpu.memory_space<vmem>>, vector<16x32xf32>
    %c0_284 = arith.constant 0 : index
    %c0_285 = arith.constant 0 : index
    %786 = vector.load %arg4[%c0_284, %c0_285] : memref<16x32xf32, #tpu.memory_space<vmem>>, vector<16x32xf32>
    tpu.vector_store %arg4[%c0_284, %c0_285], %785 {strides = array<i32>} : memref<16x32xf32, #tpu.memory_space<vmem>>, vector<16x32xf32>,
    return
  }
}

</mosaic_0001>

<llo_original>
// kernel: residual_lstm_forward.1
$region0: #{residual_lstm_forward.1}
  #allocation0 [shape = 'u32[]', space=smem, size = 0x4, offset = 0x4, fixed_abs, tag = 'smem constant byte address 0x4 - core index']
  #allocation1 [shape = 'u32[144,128]{1,0:T(1,128)}', space=vmem, size = 0x12000, scoped, tag = 'internal scratch']
  #allocation2 [shape = 'f32[16,32]{1,0:T(8,128)}', space=vmem, size = 0x2000, scoped, tag = 'scratch operand']
  #allocation3 [shape = 'f32[16,128]{1,0:T(8,128)}', space=vmem, size = 0x2000, scoped, tag = 'scratch operand']
  %s0 = inlined_call_operand.hbm [shape: f32[16,32], index: 0, kind: input, shape index: {}]
  %s1 = inlined_call_operand.hbm [shape: f32[3,32,128], index: 1, kind: input, shape index: {}]
  %s2 = inlined_call_operand.hbm [shape: f32[3,32,128], index: 2, kind: input, shape index: {}]
  %s3 = inlined_call_operand.vmem [shape: f32[3,1,128], index: 3, kind: input, shape index: {}]
  %s4 = inlined_call_operand.hbm [shape: f32[16,32], index: 4, kind: output, shape index: {}]
  %s5 = sld [smem:[#allocation0]]
  $region38: #{residual_lstm_forward.1} parent=0
    _
  %s7 = ssub.s32 1, %s5
  %s8 = scalar_select 0, %s7, %s5
  $region1: #{residual_lstm_forward.1} parent=0
    #allocation4 [shape = 'u8[8192]{0}', space=vmem, size = 0x2000, scoped, tag = 'input window, operand 0, single buffered']
    #allocation5 [shape = 's32[1]{0}', space=sflag, size = 0x4, scoped, tag = 'scoped memory for residual_lstm_forward.1']
    #allocation6 [shape = 's32[1]{0}', space=sflag, size = 0x4, scoped, tag = 'scoped memory for residual_lstm_forward.1']
    #allocation7 [shape = 'u8[49152]{0}', space=vmem, size = 0xc000, scoped, tag = 'input window, operand 1, single buffered']
    #allocation8 [shape = 's32[1]{0}', space=sflag, size = 0x4, scoped, tag = 'scoped memory for residual_lstm_forward.1']
    #allocation9 [shape = 'u8[49152]{0}', space=vmem, size = 0xc000, scoped, tag = 'input window, operand 2, single buffered']
    #allocation10 [shape = 'u8[8192]{0}', space=vmem, size = 0x2000, scoped, tag = 'output window, operand 0, single buffered']
    %9 = vsyncpa [#allocation5], 0
    %10 = vsyncpa [#allocation8], 0
    %11 = vsyncpa [#allocation6], 0
    // Predicated region
    $region2: #{residual_lstm_forward.1} parent=1 // pred_check
      _
    $region3: #{residual_lstm_forward.1} parent=1 // pred_check_branch
      %13 = sbr.rel (0) target = $region5
    $region4: #{residual_lstm_forward.1} parent=1 // pred_region
      %s15 = ssub.s32 256, 256
      %16 = vsyncadd [#allocation5], %s15
      %s17 = sshll.u32 [#allocation4], 4
      %s18 = int_to_ptr.vmem [resolvable:$true] %s17
      %23 = dma.hbm_to_vmem [thread:$0]  %s0, 256, %s18, [#allocation5], 128, 128, 8
    $region5: #{residual_lstm_forward.1} parent=1 // pred_fallthru
      _
    // Predicated region
    $region6: #{residual_lstm_forward.1} parent=1 // pred_check
      _
    $region7: #{residual_lstm_forward.1} parent=1 // pred_check_branch
      %25 = sbr.rel (0) target = $region9
    $region8: #{residual_lstm_forward.1} parent=1 // pred_region
      %s27 = ssub.s32 1536, 1536
      %28 = vsyncadd [#allocation8], %s27
      %s29 = sshll.u32 [#allocation7], 4
      %s30 = int_to_ptr.vmem [resolvable:$true] %s29
      %35 = dma.hbm_to_vmem [thread:$0]  %s1, 1536, %s30, [#allocation8], 128, 128, 8
    $region9: #{residual_lstm_forward.1} parent=1 // pred_fallthru
      _
    // Predicated region
    $region10: #{residual_lstm_forward.1} parent=1 // pred_check
      _
    $region11: #{residual_lstm_forward.1} parent=1 // pred_check_branch
      %37 = sbr.rel (0) target = $region13
    $region12: #{residual_lstm_forward.1} parent=1 // pred_region
      %s39 = ssub.s32 1536, 1536
      %40 = vsyncadd [#allocation8], %s39
      %s41 = sshll.u32 [#allocation9], 4
      %s42 = int_to_ptr.vmem [resolvable:$true] %s41
      %47 = dma.hbm_to_vmem [thread:$0]  %s2, 1536, %s42, [#allocation8], 128, 128, 8
    $region13: #{residual_lstm_forward.1} parent=1 // pred_fallthru
      _
    // Predicated region
    $region14: #{residual_lstm_forward.1} parent=1 // pred_check
      _
    $region15: #{residual_lstm_forward.1} parent=1 // pred_check_branch
      %49 = sbr.rel (0) target = $region17
    $region16: #{residual_lstm_forward.1} parent=1 // pred_region
      _
    $region17: #{residual_lstm_forward.1} parent=1 // pred_fallthru
      _
    // Predicated region
    $region18: #{residual_lstm_forward.1} parent=1 // pred_check
      _
    $region19: #{residual_lstm_forward.1} parent=1 // pred_check_branch
      %51 = sbr.rel (0) target = $region21
    $region20: #{residual_lstm_forward.1} parent=1 // pred_region
      %52 = dma.done [#allocation5], 256
    $region21: #{residual_lstm_forward.1} parent=1 // pred_fallthru
      _
    // Predicated region
    $region22: #{residual_lstm_forward.1} parent=1 // pred_check
      _
    $region23: #{residual_lstm_forward.1} parent=1 // pred_check_branch
      %54 = sbr.rel (0) target = $region25
    $region24: #{residual_lstm_forward.1} parent=1 // pred_region
      %55 = dma.done [#allocation8], 1536
    $region25: #{residual_lstm_forward.1} parent=1 // pred_fallthru
      _
    // Predicated region
    $region26: #{residual_lstm_forward.1} parent=1 // pred_check
      _
    $region27: #{residual_lstm_forward.1} parent=1 // pred_check_branch
      %57 = sbr.rel (0) target = $region29
    $region28: #{residual_lstm_forward.1} parent=1 // pred_region
      %58 = dma.done [#allocation8], 1536
    $region29: #{residual_lstm_forward.1} parent=1 // pred_fallthru
      _
    %v59 = vld [vmem:[#allocation4] sm:$0xff]
    %v60 = vld [vmem:[#allocation4 + $0x8] sm:$0xff]
    %vm61 = vcmask 261120
    %62 = vst.msk [vmem:[#allocation2] sm:$0xff] %vm61, %v59
    %63 = vst.msk [vmem:[#allocation2 + $0x8] sm:$0xff] %vm61, %v60
    %v64 = vld [vmem:[#allocation9] sm:$0xff]
    %v65 = vld [vmem:[#allocation9 + $0x8] sm:$0xff]
    %v66 = vld [vmem:[#allocation9 + $0x10] sm:$0xff]
    %v67 = vld [vmem:[#allocation9 + $0x18] sm:$0xff]
    %v68 = vld [vmem:[#allocation2] sm:$0xff]
    %v69 = vld [vmem:[#allocation2 + $0x8] sm:$0xff]
    %v70 = vld [vmem:[#allocation7] sm:$0xff]
    %v71 = vld [vmem:[#allocation7 + $0x8] sm:$0xff]
    %v72 = vld [vmem:[#allocation7 + $0x10] sm:$0xff]
    %v73 = vld [vmem:[#allocation7 + $0x18] sm:$0xff]
    %v74 = vld [vmem:[%s3] sm:$0x1]
    %v76 = vlaneseq
    %v77 = vshrl.u32 %v76, 7
    %v78 = vsub.s32 0, %v77
    %v79 = vrot.slane %v74, %v78
    %v82 = vsel %vm61, %v68, 0
    %v85 = vsel %vm61, %v69, 0
    %87 = vmatprep.subr.mxu0 0.0
    %88 = vmatpush1.msra.mxu0 %v70
    %89 = vmatprep.subr.mxu0 0.0
    %90 = vmatpush1.msra.mxu0 %v71
    %91 = vmatprep.subr.mxu0 0.0
    %92 = vmatpush1.msra.mxu0 %v72
    %93 = vmatprep.subr.mxu0 0.0
    %94 = vmatpush1.msra.mxu0 %v73
    %95 = vmatprep.subr.mxu0 0.0
    %96 = vmatpush1.msra.mxu0 0.0
    %97 = vmatprep.subr.mxu0 0.0
    %98 = vmatpush1.msra.mxu0 0.0
    %99 = vmatprep.subr.mxu0 0.0
    %100 = vmatpush1.msra.mxu0 0.0
    %101 = vmatprep.subr.mxu0 0.0
    %102 = vmatpush1.msra.mxu0 0.0
    %103 = vmatprep.subr.mxu0 0.0
    %104 = vmatpush1.msra.mxu0 0.0
    %105 = vmatprep.subr.mxu0 0.0
    %106 = vmatpush1.msra.mxu0 0.0
    %107 = vmatprep.subr.mxu0 0.0
    %108 = vmatpush1.msra.mxu0 0.0
    %109 = vmatprep.subr.mxu0 0.0
    %110 = vmatpush1.msra.mxu0 0.0
    %111 = vmatprep.subr.mxu0 0.0
    %112 = vmatpush1.msra.mxu0 0.0
    %113 = vmatprep.subr.mxu0 0.0
    %114 = vmatpush1.msra.mxu0 0.0
    %115 = vmatprep.subr.mxu0 0.0
    %116 = vmatpush1.msra.mxu0 0.0
    %117 = vmatprep.subr.mxu0 0.0
    %118 = vmatpush1.msra.mxu0 0.0
    %119 = vmatprep.subr.mxu0 0.0
    %120 = vmatpush1.msra.mxu0 0.0
    %121 = vmatprep.subr.mxu0 0.0
    %122 = vmatpush1.msra.mxu0 0.0
    %123 = vmatprep.subr.mxu0 0.0
    %124 = vmatpush1.msra.mxu0 0.0
    %125 = vmatprep.subr.mxu0 0.0
    %126 = vmatpush1.msra.mxu0 0.0
    %127 = vmatprep.subr.mxu0 0.0
    %128 = vmatpush1.msra.mxu0 0.0
    %129 = vmatprep.subr.mxu0 0.0
    %130 = vmatpush1.msra.mxu0 0.0
    %131 = vmatprep.subr.mxu0 0.0
    %132 = vmatpush1.msra.mxu0 0.0
    %133 = vmatprep.subr.mxu0 0.0
    %134 = vmatpush1.msra.mxu0 0.0
    %135 = vmatprep.subr.mxu0 0.0
    %136 = vmatpush1.msra.mxu0 0.0
    %137 = vmatprep.subr.mxu0 0.0
    %138 = vmatpush1.msra.mxu0 0.0
    %139 = vmatprep.subr.mxu0 0.0
    %140 = vmatpush1.msra.mxu0 0.0
    %141 = vmatprep.subr.mxu0 0.0
    %142 = vmatpush1.msra.mxu0 0.0
    %143 = vmatprep.subr.mxu0 0.0
    %144 = vmatpush1.msra.mxu0 0.0
    %145 = vmatprep.subr.mxu0 0.0
    %146 = vmatpush1.msra.mxu0 0.0
    %147 = vmatprep.subr.mxu0 0.0
    %148 = vmatpush1.msra.mxu0 0.0
    %149 = vmatprep.subr.mxu0 0.0
    %150 = vmatpush1.msra.mxu0 0.0
    %151 = vmatprep.mubr.f32.mxu0 0.0
    %152 = vmatmul.mubr.f32.gmra.mrb[0].mxu0 %v82
    %v153 = vpop.f32.mrb[0].mxu0
    %v154 = vadd.f32 %v79, %v153
    %v155 = vpop.f32.mrb[0].mxu0
    %156 = vmatprep.mubr.f32.mxu0 0.0
    %157 = vmatmul.mubr.f32.gmra.mrb[0].mxu0 %v85
    %v158 = vpop.f32.mrb[0].mxu0
    %v159 = vadd.f32 %v79, %v158
    %v160 = vpop.f32.mrb[0].mxu0
    %161 = vdwg.mxu0
    %162 = vst [vmem:[#allocation3] sm:$0xff] %v154
    %163 = vst [vmem:[#allocation3 + $0x8] sm:$0xff] %v159
    %v164 = vld [vmem:[#allocation3] sm:$0x3]
    %v166 = vsel %vm61, 0.0, 0
    %168 = vmatprep.subr.mxu0 0.0
    %169 = vmatpush1.msra.mxu0 %v64
    %170 = vmatprep.subr.mxu0 0.0
    %171 = vmatpush1.msra.mxu0 %v65
    %172 = vmatprep.subr.mxu0 0.0
    %173 = vmatpush1.msra.mxu0 %v66
    %174 = vmatprep.subr.mxu0 0.0
    %175 = vmatpush1.msra.mxu0 %v67
    %176 = vmatprep.subr.mxu0 0.0
    %177 = vmatpush1.msra.mxu0 0.0
    %178 = vmatprep.subr.mxu0 0.0
    %179 = vmatpush1.msra.mxu0 0.0
    %180 = vmatprep.subr.mxu0 0.0
    %181 = vmatpush1.msra.mxu0 0.0
    %182 = vmatprep.subr.mxu0 0.0
    %183 = vmatpush1.msra.mxu0 0.0
    %184 = vmatprep.subr.mxu0 0.0
    %185 = vmatpush1.msra.mxu0 0.0
    %186 = vmatprep.subr.mxu0 0.0
    %187 = vmatpush1.msra.mxu0 0.0
    %188 = vmatprep.subr.mxu0 0.0
    %189 = vmatpush1.msra.mxu0 0.0
    %190 = vmatprep.subr.mxu0 0.0
    %191 = vmatpush1.msra.mxu0 0.0
    %192 = vmatprep.subr.mxu0 0.0
    %193 = vmatpush1.msra.mxu0 0.0
    %194 = vmatprep.subr.mxu0 0.0
    %195 = vmatpush1.msra.mxu0 0.0
    %196 = vmatprep.subr.mxu0 0.0
    %197 = vmatpush1.msra.mxu0 0.0
    %198 = vmatprep.subr.mxu0 0.0
    %199 = vmatpush1.msra.mxu0 0.0
    %200 = vmatprep.subr.mxu0 0.0
    %201 = vmatpush1.msra.mxu0 0.0
    %202 = vmatprep.subr.mxu0 0.0
    %203 = vmatpush1.msra.mxu0 0.0
    %204 = vmatprep.subr.mxu0 0.0
    %205 = vmatpush1.msra.mxu0 0.0
    %206 = vmatprep.subr.mxu0 0.0
    %207 = vmatpush1.msra.mxu0 0.0
    %208 = vmatprep.subr.mxu0 0.0
    %209 = vmatpush1.msra.mxu0 0.0
    %210 = vmatprep.subr.mxu0 0.0
    %211 = vmatpush1.msra.mxu0 0.0
    %212 = vmatprep.subr.mxu0 0.0
    %213 = vmatpush1.msra.mxu0 0.0
    %214 = vmatprep.subr.mxu0 0.0
    %215 = vmatpush1.msra.mxu0 0.0
    %216 = vmatprep.subr.mxu0 0.0
    %217 = vmatpush1.msra.mxu0 0.0
    %218 = vmatprep.subr.mxu0 0.0
    %219 = vmatpush1.msra.mxu0 0.0
    %220 = vmatprep.subr.mxu0 0.0
    %221 = vmatpush1.msra.mxu0 0.0
    %222 = vmatprep.subr.mxu0 0.0
    %223 = vmatpush1.msra.mxu0 0.0
    %224 = vmatprep.subr.mxu0 0.0
    %225 = vmatpush1.msra.mxu0 0.0
    %226 = vmatprep.subr.mxu0 0.0
    %227 = vmatpush1.msra.mxu0 0.0
    %228 = vmatprep.subr.mxu0 0.0
    %229 = vmatpush1.msra.mxu0 0.0
    %230 = vmatprep.subr.mxu0 0.0
    %231 = vmatpush1.msra.mxu0 0.0
    %232 = vmatprep.mubr.f32.mxu0 0.0
    %233 = vmatmul.mubr.f32.gmra.mrb[0].mxu0 %v166
    %v234 = vpop.f32.mrb[0].mxu0
    %v235 = vadd.f32 0.0, %v234
    %v236 = vpop.f32.mrb[0].mxu0
    %237 = vdwg.mxu0
    %v238 = vadd.f32 %v164, %v235
    %v239 = vxor.u32 %v238, 2147483648
    %v240 = vmul.f32 %v239, 1.442695
    %v241 = vpow.pop %v240
    %v242 = vadd.f32 %v241, 1.0
    %v243 = vrcp.pop %v242
    %v244 = vmul.f32 1.0, %v243
    %v245 = vtanh.pop %v238
    %v246 = vmul.f32 %v244, 0.0
    %248 = vrot.lane.b32.xlu0 %v245, 64
    %v249 = vpop.permute.xlu0 %248
    %v251 = vmul.f32 %v244, %v249
    %253 = vrot.lane.b32.xlu0 %v251, 32
    %v254 = vpop.permute.xlu0 %253
    %v256 = vadd.f32 %v246, %v254
    %v257 = vtanh.pop %v256
    %259 = vrot.lane.b32.xlu0 %v257, 64
    %v260 = vpop.permute.xlu0 %259
    %v262 = vmul.f32 %v244, %v260
    %v263 = vld [vmem:[#allocation2] sm:$0x3]
    %265 = vrot.lane.b32.xlu0 %v263, 96
    %v266 = vpop.permute.xlu0 %265
    %v268 = vadd.f32 %v262, %v266
    %270 = vrot.lane.b32.xlu0 %v268, 32
    %v271 = vpop.permute.xlu0 %270
    %vm273 = vcmask 254976
    %274 = vst.msk [vmem:[#allocation2] sm:$0x3] %vm273, %v271
    %v275 = vld [vmem:[#allocation3 + $0x2] sm:$0x3]
    %277 = vrot.lane.b32.xlu0 %v262, 32
    %v278 = vpop.permute.xlu0 %277
    %v279 = vsel %vm61, %v278, 0
    %281 = vmatprep.subr.mxu0 0.0
    %282 = vmatpush1.msra.mxu0 %v64
    %283 = vmatprep.subr.mxu0 0.0
    %284 = vmatpush1.msra.mxu0 %v65
    %285 = vmatprep.subr.mxu0 0.0
    %286 = vmatpush1.msra.mxu0 %v66
    %287 = vmatprep.subr.mxu0 0.0
    %288 = vmatpush1.msra.mxu0 %v67
    %289 = vmatprep.subr.mxu0 0.0
    %290 = vmatpush1.msra.mxu0 0.0
    %291 = vmatprep.subr.mxu0 0.0
    %292 = vmatpush1.msra.mxu0 0.0
    %293 = vmatprep.subr.mxu0 0.0
    %294 = vmatpush1.msra.mxu0 0.0
    %295 = vmatprep.subr.mxu0 0.0
    %296 = vmatpush1.msra.mxu0 0.0
    %297 = vmatprep.subr.mxu0 0.0
    %298 = vmatpush1.msra.mxu0 0.0
    %299 = vmatprep.subr.mxu0 0.0
    %300 = vmatpush1.msra.mxu0 0.0
    %301 = vmatprep.subr.mxu0 0.0
    %302 = vmatpush1.msra.mxu0 0.0
    %303 = vmatprep.subr.mxu0 0.0
    %304 = vmatpush1.msra.mxu0 0.0
    %305 = vmatprep.subr.mxu0 0.0
    %306 = vmatpush1.msra.mxu0 0.0
    %307 = vmatprep.subr.mxu0 0.0
    %308 = vmatpush1.msra.mxu0 0.0
    %309 = vmatprep.subr.mxu0 0.0
    %310 = vmatpush1.msra.mxu0 0.0
    %311 = vmatprep.subr.mxu0 0.0
    %312 = vmatpush1.msra.mxu0 0.0
    %313 = vmatprep.subr.mxu0 0.0
    %314 = vmatpush1.msra.mxu0 0.0
    %315 = vmatprep.subr.mxu0 0.0
    %316 = vmatpush1.msra.mxu0 0.0
    %317 = vmatprep.subr.mxu0 0.0
    %318 = vmatpush1.msra.mxu0 0.0
    %319 = vmatprep.subr.mxu0 0.0
    %320 = vmatpush1.msra.mxu0 0.0
    %321 = vmatprep.subr.mxu0 0.0
    %322 = vmatpush1.msra.mxu0 0.0
    %323 = vmatprep.subr.mxu0 0.0
    %324 = vmatpush1.msra.mxu0 0.0
    %325 = vmatprep.subr.mxu0 0.0
    %326 = vmatpush1.msra.mxu0 0.0
    %327 = vmatprep.subr.mxu0 0.0
    %328 = vmatpush1.msra.mxu0 0.0
    %329 = vmatprep.subr.mxu0 0.0
    %330 = vmatpush1.msra.mxu0 0.0
    %331 = vmatprep.subr.mxu0 0.0
    %332 = vmatpush1.msra.mxu0 0.0
    %333 = vmatprep.subr.mxu0 0.0
    %334 = vmatpush1.msra.mxu0 0.0
    %335 = vmatprep.subr.mxu0 0.0
    %336 = vmatpush1.msra.mxu0 0.0
    %337 = vmatprep.subr.mxu0 0.0
    %338 = vmatpush1.msra.mxu0 0.0
    %339 = vmatprep.subr.mxu0 0.0
    %340 = vmatpush1.msra.mxu0 0.0
    %341 = vmatprep.subr.mxu0 0.0
    %342 = vmatpush1.msra.mxu0 0.0
    %343 = vmatprep.subr.mxu0 0.0
    %344 = vmatpush1.msra.mxu0 0.0
    %345 = vmatprep.mubr.f32.mxu0 0.0
    %346 = vmatmul.mubr.f32.gmra.mrb[0].mxu0 %v279
    %v347 = vpop.f32.mrb[0].mxu0
    %v348 = vadd.f32 0.0, %v347
    %v349 = vpop.f32.mrb[0].mxu0
    %350 = vdwg.mxu0
    %v351 = vadd.f32 %v275, %v348
    %v352 = vxor.u32 %v351, 2147483648
    %v353 = vmul.f32 %v352, 1.442695
    %v354 = vpow.pop %v353
    %v355 = vadd.f32 %v354, 1.0
    %v356 = vrcp.pop %v355
    %v357 = vmul.f32 1.0, %v356
    %v358 = vtanh.pop %v351
    %v359 = vmul.f32 %v357, %v256
    %361 = vrot.lane.b32.xlu0 %v358, 64
    %v362 = vpop.permute.xlu0 %361
    %v364 = vmul.f32 %v357, %v362
    %366 = vrot.lane.b32.xlu0 %v364, 32
    %v367 = vpop.permute.xlu0 %366
    %v369 = vadd.f32 %v359, %v367
    %v370 = vtanh.pop %v369
    %372 = vrot.lane.b32.xlu0 %v370, 64
    %v373 = vpop.permute.xlu0 %372
    %v375 = vmul.f32 %v357, %v373
    %v376 = vld [vmem:[#allocation2 + $0x2] sm:$0x3]
    %378 = vrot.lane.b32.xlu0 %v376, 96
    %v379 = vpop.permute.xlu0 %378
    %v381 = vadd.f32 %v375, %v379
    %383 = vrot.lane.b32.xlu0 %v381, 32
    %v384 = vpop.permute.xlu0 %383
    %386 = vst.msk [vmem:[#allocation2 + $0x2] sm:$0x3] %vm273, %v384
    %v387 = vld [vmem:[#allocation3 + $0x4] sm:$0x3]
    %389 = vrot.lane.b32.xlu0 %v375, 32
    %v390 = vpop.permute.xlu0 %389
    %v391 = vsel %vm61, %v390, 0
    %393 = vmatprep.subr.mxu0 0.0
    %394 = vmatpush1.msra.mxu0 %v64
    %395 = vmatprep.subr.mxu0 0.0
    %396 = vmatpush1.msra.mxu0 %v65
    %397 = vmatprep.subr.mxu0 0.0
    %398 = vmatpush1.msra.mxu0 %v66
    %399 = vmatprep.subr.mxu0 0.0
    %400 = vmatpush1.msra.mxu0 %v67
    %401 = vmatprep.subr.mxu0 0.0
    %402 = vmatpush1.msra.mxu0 0.0
    %403 = vmatprep.subr.mxu0 0.0
    %404 = vmatpush1.msra.mxu0 0.0
    %405 = vmatprep.subr.mxu0 0.0
    %406 = vmatpush1.msra.mxu0 0.0
    %407 = vmatprep.subr.mxu0 0.0
    %408 = vmatpush1.msra.mxu0 0.0
    %409 = vmatprep.subr.mxu0 0.0
    %410 = vmatpush1.msra.mxu0 0.0
    %411 = vmatprep.subr.mxu0 0.0
    %412 = vmatpush1.msra.mxu0 0.0
    %413 = vmatprep.subr.mxu0 0.0
    %414 = vmatpush1.msra.mxu0 0.0
    %415 = vmatprep.subr.mxu0 0.0
    %416 = vmatpush1.msra.mxu0 0.0
    %417 = vmatprep.subr.mxu0 0.0
    %418 = vmatpush1.msra.mxu0 0.0
    %419 = vmatprep.subr.mxu0 0.0
    %420 = vmatpush1.msra.mxu0 0.0
    %421 = vmatprep.subr.mxu0 0.0
    %422 = vmatpush1.msra.mxu0 0.0
    %423 = vmatprep.subr.mxu0 0.0
    %424 = vmatpush1.msra.mxu0 0.0
    %425 = vmatprep.subr.mxu0 0.0
    %426 = vmatpush1.msra.mxu0 0.0
    %427 = vmatprep.subr.mxu0 0.0
    %428 = vmatpush1.msra.mxu0 0.0
    %429 = vmatprep.subr.mxu0 0.0
    %430 = vmatpush1.msra.mxu0 0.0
    %431 = vmatprep.subr.mxu0 0.0
    %432 = vmatpush1.msra.mxu0 0.0
    %433 = vmatprep.subr.mxu0 0.0
    %434 = vmatpush1.msra.mxu0 0.0
    %435 = vmatprep.subr.mxu0 0.0
    %436 = vmatpush1.msra.mxu0 0.0
    %437 = vmatprep.subr.mxu0 0.0
    %438 = vmatpush1.msra.mxu0 0.0
    %439 = vmatprep.subr.mxu0 0.0
    %440 = vmatpush1.msra.mxu0 0.0
    %441 = vmatprep.subr.mxu0 0.0
    %442 = vmatpush1.msra.mxu0 0.0
    %443 = vmatprep.subr.mxu0 0.0
    %444 = vmatpush1.msra.mxu0 0.0
    %445 = vmatprep.subr.mxu0 0.0
    %446 = vmatpush1.msra.mxu0 0.0
    %447 = vmatprep.subr.mxu0 0.0
    %448 = vmatpush1.msra.mxu0 0.0
    %449 = vmatprep.subr.mxu0 0.0
    %450 = vmatpush1.msra.mxu0 0.0
    %451 = vmatprep.subr.mxu0 0.0
    %452 = vmatpush1.msra.mxu0 0.0
    %453 = vmatprep.subr.mxu0 0.0
    %454 = vmatpush1.msra.mxu0 0.0
    %455 = vmatprep.subr.mxu0 0.0
    %456 = vmatpush1.msra.mxu0 0.0
    %457 = vmatprep.mubr.f32.mxu0 0.0
    %458 = vmatmul.mubr.f32.gmra.mrb[0].mxu0 %v391
    %v459 = vpop.f32.mrb[0].mxu0
    %v460 = vadd.f32 0.0, %v459
    %v461 = vpop.f32.mrb[0].mxu0
    %462 = vdwg.mxu0
    %v463 = vadd.f32 %v387, %v460
    %v464 = vxor.u32 %v463, 2147483648
    %v465 = vmul.f32 %v464, 1.442695
    %v466 = vpow.pop %v465
    %v467 = vadd.f32 %v466, 1.0
    %v468 = vrcp.pop %v467
    %v469 = vmul.f32 1.0, %v468
    %v470 = vtanh.pop %v463
    %v471 = vmul.f32 %v469, %v369
    %473 = vrot.lane.b32.xlu0 %v470, 64
    %v474 = vpop.permute.xlu0 %473
    %v476 = vmul.f32 %v469, %v474
    %478 = vrot.lane.b32.xlu0 %v476, 32
    %v479 = vpop.permute.xlu0 %478
    %v481 = vadd.f32 %v471, %v479
    %v482 = vtanh.pop %v481
    %484 = vrot.lane.b32.xlu0 %v482, 64
    %v485 = vpop.permute.xlu0 %484
    %v487 = vmul.f32 %v469, %v485
    %v488 = vld [vmem:[#allocation2 + $0x4] sm:$0x3]
    %490 = vrot.lane.b32.xlu0 %v488, 96
    %v491 = vpop.permute.xlu0 %490
    %v493 = vadd.f32 %v487, %v491
    %495 = vrot.lane.b32.xlu0 %v493, 32
    %v496 = vpop.permute.xlu0 %495
    %498 = vst.msk [vmem:[#allocation2 + $0x4] sm:$0x3] %vm273, %v496
    %v499 = vld [vmem:[#allocation3 + $0x6] sm:$0x3]
    %501 = vrot.lane.b32.xlu0 %v487, 32
    %v502 = vpop.permute.xlu0 %501
    %v503 = vsel %vm61, %v502, 0
    %505 = vmatprep.subr.mxu0 0.0
    %506 = vmatpush1.msra.mxu0 %v64
    %507 = vmatprep.subr.mxu0 0.0
    %508 = vmatpush1.msra.mxu0 %v65
    %509 = vmatprep.subr.mxu0 0.0
    %510 = vmatpush1.msra.mxu0 %v66
    %511 = vmatprep.subr.mxu0 0.0
    %512 = vmatpush1.msra.mxu0 %v67
    %513 = vmatprep.subr.mxu0 0.0
    %514 = vmatpush1.msra.mxu0 0.0
    %515 = vmatprep.subr.mxu0 0.0
    %516 = vmatpush1.msra.mxu0 0.0
    %517 = vmatprep.subr.mxu0 0.0
    %518 = vmatpush1.msra.mxu0 0.0
    %519 = vmatprep.subr.mxu0 0.0
    %520 = vmatpush1.msra.mxu0 0.0
    %521 = vmatprep.subr.mxu0 0.0
    %522 = vmatpush1.msra.mxu0 0.0
    %523 = vmatprep.subr.mxu0 0.0
    %524 = vmatpush1.msra.mxu0 0.0
    %525 = vmatprep.subr.mxu0 0.0
    %526 = vmatpush1.msra.mxu0 0.0
    %527 = vmatprep.subr.mxu0 0.0
    %528 = vmatpush1.msra.mxu0 0.0
    %529 = vmatprep.subr.mxu0 0.0
    %530 = vmatpush1.msra.mxu0 0.0
    %531 = vmatprep.subr.mxu0 0.0
    %532 = vmatpush1.msra.mxu0 0.0
    %533 = vmatprep.subr.mxu0 0.0
    %534 = vmatpush1.msra.mxu0 0.0
    %535 = vmatprep.subr.mxu0 0.0
    %536 = vmatpush1.msra.mxu0 0.0
    %537 = vmatprep.subr.mxu0 0.0
    %538 = vmatpush1.msra.mxu0 0.0
    %539 = vmatprep.subr.mxu0 0.0
    %540 = vmatpush1.msra.mxu0 0.0
    %541 = vmatprep.subr.mxu0 0.0
    %542 = vmatpush1.msra.mxu0 0.0
    %543 = vmatprep.subr.mxu0 0.0
    %544 = vmatpush1.msra.mxu0 0.0
    %545 = vmatprep.subr.mxu0 0.0
    %546 = vmatpush1.msra.mxu0 0.0
    %547 = vmatprep.subr.mxu0 0.0
    %548 = vmatpush1.msra.mxu0 0.0
    %549 = vmatprep.subr.mxu0 0.0
    %550 = vmatpush1.msra.mxu0 0.0
    %551 = vmatprep.subr.mxu0 0.0
    %552 = vmatpush1.msra.mxu0 0.0
    %553 = vmatprep.subr.mxu0 0.0
    %554 = vmatpush1.msra.mxu0 0.0
    %555 = vmatprep.subr.mxu0 0.0
    %556 = vmatpush1.msra.mxu0 0.0
    %557 = vmatprep.subr.mxu0 0.0
    %558 = vmatpush1.msra.mxu0 0.0
    %559 = vmatprep.subr.mxu0 0.0
    %560 = vmatpush1.msra.mxu0 0.0
    %561 = vmatprep.subr.mxu0 0.0
    %562 = vmatpush1.msra.mxu0 0.0
    %563 = vmatprep.subr.mxu0 0.0
    %564 = vmatpush1.msra.mxu0 0.0
    %565 = vmatprep.subr.mxu0 0.0
    %566 = vmatpush1.msra.mxu0 0.0
    %567 = vmatprep.subr.mxu0 0.0
    %568 = vmatpush1.msra.mxu0 0.0
    %569 = vmatprep.mubr.f32.mxu0 0.0
    %570 = vmatmul.mubr.f32.gmra.mrb[0].mxu0 %v503
    %v571 = vpop.f32.mrb[0].mxu0
    %v572 = vadd.f32 0.0, %v571
    %v573 = vpop.f32.mrb[0].mxu0
    %574 = vdwg.mxu0
    %v575 = vadd.f32 %v499, %v572
    %v576 = vxor.u32 %v575, 2147483648
    %v577 = vmul.f32 %v576, 1.442695
    %v578 = vpow.pop %v577
    %v579 = vadd.f32 %v578, 1.0
    %v580 = vrcp.pop %v579
    %v581 = vmul.f32 1.0, %v580
    %v582 = vtanh.pop %v575
    %v583 = vmul.f32 %v581, %v481
    %585 = vrot.lane.b32.xlu0 %v582, 64
    %v586 = vpop.permute.xlu0 %585
    %v588 = vmul.f32 %v581, %v586
    %590 = vrot.lane.b32.xlu0 %v588, 32
    %v591 = vpop.permute.xlu0 %590
    %v593 = vadd.f32 %v583, %v591
    %v594 = vtanh.pop %v593
    %596 = vrot.lane.b32.xlu0 %v594, 64
    %v597 = vpop.permute.xlu0 %596
    %v599 = vmul.f32 %v581, %v597
    %v600 = vld [vmem:[#allocation2 + $0x6] sm:$0x3]
    %602 = vrot.lane.b32.xlu0 %v600, 96
    %v603 = vpop.permute.xlu0 %602
    %v605 = vadd.f32 %v599, %v603
    %607 = vrot.lane.b32.xlu0 %v605, 32
    %v608 = vpop.permute.xlu0 %607
    %610 = vst.msk [vmem:[#allocation2 + $0x6] sm:$0x3] %vm273, %v608
    %v611 = vld [vmem:[#allocation3 + $0x8] sm:$0x3]
    %613 = vrot.lane.b32.xlu0 %v599, 32
    %v614 = vpop.permute.xlu0 %613
    %v615 = vsel %vm61, %v614, 0
    %617 = vmatprep.subr.mxu0 0.0
    %618 = vmatpush1.msra.mxu0 %v64
    %619 = vmatprep.subr.mxu0 0.0
    %620 = vmatpush1.msra.mxu0 %v65
    %621 = vmatprep.subr.mxu0 0.0
    %622 = vmatpush1.msra.mxu0 %v66
    %623 = vmatprep.subr.mxu0 0.0
    %624 = vmatpush1.msra.mxu0 %v67
    %625 = vmatprep.subr.mxu0 0.0
    %626 = vmatpush1.msra.mxu0 0.0
    %627 = vmatprep.subr.mxu0 0.0
    %628 = vmatpush1.msra.mxu0 0.0
    %629 = vmatprep.subr.mxu0 0.0
    %630 = vmatpush1.msra.mxu0 0.0
    %631 = vmatprep.subr.mxu0 0.0
    %632 = vmatpush1.msra.mxu0 0.0
    %633 = vmatprep.subr.mxu0 0.0
    %634 = vmatpush1.msra.mxu0 0.0
    %635 = vmatprep.subr.mxu0 0.0
    %636 = vmatpush1.msra.mxu0 0.0
    %637 = vmatprep.subr.mxu0 0.0
    %638 = vmatpush1.msra.mxu0 0.0
    %639 = vmatprep.subr.mxu0 0.0
    %640 = vmatpush1.msra.mxu0 0.0
    %641 = vmatprep.subr.mxu0 0.0
    %642 = vmatpush1.msra.mxu0 0.0
    %643 = vmatprep.subr.mxu0 0.0
    %644 = vmatpush1.msra.mxu0 0.0
    %645 = vmatprep.subr.mxu0 0.0
    %646 = vmatpush1.msra.mxu0 0.0
    %647 = vmatprep.subr.mxu0 0.0
    %648 = vmatpush1.msra.mxu0 0.0
    %649 = vmatprep.subr.mxu0 0.0
    %650 = vmatpush1.msra.mxu0 0.0
    %651 = vmatprep.subr.mxu0 0.0
    %652 = vmatpush1.msra.mxu0 0.0
    %653 = vmatprep.subr.mxu0 0.0
    %654 = vmatpush1.msra.mxu0 0.0
    %655 = vmatprep.subr.mxu0 0.0
    %656 = vmatpush1.msra.mxu0 0.0
    %657 = vmatprep.subr.mxu0 0.0
    %658 = vmatpush1.msra.mxu0 0.0
    %659 = vmatprep.subr.mxu0 0.0
    %660 = vmatpush1.msra.mxu0 0.0
    %661 = vmatprep.subr.mxu0 0.0
    %662 = vmatpush1.msra.mxu0 0.0
    %663 = vmatprep.subr.mxu0 0.0
    %664 = vmatpush1.msra.mxu0 0.0
    %665 = vmatprep.subr.mxu0 0.0
    %666 = vmatpush1.msra.mxu0 0.0
    %667 = vmatprep.subr.mxu0 0.0
    %668 = vmatpush1.msra.mxu0 0.0
    %669 = vmatprep.subr.mxu0 0.0
    %670 = vmatpush1.msra.mxu0 0.0
    %671 = vmatprep.subr.mxu0 0.0
    %672 = vmatpush1.msra.mxu0 0.0
    %673 = vmatprep.subr.mxu0 0.0
    %674 = vmatpush1.msra.mxu0 0.0
    %675 = vmatprep.subr.mxu0 0.0
    %676 = vmatpush1.msra.mxu0 0.0
    %677 = vmatprep.subr.mxu0 0.0
    %678 = vmatpush1.msra.mxu0 0.0
    %679 = vmatprep.subr.mxu0 0.0
    %680 = vmatpush1.msra.mxu0 0.0
    %681 = vmatprep.mubr.f32.mxu0 0.0
    %682 = vmatmul.mubr.f32.gmra.mrb[0].mxu0 %v615
    %v683 = vpop.f32.mrb[0].mxu0
    %v684 = vadd.f32 0.0, %v683
    %v685 = vpop.f32.mrb[0].mxu0
    %686 = vdwg.mxu0
    %v687 = vadd.f32 %v611, %v684
    %v688 = vxor.u32 %v687, 2147483648
    %v689 = vmul.f32 %v688, 1.442695
    %v690 = vpow.pop %v689
    %v691 = vadd.f32 %v690, 1.0
    %v692 = vrcp.pop %v691
    %v693 = vmul.f32 1.0, %v692
    %v694 = vtanh.pop %v687
    %v695 = vmul.f32 %v693, %v593
    %697 = vrot.lane.b32.xlu0 %v694, 64
    %v698 = vpop.permute.xlu0 %697
    %v700 = vmul.f32 %v693, %v698
    %702 = vrot.lane.b32.xlu0 %v700, 32
    %v703 = vpop.permute.xlu0 %702
    %v705 = vadd.f32 %v695, %v703
    %v706 = vtanh.pop %v705
    %708 = vrot.lane.b32.xlu0 %v706, 64
    %v709 = vpop.permute.xlu0 %708
    %v711 = vmul.f32 %v693, %v709
    %v712 = vld [vmem:[#allocation2 + $0x8] sm:$0x3]
    %714 = vrot.lane.b32.xlu0 %v712, 96
    %v715 = vpop.permute.xlu0 %714
    %v717 = vadd.f32 %v711, %v715
    %719 = vrot.lane.b32.xlu0 %v717, 32
    %v720 = vpop.permute.xlu0 %719
    %722 = vst.msk [vmem:[#allocation2 + $0x8] sm:$0x3] %vm273, %v720
    %v723 = vld [vmem:[#allocation3 + $0xa] sm:$0x3]
    %725 = vrot.lane.b32.xlu0 %v711, 32
    %v726 = vpop.permute.xlu0 %725
    %v727 = vsel %vm61, %v726, 0
    %729 = vmatprep.subr.mxu0 0.0
    %730 = vmatpush1.msra.mxu0 %v64
    %731 = vmatprep.subr.mxu0 0.0
    %732 = vmatpush1.msra.mxu0 %v65
    %733 = vmatprep.subr.mxu0 0.0
    %734 = vmatpush1.msra.mxu0 %v66
    %735 = vmatprep.subr.mxu0 0.0
    %736 = vmatpush1.msra.mxu0 %v67
    %737 = vmatprep.subr.mxu0 0.0
    %738 = vmatpush1.msra.mxu0 0.0
    %739 = vmatprep.subr.mxu0 0.0
    %740 = vmatpush1.msra.mxu0 0.0
    %741 = vmatprep.subr.mxu0 0.0
    %742 = vmatpush1.msra.mxu0 0.0
    %743 = vmatprep.subr.mxu0 0.0
    %744 = vmatpush1.msra.mxu0 0.0
    %745 = vmatprep.subr.mxu0 0.0
    %746 = vmatpush1.msra.mxu0 0.0
    %747 = vmatprep.subr.mxu0 0.0
    %748 = vmatpush1.msra.mxu0 0.0
    %749 = vmatprep.subr.mxu0 0.0
    %750 = vmatpush1.msra.mxu0 0.0
    %751 = vmatprep.subr.mxu0 0.0
    %752 = vmatpush1.msra.mxu0 0.0
    %753 = vmatprep.subr.mxu0 0.0
    %754 = vmatpush1.msra.mxu0 0.0
    %755 = vmatprep.subr.mxu0 0.0
    %756 = vmatpush1.msra.mxu0 0.0
    %757 = vmatprep.subr.mxu0 0.0
    %758 = vmatpush1.msra.mxu0 0.0
    %759 = vmatprep.subr.mxu0 0.0
    %760 = vmatpush1.msra.mxu0 0.0
    %761 = vmatprep.subr.mxu0 0.0
    %762 = vmatpush1.msra.mxu0 0.0
    %763 = vmatprep.subr.mxu0 0.0
    %764 = vmatpush1.msra.mxu0 0.0
    %765 = vmatprep.subr.mxu0 0.0
    %766 = vmatpush1.msra.mxu0 0.0
    %767 = vmatprep.subr.mxu0 0.0
    %768 = vmatpush1.msra.mxu0 0.0
    %769 = vmatprep.subr.mxu0 0.0
    %770 = vmatpush1.msra.mxu0 0.0
    %771 = vmatprep.subr.mxu0 0.0
    %772 = vmatpush1.msra.mxu0 0.0
    %773 = vmatprep.subr.mxu0 0.0
    %774 = vmatpush1.msra.mxu0 0.0
    %775 = vmatprep.subr.mxu0 0.0
    %776 = vmatpush1.msra.mxu0 0.0
    %777 = vmatprep.subr.mxu0 0.0
    %778 = vmatpush1.msra.mxu0 0.0
    %779 = vmatprep.subr.mxu0 0.0
    %780 = vmatpush1.msra.mxu0 0.0
    %781 = vmatprep.subr.mxu0 0.0
    %782 = vmatpush1.msra.mxu0 0.0
    %783 = vmatprep.subr.mxu0 0.0
    %784 = vmatpush1.msra.mxu0 0.0
    %785 = vmatprep.subr.mxu0 0.0
    %786 = vmatpush1.msra.mxu0 0.0
    %787 = vmatprep.subr.mxu0 0.0
    %788 = vmatpush1.msra.mxu0 0.0
    %789 = vmatprep.subr.mxu0 0.0
    %790 = vmatpush1.msra.mxu0 0.0
    %791 = vmatprep.subr.mxu0 0.0
    %792 = vmatpush1.msra.mxu0 0.0
    %793 = vmatprep.mubr.f32.mxu0 0.0
    %794 = vmatmul.mubr.f32.gmra.mrb[0].mxu0 %v727
    %v795 = vpop.f32.mrb[0].mxu0
    %v796 = vadd.f32 0.0, %v795
    %v797 = vpop.f32.mrb[0].mxu0
    %798 = vdwg.mxu0
    %v799 = vadd.f32 %v723, %v796
    %v800 = vxor.u32 %v799, 2147483648
    %v801 = vmul.f32 %v800, 1.442695
    %v802 = vpow.pop %v801
    %v803 = vadd.f32 %v802, 1.0
    %v804 = vrcp.pop %v803
    %v805 = vmul.f32 1.0, %v804
    %v806 = vtanh.pop %v799
    %v807 = vmul.f32 %v805, %v705
    %809 = vrot.lane.b32.xlu0 %v806, 64
    %v810 = vpop.permute.xlu0 %809
    %v812 = vmul.f32 %v805, %v810
    %814 = vrot.lane.b32.xlu0 %v812, 32
    %v815 = vpop.permute.xlu0 %814
    %v817 = vadd.f32 %v807, %v815
    %v818 = vtanh.pop %v817
    %820 = vrot.lane.b32.xlu0 %v818, 64
    %v821 = vpop.permute.xlu0 %820
    %v823 = vmul.f32 %v805, %v821
    %v824 = vld [vmem:[#allocation2 + $0xa] sm:$0x3]
    %826 = vrot.lane.b32.xlu0 %v824, 96
    %v827 = vpop.permute.xlu0 %826
    %v829 = vadd.f32 %v823, %v827
    %831 = vrot.lane.b32.xlu0 %v829, 32
    %v832 = vpop.permute.xlu0 %831
    %834 = vst.msk [vmem:[#allocation2 + $0xa] sm:$0x3] %vm273, %v832
    %v835 = vld [vmem:[#allocation3 + $0xc] sm:$0x3]
    %837 = vrot.lane.b32.xlu0 %v823, 32
    %v838 = vpop.permute.xlu0 %837
    %v839 = vsel %vm61, %v838, 0
    %841 = vmatprep.subr.mxu0 0.0
    %842 = vmatpush1.msra.mxu0 %v64
    %843 = vmatprep.subr.mxu0 0.0
    %844 = vmatpush1.msra.mxu0 %v65
    %845 = vmatprep.subr.mxu0 0.0
    %846 = vmatpush1.msra.mxu0 %v66
    %847 = vmatprep.subr.mxu0 0.0
    %848 = vmatpush1.msra.mxu0 %v67
    %849 = vmatprep.subr.mxu0 0.0
    %850 = vmatpush1.msra.mxu0 0.0
    %851 = vmatprep.subr.mxu0 0.0
    %852 = vmatpush1.msra.mxu0 0.0
    %853 = vmatprep.subr.mxu0 0.0
    %854 = vmatpush1.msra.mxu0 0.0
    %855 = vmatprep.subr.mxu0 0.0
    %856 = vmatpush1.msra.mxu0 0.0
    %857 = vmatprep.subr.mxu0 0.0
    %858 = vmatpush1.msra.mxu0 0.0
    %859 = vmatprep.subr.mxu0 0.0
    %860 = vmatpush1.msra.mxu0 0.0
    %861 = vmatprep.subr.mxu0 0.0
    %862 = vmatpush1.msra.mxu0 0.0
    %863 = vmatprep.subr.mxu0 0.0
    %864 = vmatpush1.msra.mxu0 0.0
    %865 = vmatprep.subr.mxu0 0.0
    %866 = vmatpush1.msra.mxu0 0.0
    %867 = vmatprep.subr.mxu0 0.0
    %868 = vmatpush1.msra.mxu0 0.0
    %869 = vmatprep.subr.mxu0 0.0
    %870 = vmatpush1.msra.mxu0 0.0
    %871 = vmatprep.subr.mxu0 0.0
    %872 = vmatpush1.msra.mxu0 0.0
    %873 = vmatprep.subr.mxu0 0.0
    %874 = vmatpush1.msra.mxu0 0.0
    %875 = vmatprep.subr.mxu0 0.0
    %876 = vmatpush1.msra.mxu0 0.0
    %877 = vmatprep.subr.mxu0 0.0
    %878 = vmatpush1.msra.mxu0 0.0
    %879 = vmatprep.subr.mxu0 0.0
    %880 = vmatpush1.msra.mxu0 0.0
    %881 = vmatprep.subr.mxu0 0.0
    %882 = vmatpush1.msra.mxu0 0.0
    %883 = vmatprep.subr.mxu0 0.0
    %884 = vmatpush1.msra.mxu0 0.0
    %885 = vmatprep.subr.mxu0 0.0
    %886 = vmatpush1.msra.mxu0 0.0
    %887 = vmatprep.subr.mxu0 0.0
    %888 = vmatpush1.msra.mxu0 0.0
    %889 = vmatprep.subr.mxu0 0.0
    %890 = vmatpush1.msra.mxu0 0.0
    %891 = vmatprep.subr.mxu0 0.0
    %892 = vmatpush1.msra.mxu0 0.0
    %893 = vmatprep.subr.mxu0 0.0
    %894 = vmatpush1.msra.mxu0 0.0
    %895 = vmatprep.subr.mxu0 0.0
    %896 = vmatpush1.msra.mxu0 0.0
    %897 = vmatprep.subr.mxu0 0.0
    %898 = vmatpush1.msra.mxu0 0.0
    %899 = vmatprep.subr.mxu0 0.0
    %900 = vmatpush1.msra.mxu0 0.0
    %901 = vmatprep.subr.mxu0 0.0
    %902 = vmatpush1.msra.mxu0 0.0
    %903 = vmatprep.subr.mxu0 0.0
    %904 = vmatpush1.msra.mxu0 0.0
    %905 = vmatprep.mubr.f32.mxu0 0.0
    %906 = vmatmul.mubr.f32.gmra.mrb[0].mxu0 %v839
    %v907 = vpop.f32.mrb[0].mxu0
    %v908 = vadd.f32 0.0, %v907
    %v909 = vpop.f32.mrb[0].mxu0
    %910 = vdwg.mxu0
    %v911 = vadd.f32 %v835, %v908
    %v912 = vxor.u32 %v911, 2147483648
    %v913 = vmul.f32 %v912, 1.442695
    %v914 = vpow.pop %v913
    %v915 = vadd.f32 %v914, 1.0
    %v916 = vrcp.pop %v915
    %v917 = vmul.f32 1.0, %v916
    %v918 = vtanh.pop %v911
    %v919 = vmul.f32 %v917, %v817
    %921 = vrot.lane.b32.xlu0 %v918, 64
    %v922 = vpop.permute.xlu0 %921
    %v924 = vmul.f32 %v917, %v922
    %926 = vrot.lane.b32.xlu0 %v924, 32
    %v927 = vpop.permute.xlu0 %926
    %v929 = vadd.f32 %v919, %v927
    %v930 = vtanh.pop %v929
    %932 = vrot.lane.b32.xlu0 %v930, 64
    %v933 = vpop.permute.xlu0 %932
    %v935 = vmul.f32 %v917, %v933
    %v936 = vld [vmem:[#allocation2 + $0xc] sm:$0x3]
    %938 = vrot.lane.b32.xlu0 %v936, 96
    %v939 = vpop.permute.xlu0 %938
    %v941 = vadd.f32 %v935, %v939
    %943 = vrot.lane.b32.xlu0 %v941, 32
    %v944 = vpop.permute.xlu0 %943
    %946 = vst.msk [vmem:[#allocation2 + $0xc] sm:$0x3] %vm273, %v944
    %v947 = vld [vmem:[#allocation3 + $0xe] sm:$0x3]
    %949 = vrot.lane.b32.xlu0 %v935, 32
    %v950 = vpop.permute.xlu0 %949
    %v951 = vsel %vm61, %v950, 0
    %953 = vmatprep.subr.mxu0 0.0
    %954 = vmatpush1.msra.mxu0 %v64
    %955 = vmatprep.subr.mxu0 0.0
    %956 = vmatpush1.msra.mxu0 %v65
    %957 = vmatprep.subr.mxu0 0.0
    %958 = vmatpush1.msra.mxu0 %v66
    %959 = vmatprep.subr.mxu0 0.0
    %960 = vmatpush1.msra.mxu0 %v67
    %961 = vmatprep.subr.mxu0 0.0
    %962 = vmatpush1.msra.mxu0 0.0
    %963 = vmatprep.subr.mxu0 0.0
    %964 = vmatpush1.msra.mxu0 0.0
    %965 = vmatprep.subr.mxu0 0.0
    %966 = vmatpush1.msra.mxu0 0.0
    %967 = vmatprep.subr.mxu0 0.0
    %968 = vmatpush1.msra.mxu0 0.0
    %969 = vmatprep.subr.mxu0 0.0
    %970 = vmatpush1.msra.mxu0 0.0
    %971 = vmatprep.subr.mxu0 0.0
    %972 = vmatpush1.msra.mxu0 0.0
    %973 = vmatprep.subr.mxu0 0.0
    %974 = vmatpush1.msra.mxu0 0.0
    %975 = vmatprep.subr.mxu0 0.0
    %976 = vmatpush1.msra.mxu0 0.0
    %977 = vmatprep.subr.mxu0 0.0
    %978 = vmatpush1.msra.mxu0 0.0
    %979 = vmatprep.subr.mxu0 0.0
    %980 = vmatpush1.msra.mxu0 0.0
    %981 = vmatprep.subr.mxu0 0.0
    %982 = vmatpush1.msra.mxu0 0.0
    %983 = vmatprep.subr.mxu0 0.0
    %984 = vmatpush1.msra.mxu0 0.0
    %985 = vmatprep.subr.mxu0 0.0
    %986 = vmatpush1.msra.mxu0 0.0
    %987 = vmatprep.subr.mxu0 0.0
    %988 = vmatpush1.msra.mxu0 0.0
    %989 = vmatprep.subr.mxu0 0.0
    %990 = vmatpush1.msra.mxu0 0.0
    %991 = vmatprep.subr.mxu0 0.0
    %992 = vmatpush1.msra.mxu0 0.0
    %993 = vmatprep.subr.mxu0 0.0
    %994 = vmatpush1.msra.mxu0 0.0
    %995 = vmatprep.subr.mxu0 0.0
    %996 = vmatpush1.msra.mxu0 0.0
    %997 = vmatprep.subr.mxu0 0.0
    %998 = vmatpush1.msra.mxu0 0.0
    %999 = vmatprep.subr.mxu0 0.0
    %1000 = vmatpush1.msra.mxu0 0.0
    %1001 = vmatprep.subr.mxu0 0.0
    %1002 = vmatpush1.msra.mxu0 0.0
    %1003 = vmatprep.subr.mxu0 0.0
    %1004 = vmatpush1.msra.mxu0 0.0
    %1005 = vmatprep.subr.mxu0 0.0
    %1006 = vmatpush1.msra.mxu0 0.0
    %1007 = vmatprep.subr.mxu0 0.0
    %1008 = vmatpush1.msra.mxu0 0.0
    %1009 = vmatprep.subr.mxu0 0.0
    %1010 = vmatpush1.msra.mxu0 0.0
    %1011 = vmatprep.subr.mxu0 0.0
    %1012 = vmatpush1.msra.mxu0 0.0
    %1013 = vmatprep.subr.mxu0 0.0
    %1014 = vmatpush1.msra.mxu0 0.0
    %1015 = vmatprep.subr.mxu0 0.0
    %1016 = vmatpush1.msra.mxu0 0.0
    %1017 = vmatprep.mubr.f32.mxu0 0.0
    %1018 = vmatmul.mubr.f32.gmra.mrb[0].mxu0 %v951
    %v1019 = vpop.f32.mrb[0].mxu0
    %v1020 = vadd.f32 0.0, %v1019
    %v1021 = vpop.f32.mrb[0].mxu0
    %1022 = vdwg.mxu0
    %v1023 = vadd.f32 %v947, %v1020
    %v1024 = vxor.u32 %v1023, 2147483648
    %v1025 = vmul.f32 %v1024, 1.442695
    %v1026 = vpow.pop %v1025
    %v1027 = vadd.f32 %v1026, 1.0
    %v1028 = vrcp.pop %v1027
    %v1029 = vmul.f32 1.0, %v1028
    %v1030 = vtanh.pop %v1023
    %v1031 = vmul.f32 %v1029, %v929
    %1033 = vrot.lane.b32.xlu0 %v1030, 64
    %v1034 = vpop.permute.xlu0 %1033
    %v1036 = vmul.f32 %v1029, %v1034
    %1038 = vrot.lane.b32.xlu0 %v1036, 32
    %v1039 = vpop.permute.xlu0 %1038
    %v1041 = vadd.f32 %v1031, %v1039
    %v1042 = vtanh.pop %v1041
    %1044 = vrot.lane.b32.xlu0 %v1042, 64
    %v1045 = vpop.permute.xlu0 %1044
    %v1047 = vmul.f32 %v1029, %v1045
    %v1048 = vld [vmem:[#allocation2 + $0xe] sm:$0x3]
    %1050 = vrot.lane.b32.xlu0 %v1048, 96
    %v1051 = vpop.permute.xlu0 %1050
    %v1053 = vadd.f32 %v1047, %v1051
    %1055 = vrot.lane.b32.xlu0 %v1053, 32
    %v1056 = vpop.permute.xlu0 %1055
    %1058 = vst.msk [vmem:[#allocation2 + $0xe] sm:$0x3] %vm273, %v1056
    %s1059 = scalar_lea.vmem [#allocation9], 32
    %v1060 = vld [vmem:[%s1059] sm:$0xff]
    %v1061 = vld [vmem:[%s1059 + $0x8] sm:$0xff]
    %v1062 = vld [vmem:[%s1059 + $0x10] sm:$0xff]
    %v1063 = vld [vmem:[%s1059 + $0x18] sm:$0xff]
    %v1064 = vld [vmem:[#allocation2] sm:$0xff]
    %v1065 = vld [vmem:[#allocation2 + $0x8] sm:$0xff]
    %s1066 = scalar_lea.vmem [#allocation7], 32
    %v1067 = vld [vmem:[%s1066] sm:$0xff]
    %v1068 = vld [vmem:[%s1066 + $0x8] sm:$0xff]
    %v1069 = vld [vmem:[%s1066 + $0x10] sm:$0xff]
    %v1070 = vld [vmem:[%s1066 + $0x18] sm:$0xff]
    %s1071 = scalar_lea.vmem %s3, 1
    %v1072 = vld [vmem:[%s1071] sm:$0x1]
    %v1074 = vlaneseq
    %v1075 = vshrl.u32 %v1074, 7
    %v1076 = vsub.s32 0, %v1075
    %v1077 = vrot.slane %v1072, %v1076
    %v1080 = vsel %vm61, %v1064, 0
    %v1083 = vsel %vm61, %v1065, 0
    %1085 = vmatprep.subr.mxu0 0.0
    %1086 = vmatpush1.msra.mxu0 %v1067
    %1087 = vmatprep.subr.mxu0 0.0
    %1088 = vmatpush1.msra.mxu0 %v1068
    %1089 = vmatprep.subr.mxu0 0.0
    %1090 = vmatpush1.msra.mxu0 %v1069
    %1091 = vmatprep.subr.mxu0 0.0
    %1092 = vmatpush1.msra.mxu0 %v1070
    %1093 = vmatprep.subr.mxu0 0.0
    %1094 = vmatpush1.msra.mxu0 0.0
    %1095 = vmatprep.subr.mxu0 0.0
    %1096 = vmatpush1.msra.mxu0 0.0
    %1097 = vmatprep.subr.mxu0 0.0
    %1098 = vmatpush1.msra.mxu0 0.0
    %1099 = vmatprep.subr.mxu0 0.0
    %1100 = vmatpush1.msra.mxu0 0.0
    %1101 = vmatprep.subr.mxu0 0.0
    %1102 = vmatpush1.msra.mxu0 0.0
    %1103 = vmatprep.subr.mxu0 0.0
    %1104 = vmatpush1.msra.mxu0 0.0
    %1105 = vmatprep.subr.mxu0 0.0
    %1106 = vmatpush1.msra.mxu0 0.0
    %1107 = vmatprep.subr.mxu0 0.0
    %1108 = vmatpush1.msra.mxu0 0.0
    %1109 = vmatprep.subr.mxu0 0.0
    %1110 = vmatpush1.msra.mxu0 0.0
    %1111 = vmatprep.subr.mxu0 0.0
    %1112 = vmatpush1.msra.mxu0 0.0
    %1113 = vmatprep.subr.mxu0 0.0
    %1114 = vmatpush1.msra.mxu0 0.0
    %1115 = vmatprep.subr.mxu0 0.0
    %1116 = vmatpush1.msra.mxu0 0.0
    %1117 = vmatprep.subr.mxu0 0.0
    %1118 = vmatpush1.msra.mxu0 0.0
    %1119 = vmatprep.subr.mxu0 0.0
    %1120 = vmatpush1.msra.mxu0 0.0
    %1121 = vmatprep.subr.mxu0 0.0
    %1122 = vmatpush1.msra.mxu0 0.0
    %1123 = vmatprep.subr.mxu0 0.0
    %1124 = vmatpush1.msra.mxu0 0.0
    %1125 = vmatprep.subr.mxu0 0.0
    %1126 = vmatpush1.msra.mxu0 0.0
    %1127 = vmatprep.subr.mxu0 0.0
    %1128 = vmatpush1.msra.mxu0 0.0
    %1129 = vmatprep.subr.mxu0 0.0
    %1130 = vmatpush1.msra.mxu0 0.0
    %1131 = vmatprep.subr.mxu0 0.0
    %1132 = vmatpush1.msra.mxu0 0.0
    %1133 = vmatprep.subr.mxu0 0.0
    %1134 = vmatpush1.msra.mxu0 0.0
    %1135 = vmatprep.subr.mxu0 0.0
    %1136 = vmatpush1.msra.mxu0 0.0
    %1137 = vmatprep.subr.mxu0 0.0
    %1138 = vmatpush1.msra.mxu0 0.0
    %1139 = vmatprep.subr.mxu0 0.0
    %1140 = vmatpush1.msra.mxu0 0.0
    %1141 = vmatprep.subr.mxu0 0.0
    %1142 = vmatpush1.msra.mxu0 0.0
    %1143 = vmatprep.subr.mxu0 0.0
    %1144 = vmatpush1.msra.mxu0 0.0
    %1145 = vmatprep.subr.mxu0 0.0
    %1146 = vmatpush1.msra.mxu0 0.0
    %1147 = vmatprep.subr.mxu0 0.0
    %1148 = vmatpush1.msra.mxu0 0.0
    %1149 = vmatprep.mubr.f32.mxu0 0.0
    %1150 = vmatmul.mubr.f32.gmra.mrb[0].mxu0 %v1080
    %v1151 = vpop.f32.mrb[0].mxu0
    %v1152 = vadd.f32 %v1077, %v1151
    %v1153 = vpop.f32.mrb[0].mxu0
    %1154 = vmatprep.mubr.f32.mxu0 0.0
    %1155 = vmatmul.mubr.f32.gmra.mrb[0].mxu0 %v1083
    %v1156 = vpop.f32.mrb[0].mxu0
    %v1157 = vadd.f32 %v1077, %v1156
    %v1158 = vpop.f32.mrb[0].mxu0
    %1159 = vdwg.mxu0
    %1160 = vst [vmem:[#allocation3] sm:$0xff] %v1152
    %1161 = vst [vmem:[#allocation3 + $0x8] sm:$0xff] %v1157
    %v1162 = vld [vmem:[#allocation3] sm:$0x3]
    %1163 = vmatprep.subr.mxu0 0.0
    %1164 = vmatpush1.msra.mxu0 %v1060
    %1165 = vmatprep.subr.mxu0 0.0
    %1166 = vmatpush1.msra.mxu0 %v1061
    %1167 = vmatprep.subr.mxu0 0.0
    %1168 = vmatpush1.msra.mxu0 %v1062
    %1169 = vmatprep.subr.mxu0 0.0
    %1170 = vmatpush1.msra.mxu0 %v1063
    %1171 = vmatprep.subr.mxu0 0.0
    %1172 = vmatpush1.msra.mxu0 0.0
    %1173 = vmatprep.subr.mxu0 0.0
    %1174 = vmatpush1.msra.mxu0 0.0
    %1175 = vmatprep.subr.mxu0 0.0
    %1176 = vmatpush1.msra.mxu0 0.0
    %1177 = vmatprep.subr.mxu0 0.0
    %1178 = vmatpush1.msra.mxu0 0.0
    %1179 = vmatprep.subr.mxu0 0.0
    %1180 = vmatpush1.msra.mxu0 0.0
    %1181 = vmatprep.subr.mxu0 0.0
    %1182 = vmatpush1.msra.mxu0 0.0
    %1183 = vmatprep.subr.mxu0 0.0
    %1184 = vmatpush1.msra.mxu0 0.0
    %1185 = vmatprep.subr.mxu0 0.0
    %1186 = vmatpush1.msra.mxu0 0.0
    %1187 = vmatprep.subr.mxu0 0.0
    %1188 = vmatpush1.msra.mxu0 0.0
    %1189 = vmatprep.subr.mxu0 0.0
    %1190 = vmatpush1.msra.mxu0 0.0
    %1191 = vmatprep.subr.mxu0 0.0
    %1192 = vmatpush1.msra.mxu0 0.0
    %1193 = vmatprep.subr.mxu0 0.0
    %1194 = vmatpush1.msra.mxu0 0.0
    %1195 = vmatprep.subr.mxu0 0.0
    %1196 = vmatpush1.msra.mxu0 0.0
    %1197 = vmatprep.subr.mxu0 0.0
    %1198 = vmatpush1.msra.mxu0 0.0
    %1199 = vmatprep.subr.mxu0 0.0
    %1200 = vmatpush1.msra.mxu0 0.0
    %1201 = vmatprep.subr.mxu0 0.0
    %1202 = vmatpush1.msra.mxu0 0.0
    %1203 = vmatprep.subr.mxu0 0.0
    %1204 = vmatpush1.msra.mxu0 0.0
    %1205 = vmatprep.subr.mxu0 0.0
    %1206 = vmatpush1.msra.mxu0 0.0
    %1207 = vmatprep.subr.mxu0 0.0
    %1208 = vmatpush1.msra.mxu0 0.0
    %1209 = vmatprep.subr.mxu0 0.0
    %1210 = vmatpush1.msra.mxu0 0.0
    %1211 = vmatprep.subr.mxu0 0.0
    %1212 = vmatpush1.msra.mxu0 0.0
    %1213 = vmatprep.subr.mxu0 0.0
    %1214 = vmatpush1.msra.mxu0 0.0
    %1215 = vmatprep.subr.mxu0 0.0
    %1216 = vmatpush1.msra.mxu0 0.0
    %1217 = vmatprep.subr.mxu0 0.0
    %1218 = vmatpush1.msra.mxu0 0.0
    %1219 = vmatprep.subr.mxu0 0.0
    %1220 = vmatpush1.msra.mxu0 0.0
    %1221 = vmatprep.subr.mxu0 0.0
    %1222 = vmatpush1.msra.mxu0 0.0
    %1223 = vmatprep.subr.mxu0 0.0
    %1224 = vmatpush1.msra.mxu0 0.0
    %1225 = vmatprep.subr.mxu0 0.0
    %1226 = vmatpush1.msra.mxu0 0.0
    %1227 = vmatprep.mubr.f32.mxu0 0.0
    %1228 = vmatmul.mubr.f32.gmra.mrb[0].mxu0 %v166
    %v1229 = vpop.f32.mrb[0].mxu0
    %v1230 = vadd.f32 0.0, %v1229
    %v1231 = vpop.f32.mrb[0].mxu0
    %1232 = vdwg.mxu0
    %v1233 = vadd.f32 %v1162, %v1230
    %v1234 = vxor.u32 %v1233, 2147483648
    %v1235 = vmul.f32 %v1234, 1.442695
    %v1236 = vpow.pop %v1235
    %v1237 = vadd.f32 %v1236, 1.0
    %v1238 = vrcp.pop %v1237
    %v1239 = vmul.f32 1.0, %v1238
    %v1240 = vtanh.pop %v1233
    %v1241 = vmul.f32 %v1239, 0.0
    %1243 = vrot.lane.b32.xlu0 %v1240, 64
    %v1244 = vpop.permute.xlu0 %1243
    %v1246 = vmul.f32 %v1239, %v1244
    %1248 = vrot.lane.b32.xlu0 %v1246, 32
    %v1249 = vpop.permute.xlu0 %1248
    %v1251 = vadd.f32 %v1241, %v1249
    %v1252 = vtanh.pop %v1251
    %1254 = vrot.lane.b32.xlu0 %v1252, 64
    %v1255 = vpop.permute.xlu0 %1254
    %v1257 = vmul.f32 %v1239, %v1255
    %v1258 = vld [vmem:[#allocation2] sm:$0x3]
    %1260 = vrot.lane.b32.xlu0 %v1258, 96
    %v1261 = vpop.permute.xlu0 %1260
    %v1263 = vadd.f32 %v1257, %v1261
    %1265 = vrot.lane.b32.xlu0 %v1263, 32
    %v1266 = vpop.permute.xlu0 %1265
    %1268 = vst.msk [vmem:[#allocation2] sm:$0x3] %vm273, %v1266
    %v1269 = vld [vmem:[#allocation3 + $0x2] sm:$0x3]
    %1271 = vrot.lane.b32.xlu0 %v1257, 32
    %v1272 = vpop.permute.xlu0 %1271
    %v1273 = vsel %vm61, %v1272, 0
    %1275 = vmatprep.subr.mxu0 0.0
    %1276 = vmatpush1.msra.mxu0 %v1060
    %1277 = vmatprep.subr.mxu0 0.0
    %1278 = vmatpush1.msra.mxu0 %v1061
    %1279 = vmatprep.subr.mxu0 0.0
    %1280 = vmatpush1.msra.mxu0 %v1062
    %1281 = vmatprep.subr.mxu0 0.0
    %1282 = vmatpush1.msra.mxu0 %v1063
    %1283 = vmatprep.subr.mxu0 0.0
    %1284 = vmatpush1.msra.mxu0 0.0
    %1285 = vmatprep.subr.mxu0 0.0
    %1286 = vmatpush1.msra.mxu0 0.0
    %1287 = vmatprep.subr.mxu0 0.0
    %1288 = vmatpush1.msra.mxu0 0.0
    %1289 = vmatprep.subr.mxu0 0.0
    %1290 = vmatpush1.msra.mxu0 0.0
    %1291 = vmatprep.subr.mxu0 0.0
    %1292 = vmatpush1.msra.mxu0 0.0
    %1293 = vmatprep.subr.mxu0 0.0
    %1294 = vmatpush1.msra.mxu0 0.0
    %1295 = vmatprep.subr.mxu0 0.0
    %1296 = vmatpush1.msra.mxu0 0.0
    %1297 = vmatprep.subr.mxu0 0.0
    %1298 = vmatpush1.msra.mxu0 0.0
    %1299 = vmatprep.subr.mxu0 0.0
    %1300 = vmatpush1.msra.mxu0 0.0
    %1301 = vmatprep.subr.mxu0 0.0
    %1302 = vmatpush1.msra.mxu0 0.0
    %1303 = vmatprep.subr.mxu0 0.0
    %1304 = vmatpush1.msra.mxu0 0.0
    %1305 = vmatprep.subr.mxu0 0.0
    %1306 = vmatpush1.msra.mxu0 0.0
    %1307 = vmatprep.subr.mxu0 0.0
    %1308 = vmatpush1.msra.mxu0 0.0
    %1309 = vmatprep.subr.mxu0 0.0
    %1310 = vmatpush1.msra.mxu0 0.0
    %1311 = vmatprep.subr.mxu0 0.0
    %1312 = vmatpush1.msra.mxu0 0.0
    %1313 = vmatprep.subr.mxu0 0.0
    %1314 = vmatpush1.msra.mxu0 0.0
    %1315 = vmatprep.subr.mxu0 0.0
    %1316 = vmatpush1.msra.mxu0 0.0
    %1317 = vmatprep.subr.mxu0 0.0
    %1318 = vmatpush1.msra.mxu0 0.0
    %1319 = vmatprep.subr.mxu0 0.0
    %1320 = vmatpush1.msra.mxu0 0.0
    %1321 = vmatprep.subr.mxu0 0.0
    %1322 = vmatpush1.msra.mxu0 0.0
    %1323 = vmatprep.subr.mxu0 0.0
    %1324 = vmatpush1.msra.mxu0 0.0
    %1325 = vmatprep.subr.mxu0 0.0
    %1326 = vmatpush1.msra.mxu0 0.0
    %1327 = vmatprep.subr.mxu0 0.0
    %1328 = vmatpush1.msra.mxu0 0.0
    %1329 = vmatprep.subr.mxu0 0.0
    %1330 = vmatpush1.msra.mxu0 0.0
    %1331 = vmatprep.subr.mxu0 0.0
    %1332 = vmatpush1.msra.mxu0 0.0
    %1333 = vmatprep.subr.mxu0 0.0
    %1334 = vmatpush1.msra.mxu0 0.0
    %1335 = vmatprep.subr.mxu0 0.0
    %1336 = vmatpush1.msra.mxu0 0.0
    %1337 = vmatprep.subr.mxu0 0.0
    %1338 = vmatpush1.msra.mxu0 0.0
    %1339 = vmatprep.mubr.f32.mxu0 0.0
    %1340 = vmatmul.mubr.f32.gmra.mrb[0].mxu0 %v1273
    %v1341 = vpop.f32.mrb[0].mxu0
    %v1342 = vadd.f32 0.0, %v1341
    %v1343 = vpop.f32.mrb[0].mxu0
    %1344 = vdwg.mxu0
    %v1345 = vadd.f32 %v1269, %v1342
    %v1346 = vxor.u32 %v1345, 2147483648
    %v1347 = vmul.f32 %v1346, 1.442695
    %v1348 = vpow.pop %v1347
    %v1349 = vadd.f32 %v1348, 1.0
    %v1350 = vrcp.pop %v1349
    %v1351 = vmul.f32 1.0, %v1350
    %v1352 = vtanh.pop %v1345
    %v1353 = vmul.f32 %v1351, %v1251
    %1355 = vrot.lane.b32.xlu0 %v1352, 64
    %v1356 = vpop.permute.xlu0 %1355
    %v1358 = vmul.f32 %v1351, %v1356
    %1360 = vrot.lane.b32.xlu0 %v1358, 32
    %v1361 = vpop.permute.xlu0 %1360
    %v1363 = vadd.f32 %v1353, %v1361
    %v1364 = vtanh.pop %v1363
    %1366 = vrot.lane.b32.xlu0 %v1364, 64
    %v1367 = vpop.permute.xlu0 %1366
    %v1369 = vmul.f32 %v1351, %v1367
    %v1370 = vld [vmem:[#allocation2 + $0x2] sm:$0x3]
    %1372 = vrot.lane.b32.xlu0 %v1370, 96
    %v1373 = vpop.permute.xlu0 %1372
    %v1375 = vadd.f32 %v1369, %v1373
    %1377 = vrot.lane.b32.xlu0 %v1375, 32
    %v1378 = vpop.permute.xlu0 %1377
    %1380 = vst.msk [vmem:[#allocation2 + $0x2] sm:$0x3] %vm273, %v1378
    %v1381 = vld [vmem:[#allocation3 + $0x4] sm:$0x3]
    %1383 = vrot.lane.b32.xlu0 %v1369, 32
    %v1384 = vpop.permute.xlu0 %1383
    %v1385 = vsel %vm61, %v1384, 0
    %1387 = vmatprep.subr.mxu0 0.0
    %1388 = vmatpush1.msra.mxu0 %v1060
    %1389 = vmatprep.subr.mxu0 0.0
    %1390 = vmatpush1.msra.mxu0 %v1061
    %1391 = vmatprep.subr.mxu0 0.0
    %1392 = vmatpush1.msra.mxu0 %v1062
    %1393 = vmatprep.subr.mxu0 0.0
    %1394 = vmatpush1.msra.mxu0 %v1063
    %1395 = vmatprep.subr.mxu0 0.0
    %1396 = vmatpush1.msra.mxu0 0.0
    %1397 = vmatprep.subr.mxu0 0.0
    %1398 = vmatpush1.msra.mxu0 0.0
    %1399 = vmatprep.subr.mxu0 0.0
    %1400 = vmatpush1.msra.mxu0 0.0
    %1401 = vmatprep.subr.mxu0 0.0
    %1402 = vmatpush1.msra.mxu0 0.0
    %1403 = vmatprep.subr.mxu0 0.0
    %1404 = vmatpush1.msra.mxu0 0.0
    %1405 = vmatprep.subr.mxu0 0.0
    %1406 = vmatpush1.msra.mxu0 0.0
    %1407 = vmatprep.subr.mxu0 0.0
    %1408 = vmatpush1.msra.mxu0 0.0
    %1409 = vmatprep.subr.mxu0 0.0
    %1410 = vmatpush1.msra.mxu0 0.0
    %1411 = vmatprep.subr.mxu0 0.0
    %1412 = vmatpush1.msra.mxu0 0.0
    %1413 = vmatprep.subr.mxu0 0.0
    %1414 = vmatpush1.msra.mxu0 0.0
    %1415 = vmatprep.subr.mxu0 0.0
    %1416 = vmatpush1.msra.mxu0 0.0
    %1417 = vmatprep.subr.mxu0 0.0
    %1418 = vmatpush1.msra.mxu0 0.0
    %1419 = vmatprep.subr.mxu0 0.0
    %1420 = vmatpush1.msra.mxu0 0.0
    %1421 = vmatprep.subr.mxu0 0.0
    %1422 = vmatpush1.msra.mxu0 0.0
    %1423 = vmatprep.subr.mxu0 0.0
    %1424 = vmatpush1.msra.mxu0 0.0
    %1425 = vmatprep.subr.mxu0 0.0
    %1426 = vmatpush1.msra.mxu0 0.0
    %1427 = vmatprep.subr.mxu0 0.0
    %1428 = vmatpush1.msra.mxu0 0.0
    %1429 = vmatprep.subr.mxu0 0.0
    %1430 = vmatpush1.msra.mxu0 0.0
    %1431 = vmatprep.subr.mxu0 0.0
    %1432 = vmatpush1.msra.mxu0 0.0
    %1433 = vmatprep.subr.mxu0 0.0
    %1434 = vmatpush1.msra.mxu0 0.0
    %1435 = vmatprep.subr.mxu0 0.0
    %1436 = vmatpush1.msra.mxu0 0.0
    %1437 = vmatprep.subr.mxu0 0.0
    %1438 = vmatpush1.msra.mxu0 0.0
    %1439 = vmatprep.subr.mxu0 0.0
    %1440 = vmatpush1.msra.mxu0 0.0
    %1441 = vmatprep.subr.mxu0 0.0
    %1442 = vmatpush1.msra.mxu0 0.0
    %1443 = vmatprep.subr.mxu0 0.0
    %1444 = vmatpush1.msra.mxu0 0.0
    %1445 = vmatprep.subr.mxu0 0.0
    %1446 = vmatpush1.msra.mxu0 0.0
    %1447 = vmatprep.subr.mxu0 0.0
    %1448 = vmatpush1.msra.mxu0 0.0
    %1449 = vmatprep.subr.mxu0 0.0
    %1450 = vmatpush1.msra.mxu0 0.0
    %1451 = vmatprep.mubr.f32.mxu0 0.0
    %1452 = vmatmul.mubr.f32.gmra.mrb[0].mxu0 %v1385
    %v1453 = vpop.f32.mrb[0].mxu0
    %v1454 = vadd.f32 0.0, %v1453
    %v1455 = vpop.f32.mrb[0].mxu0
    %1456 = vdwg.mxu0
    %v1457 = vadd.f32 %v1381, %v1454
    %v1458 = vxor.u32 %v1457, 2147483648
    %v1459 = vmul.f32 %v1458, 1.442695
    %v1460 = vpow.pop %v1459
    %v1461 = vadd.f32 %v1460, 1.0
    %v1462 = vrcp.pop %v1461
    %v1463 = vmul.f32 1.0, %v1462
    %v1464 = vtanh.pop %v1457
    %v1465 = vmul.f32 %v1463, %v1363
    %1467 = vrot.lane.b32.xlu0 %v1464, 64
    %v1468 = vpop.permute.xlu0 %1467
    %v1470 = vmul.f32 %v1463, %v1468
    %1472 = vrot.lane.b32.xlu0 %v1470, 32
    %v1473 = vpop.permute.xlu0 %1472
    %v1475 = vadd.f32 %v1465, %v1473
    %v1476 = vtanh.pop %v1475
    %1478 = vrot.lane.b32.xlu0 %v1476, 64
    %v1479 = vpop.permute.xlu0 %1478
    %v1481 = vmul.f32 %v1463, %v1479
    %v1482 = vld [vmem:[#allocation2 + $0x4] sm:$0x3]
    %1484 = vrot.lane.b32.xlu0 %v1482, 96
    %v1485 = vpop.permute.xlu0 %1484
    %v1487 = vadd.f32 %v1481, %v1485
    %1489 = vrot.lane.b32.xlu0 %v1487, 32
    %v1490 = vpop.permute.xlu0 %1489
    %1492 = vst.msk [vmem:[#allocation2 + $0x4] sm:$0x3] %vm273, %v1490
    %v1493 = vld [vmem:[#allocation3 + $0x6] sm:$0x3]
    %1495 = vrot.lane.b32.xlu0 %v1481, 32
    %v1496 = vpop.permute.xlu0 %1495
    %v1497 = vsel %vm61, %v1496, 0
    %1499 = vmatprep.subr.mxu0 0.0
    %1500 = vmatpush1.msra.mxu0 %v1060
    %1501 = vmatprep.subr.mxu0 0.0
    %1502 = vmatpush1.msra.mxu0 %v1061
    %1503 = vmatprep.subr.mxu0 0.0
    %1504 = vmatpush1.msra.mxu0 %v1062
    %1505 = vmatprep.subr.mxu0 0.0
    %1506 = vmatpush1.msra.mxu0 %v1063
    %1507 = vmatprep.subr.mxu0 0.0
    %1508 = vmatpush1.msra.mxu0 0.0
    %1509 = vmatprep.subr.mxu0 0.0
    %1510 = vmatpush1.msra.mxu0 0.0
    %1511 = vmatprep.subr.mxu0 0.0
    %1512 = vmatpush1.msra.mxu0 0.0
    %1513 = vmatprep.subr.mxu0 0.0
    %1514 = vmatpush1.msra.mxu0 0.0
    %1515 = vmatprep.subr.mxu0 0.0
    %1516 = vmatpush1.msra.mxu0 0.0
    %1517 = vmatprep.subr.mxu0 0.0
    %1518 = vmatpush1.msra.mxu0 0.0
    %1519 = vmatprep.subr.mxu0 0.0
    %1520 = vmatpush1.msra.mxu0 0.0
    %1521 = vmatprep.subr.mxu0 0.0
    %1522 = vmatpush1.msra.mxu0 0.0
    %1523 = vmatprep.subr.mxu0 0.0
    %1524 = vmatpush1.msra.mxu0 0.0
    %1525 = vmatprep.subr.mxu0 0.0
    %1526 = vmatpush1.msra.mxu0 0.0
    %1527 = vmatprep.subr.mxu0 0.0
    %1528 = vmatpush1.msra.mxu0 0.0
    %1529 = vmatprep.subr.mxu0 0.0
    %1530 = vmatpush1.msra.mxu0 0.0
    %1531 = vmatprep.subr.mxu0 0.0
    %1532 = vmatpush1.msra.mxu0 0.0
    %1533 = vmatprep.subr.mxu0 0.0
    %1534 = vmatpush1.msra.mxu0 0.0
    %1535 = vmatprep.subr.mxu0 0.0
    %1536 = vmatpush1.msra.mxu0 0.0
    %1537 = vmatprep.subr.mxu0 0.0
    %1538 = vmatpush1.msra.mxu0 0.0
    %1539 = vmatprep.subr.mxu0 0.0
    %1540 = vmatpush1.msra.mxu0 0.0
    %1541 = vmatprep.subr.mxu0 0.0
    %1542 = vmatpush1.msra.mxu0 0.0
    %1543 = vmatprep.subr.mxu0 0.0
    %1544 = vmatpush1.msra.mxu0 0.0
    %1545 = vmatprep.subr.mxu0 0.0
    %1546 = vmatpush1.msra.mxu0 0.0
    %1547 = vmatprep.subr.mxu0 0.0
    %1548 = vmatpush1.msra.mxu0 0.0
    %1549 = vmatprep.subr.mxu0 0.0
    %1550 = vmatpush1.msra.mxu0 0.0
    %1551 = vmatprep.subr.mxu0 0.0
    %1552 = vmatpush1.msra.mxu0 0.0
    %1553 = vmatprep.subr.mxu0 0.0
    %1554 = vmatpush1.msra.mxu0 0.0
    %1555 = vmatprep.subr.mxu0 0.0
    %1556 = vmatpush1.msra.mxu0 0.0
    %1557 = vmatprep.subr.mxu0 0.0
    %1558 = vmatpush1.msra.mxu0 0.0
    %1559 = vmatprep.subr.mxu0 0.0
    %1560 = vmatpush1.msra.mxu0 0.0
    %1561 = vmatprep.subr.mxu0 0.0
    %1562 = vmatpush1.msra.mxu0 0.0
    %1563 = vmatprep.mubr.f32.mxu0 0.0
    %1564 = vmatmul.mubr.f32.gmra.mrb[0].mxu0 %v1497
    %v1565 = vpop.f32.mrb[0].mxu0
    %v1566 = vadd.f32 0.0, %v1565
    %v1567 = vpop.f32.mrb[0].mxu0
    %1568 = vdwg.mxu0
    %v1569 = vadd.f32 %v1493, %v1566
    %v1570 = vxor.u32 %v1569, 2147483648
    %v1571 = vmul.f32 %v1570, 1.442695
    %v1572 = vpow.pop %v1571
    %v1573 = vadd.f32 %v1572, 1.0
    %v1574 = vrcp.pop %v1573
    %v1575 = vmul.f32 1.0, %v1574
    %v1576 = vtanh.pop %v1569
    %v1577 = vmul.f32 %v1575, %v1475
    %1579 = vrot.lane.b32.xlu0 %v1576, 64
    %v1580 = vpop.permute.xlu0 %1579
    %v1582 = vmul.f32 %v1575, %v1580
    %1584 = vrot.lane.b32.xlu0 %v1582, 32
    %v1585 = vpop.permute.xlu0 %1584
    %v1587 = vadd.f32 %v1577, %v1585
    %v1588 = vtanh.pop %v1587
    %1590 = vrot.lane.b32.xlu0 %v1588, 64
    %v1591 = vpop.permute.xlu0 %1590
    %v1593 = vmul.f32 %v1575, %v1591
    %v1594 = vld [vmem:[#allocation2 + $0x6] sm:$0x3]
    %1596 = vrot.lane.b32.xlu0 %v1594, 96
    %v1597 = vpop.permute.xlu0 %1596
    %v1599 = vadd.f32 %v1593, %v1597
    %1601 = vrot.lane.b32.xlu0 %v1599, 32
    %v1602 = vpop.permute.xlu0 %1601
    %1604 = vst.msk [vmem:[#allocation2 + $0x6] sm:$0x3] %vm273, %v1602
    %v1605 = vld [vmem:[#allocation3 + $0x8] sm:$0x3]
    %1607 = vrot.lane.b32.xlu0 %v1593, 32
    %v1608 = vpop.permute.xlu0 %1607
    %v1609 = vsel %vm61, %v1608, 0
    %1611 = vmatprep.subr.mxu0 0.0
    %1612 = vmatpush1.msra.mxu0 %v1060
    %1613 = vmatprep.subr.mxu0 0.0
    %1614 = vmatpush1.msra.mxu0 %v1061
    %1615 = vmatprep.subr.mxu0 0.0
    %1616 = vmatpush1.msra.mxu0 %v1062
    %1617 = vmatprep.subr.mxu0 0.0
    %1618 = vmatpush1.msra.mxu0 %v1063
    %1619 = vmatprep.subr.mxu0 0.0
    %1620 = vmatpush1.msra.mxu0 0.0
    %1621 = vmatprep.subr.mxu0 0.0
    %1622 = vmatpush1.msra.mxu0 0.0
    %1623 = vmatprep.subr.mxu0 0.0
    %1624 = vmatpush1.msra.mxu0 0.0
    %1625 = vmatprep.subr.mxu0 0.0
    %1626 = vmatpush1.msra.mxu0 0.0
    %1627 = vmatprep.subr.mxu0 0.0
    %1628 = vmatpush1.msra.mxu0 0.0
    %1629 = vmatprep.subr.mxu0 0.0
    %1630 = vmatpush1.msra.mxu0 0.0
    %1631 = vmatprep.subr.mxu0 0.0
    %1632 = vmatpush1.msra.mxu0 0.0
    %1633 = vmatprep.subr.mxu0 0.0
    %1634 = vmatpush1.msra.mxu0 0.0
    %1635 = vmatprep.subr.mxu0 0.0
    %1636 = vmatpush1.msra.mxu0 0.0
    %1637 = vmatprep.subr.mxu0 0.0
    %1638 = vmatpush1.msra.mxu0 0.0
    %1639 = vmatprep.subr.mxu0 0.0
    %1640 = vmatpush1.msra.mxu0 0.0
    %1641 = vmatprep.subr.mxu0 0.0
    %1642 = vmatpush1.msra.mxu0 0.0
    %1643 = vmatprep.subr.mxu0 0.0
    %1644 = vmatpush1.msra.mxu0 0.0
    %1645 = vmatprep.subr.mxu0 0.0
    %1646 = vmatpush1.msra.mxu0 0.0
    %1647 = vmatprep.subr.mxu0 0.0
    %1648 = vmatpush1.msra.mxu0 0.0
    %1649 = vmatprep.subr.mxu0 0.0
    %1650 = vmatpush1.msra.mxu0 0.0
    %1651 = vmatprep.subr.mxu0 0.0
    %1652 = vmatpush1.msra.mxu0 0.0
    %1653 = vmatprep.subr.mxu0 0.0
    %1654 = vmatpush1.msra.mxu0 0.0
    %1655 = vmatprep.subr.mxu0 0.0
    %1656 = vmatpush1.msra.mxu0 0.0
    %1657 = vmatprep.subr.mxu0 0.0
    %1658 = vmatpush1.msra.mxu0 0.0
    %1659 = vmatprep.subr.mxu0 0.0
    %1660 = vmatpush1.msra.mxu0 0.0
    %1661 = vmatprep.subr.mxu0 0.0
    %1662 = vmatpush1.msra.mxu0 0.0
    %1663 = vmatprep.subr.mxu0 0.0
    %1664 = vmatpush1.msra.mxu0 0.0
    %1665 = vmatprep.subr.mxu0 0.0
    %1666 = vmatpush1.msra.mxu0 0.0
    %1667 = vmatprep.subr.mxu0 0.0
    %1668 = vmatpush1.msra.mxu0 0.0
    %1669 = vmatprep.subr.mxu0 0.0
    %1670 = vmatpush1.msra.mxu0 0.0
    %1671 = vmatprep.subr.mxu0 0.0
    %1672 = vmatpush1.msra.mxu0 0.0
    %1673 = vmatprep.subr.mxu0 0.0
    %1674 = vmatpush1.msra.mxu0 0.0
    %1675 = vmatprep.mubr.f32.mxu0 0.0
    %1676 = vmatmul.mubr.f32.gmra.mrb[0].mxu0 %v1609
    %v1677 = vpop.f32.mrb[0].mxu0
    %v1678 = vadd.f32 0.0, %v1677
    %v1679 = vpop.f32.mrb[0].mxu0
    %1680 = vdwg.mxu0
    %v1681 = vadd.f32 %v1605, %v1678
    %v1682 = vxor.u32 %v1681, 2147483648
    %v1683 = vmul.f32 %v1682, 1.442695
    %v1684 = vpow.pop %v1683
    %v1685 = vadd.f32 %v1684, 1.0
    %v1686 = vrcp.pop %v1685
    %v1687 = vmul.f32 1.0, %v1686
    %v1688 = vtanh.pop %v1681
    %v1689 = vmul.f32 %v1687, %v1587
    %1691 = vrot.lane.b32.xlu0 %v1688, 64
    %v1692 = vpop.permute.xlu0 %1691
    %v1694 = vmul.f32 %v1687, %v1692
    %1696 = vrot.lane.b32.xlu0 %v1694, 32
    %v1697 = vpop.permute.xlu0 %1696
    %v1699 = vadd.f32 %v1689, %v1697
    %v1700 = vtanh.pop %v1699
    %1702 = vrot.lane.b32.xlu0 %v1700, 64
    %v1703 = vpop.permute.xlu0 %1702
    %v1705 = vmul.f32 %v1687, %v1703
    %v1706 = vld [vmem:[#allocation2 + $0x8] sm:$0x3]
    %1708 = vrot.lane.b32.xlu0 %v1706, 96
    %v1709 = vpop.permute.xlu0 %1708
    %v1711 = vadd.f32 %v1705, %v1709
    %1713 = vrot.lane.b32.xlu0 %v1711, 32
    %v1714 = vpop.permute.xlu0 %1713
    %1716 = vst.msk [vmem:[#allocation2 + $0x8] sm:$0x3] %vm273, %v1714
    %v1717 = vld [vmem:[#allocation3 + $0xa] sm:$0x3]
    %1719 = vrot.lane.b32.xlu0 %v1705, 32
    %v1720 = vpop.permute.xlu0 %1719
    %v1721 = vsel %vm61, %v1720, 0
    %1723 = vmatprep.subr.mxu0 0.0
    %1724 = vmatpush1.msra.mxu0 %v1060
    %1725 = vmatprep.subr.mxu0 0.0
    %1726 = vmatpush1.msra.mxu0 %v1061
    %1727 = vmatprep.subr.mxu0 0.0
    %1728 = vmatpush1.msra.mxu0 %v1062
    %1729 = vmatprep.subr.mxu0 0.0
    %1730 = vmatpush1.msra.mxu0 %v1063
    %1731 = vmatprep.subr.mxu0 0.0
    %1732 = vmatpush1.msra.mxu0 0.0
    %1733 = vmatprep.subr.mxu0 0.0
    %1734 = vmatpush1.msra.mxu0 0.0
    %1735 = vmatprep.subr.mxu0 0.0
    %1736 = vmatpush1.msra.mxu0 0.0
    %1737 = vmatprep.subr.mxu0 0.0
    %1738 = vmatpush1.msra.mxu0 0.0
    %1739 = vmatprep.subr.mxu0 0.0
    %1740 = vmatpush1.msra.mxu0 0.0
    %1741 = vmatprep.subr.mxu0 0.0
    %1742 = vmatpush1.msra.mxu0 0.0
    %1743 = vmatprep.subr.mxu0 0.0
    %1744 = vmatpush1.msra.mxu0 0.0
    %1745 = vmatprep.subr.mxu0 0.0
    %1746 = vmatpush1.msra.mxu0 0.0
    %1747 = vmatprep.subr.mxu0 0.0
    %1748 = vmatpush1.msra.mxu0 0.0
    %1749 = vmatprep.subr.mxu0 0.0
    %1750 = vmatpush1.msra.mxu0 0.0
    %1751 = vmatprep.subr.mxu0 0.0
    %1752 = vmatpush1.msra.mxu0 0.0
    %1753 = vmatprep.subr.mxu0 0.0
    %1754 = vmatpush1.msra.mxu0 0.0
    %1755 = vmatprep.subr.mxu0 0.0
    %1756 = vmatpush1.msra.mxu0 0.0
    %1757 = vmatprep.subr.mxu0 0.0
    %1758 = vmatpush1.msra.mxu0 0.0
    %1759 = vmatprep.subr.mxu0 0.0
    %1760 = vmatpush1.msra.mxu0 0.0
    %1761 = vmatprep.subr.mxu0 0.0
    %1762 = vmatpush1.msra.mxu0 0.0
    %1763 = vmatprep.subr.mxu0 0.0
    %1764 = vmatpush1.msra.mxu0 0.0
    %1765 = vmatprep.subr.mxu0 0.0
    %1766 = vmatpush1.msra.mxu0 0.0
    %1767 = vmatprep.subr.mxu0 0.0
    %1768 = vmatpush1.msra.mxu0 0.0
    %1769 = vmatprep.subr.mxu0 0.0
    %1770 = vmatpush1.msra.mxu0 0.0
    %1771 = vmatprep.subr.mxu0 0.0
    %1772 = vmatpush1.msra.mxu0 0.0
    %1773 = vmatprep.subr.mxu0 0.0
    %1774 = vmatpush1.msra.mxu0 0.0
    %1775 = vmatprep.subr.mxu0 0.0
    %1776 = vmatpush1.msra.mxu0 0.0
    %1777 = vmatprep.subr.mxu0 0.0
    %1778 = vmatpush1.msra.mxu0 0.0
    %1779 = vmatprep.subr.mxu0 0.0
    %1780 = vmatpush1.msra.mxu0 0.0
    %1781 = vmatprep.subr.mxu0 0.0
    %1782 = vmatpush1.msra.mxu0 0.0
    %1783 = vmatprep.subr.mxu0 0.0
    %1784 = vmatpush1.msra.mxu0 0.0
    %1785 = vmatprep.subr.mxu0 0.0
    %1786 = vmatpush1.msra.mxu0 0.0
    %1787 = vmatprep.mubr.f32.mxu0 0.0
    %1788 = vmatmul.mubr.f32.gmra.mrb[0].mxu0 %v1721
    %v1789 = vpop.f32.mrb[0].mxu0
    %v1790 = vadd.f32 0.0, %v1789
    %v1791 = vpop.f32.mrb[0].mxu0
    %1792 = vdwg.mxu0
    %v1793 = vadd.f32 %v1717, %v1790
    %v1794 = vxor.u32 %v1793, 2147483648
    %v1795 = vmul.f32 %v1794, 1.442695
    %v1796 = vpow.pop %v1795
    %v1797 = vadd.f32 %v1796, 1.0
    %v1798 = vrcp.pop %v1797
    %v1799 = vmul.f32 1.0, %v1798
    %v1800 = vtanh.pop %v1793
    %v1801 = vmul.f32 %v1799, %v1699
    %1803 = vrot.lane.b32.xlu0 %v1800, 64
    %v1804 = vpop.permute.xlu0 %1803
    %v1806 = vmul.f32 %v1799, %v1804
    %1808 = vrot.lane.b32.xlu0 %v1806, 32
    %v1809 = vpop.permute.xlu0 %1808
    %v1811 = vadd.f32 %v1801, %v1809
    %v1812 = vtanh.pop %v1811
    %1814 = vrot.lane.b32.xlu0 %v1812, 64
    %v1815 = vpop.permute.xlu0 %1814
    %v1817 = vmul.f32 %v1799, %v1815
    %v1818 = vld [vmem:[#allocation2 + $0xa] sm:$0x3]
    %1820 = vrot.lane.b32.xlu0 %v1818, 96
    %v1821 = vpop.permute.xlu0 %1820
    %v1823 = vadd.f32 %v1817, %v1821
    %1825 = vrot.lane.b32.xlu0 %v1823, 32
    %v1826 = vpop.permute.xlu0 %1825
    %1828 = vst.msk [vmem:[#allocation2 + $0xa] sm:$0x3] %vm273, %v1826
    %v1829 = vld [vmem:[#allocation3 + $0xc] sm:$0x3]
    %1831 = vrot.lane.b32.xlu0 %v1817, 32
    %v1832 = vpop.permute.xlu0 %1831
    %v1833 = vsel %vm61, %v1832, 0
    %1835 = vmatprep.subr.mxu0 0.0
    %1836 = vmatpush1.msra.mxu0 %v1060
    %1837 = vmatprep.subr.mxu0 0.0
    %1838 = vmatpush1.msra.mxu0 %v1061
    %1839 = vmatprep.subr.mxu0 0.0
    %1840 = vmatpush1.msra.mxu0 %v1062
    %1841 = vmatprep.subr.mxu0 0.0
    %1842 = vmatpush1.msra.mxu0 %v1063
    %1843 = vmatprep.subr.mxu0 0.0
    %1844 = vmatpush1.msra.mxu0 0.0
    %1845 = vmatprep.subr.mxu0 0.0
    %1846 = vmatpush1.msra.mxu0 0.0
    %1847 = vmatprep.subr.mxu0 0.0
    %1848 = vmatpush1.msra.mxu0 0.0
    %1849 = vmatprep.subr.mxu0 0.0
    %1850 = vmatpush1.msra.mxu0 0.0
    %1851 = vmatprep.subr.mxu0 0.0
    %1852 = vmatpush1.msra.mxu0 0.0
    %1853 = vmatprep.subr.mxu0 0.0
    %1854 = vmatpush1.msra.mxu0 0.0
    %1855 = vmatprep.subr.mxu0 0.0
    %1856 = vmatpush1.msra.mxu0 0.0
    %1857 = vmatprep.subr.mxu0 0.0
    %1858 = vmatpush1.msra.mxu0 0.0
    %1859 = vmatprep.subr.mxu0 0.0
    %1860 = vmatpush1.msra.mxu0 0.0
    %1861 = vmatprep.subr.mxu0 0.0
    %1862 = vmatpush1.msra.mxu0 0.0
    %1863 = vmatprep.subr.mxu0 0.0
    %1864 = vmatpush1.msra.mxu0 0.0
    %1865 = vmatprep.subr.mxu0 0.0
    %1866 = vmatpush1.msra.mxu0 0.0
    %1867 = vmatprep.subr.mxu0 0.0
    %1868 = vmatpush1.msra.mxu0 0.0
    %1869 = vmatprep.subr.mxu0 0.0
    %1870 = vmatpush1.msra.mxu0 0.0
    %1871 = vmatprep.subr.mxu0 0.0
    %1872 = vmatpush1.msra.mxu0 0.0
    %1873 = vmatprep.subr.mxu0 0.0
    %1874 = vmatpush1.msra.mxu0 0.0
    %1875 = vmatprep.subr.mxu0 0.0
    %1876 = vmatpush1.msra.mxu0 0.0
    %1877 = vmatprep.subr.mxu0 0.0
    %1878 = vmatpush1.msra.mxu0 0.0
    %1879 = vmatprep.subr.mxu0 0.0
    %1880 = vmatpush1.msra.mxu0 0.0
    %1881 = vmatprep.subr.mxu0 0.0
    %1882 = vmatpush1.msra.mxu0 0.0
    %1883 = vmatprep.subr.mxu0 0.0
    %1884 = vmatpush1.msra.mxu0 0.0
    %1885 = vmatprep.subr.mxu0 0.0
    %1886 = vmatpush1.msra.mxu0 0.0
    %1887 = vmatprep.subr.mxu0 0.0
    %1888 = vmatpush1.msra.mxu0 0.0
    %1889 = vmatprep.subr.mxu0 0.0
    %1890 = vmatpush1.msra.mxu0 0.0
    %1891 = vmatprep.subr.mxu0 0.0
    %1892 = vmatpush1.msra.mxu0 0.0
    %1893 = vmatprep.subr.mxu0 0.0
    %1894 = vmatpush1.msra.mxu0 0.0
    %1895 = vmatprep.subr.mxu0 0.0
    %1896 = vmatpush1.msra.mxu0 0.0
    %1897 = vmatprep.subr.mxu0 0.0
    %1898 = vmatpush1.msra.mxu0 0.0
    %1899 = vmatprep.mubr.f32.mxu0 0.0
    %1900 = vmatmul.mubr.f32.gmra.mrb[0].mxu0 %v1833
    %v1901 = vpop.f32.mrb[0].mxu0
    %v1902 = vadd.f32 0.0, %v1901
    %v1903 = vpop.f32.mrb[0].mxu0
    %1904 = vdwg.mxu0
    %v1905 = vadd.f32 %v1829, %v1902
    %v1906 = vxor.u32 %v1905, 2147483648
    %v1907 = vmul.f32 %v1906, 1.442695
    %v1908 = vpow.pop %v1907
    %v1909 = vadd.f32 %v1908, 1.0
    %v1910 = vrcp.pop %v1909
    %v1911 = vmul.f32 1.0, %v1910
    %v1912 = vtanh.pop %v1905
    %v1913 = vmul.f32 %v1911, %v1811
    %1915 = vrot.lane.b32.xlu0 %v1912, 64
    %v1916 = vpop.permute.xlu0 %1915
    %v1918 = vmul.f32 %v1911, %v1916
    %1920 = vrot.lane.b32.xlu0 %v1918, 32
    %v1921 = vpop.permute.xlu0 %1920
    %v1923 = vadd.f32 %v1913, %v1921
    %v1924 = vtanh.pop %v1923
    %1926 = vrot.lane.b32.xlu0 %v1924, 64
    %v1927 = vpop.permute.xlu0 %1926
    %v1929 = vmul.f32 %v1911, %v1927
    %v1930 = vld [vmem:[#allocation2 + $0xc] sm:$0x3]
    %1932 = vrot.lane.b32.xlu0 %v1930, 96
    %v1933 = vpop.permute.xlu0 %1932
    %v1935 = vadd.f32 %v1929, %v1933
    %1937 = vrot.lane.b32.xlu0 %v1935, 32
    %v1938 = vpop.permute.xlu0 %1937
    %1940 = vst.msk [vmem:[#allocation2 + $0xc] sm:$0x3] %vm273, %v1938
    %v1941 = vld [vmem:[#allocation3 + $0xe] sm:$0x3]
    %1943 = vrot.lane.b32.xlu0 %v1929, 32
    %v1944 = vpop.permute.xlu0 %1943
    %v1945 = vsel %vm61, %v1944, 0
    %1947 = vmatprep.subr.mxu0 0.0
    %1948 = vmatpush1.msra.mxu0 %v1060
    %1949 = vmatprep.subr.mxu0 0.0
    %1950 = vmatpush1.msra.mxu0 %v1061
    %1951 = vmatprep.subr.mxu0 0.0
    %1952 = vmatpush1.msra.mxu0 %v1062
    %1953 = vmatprep.subr.mxu0 0.0
    %1954 = vmatpush1.msra.mxu0 %v1063
    %1955 = vmatprep.subr.mxu0 0.0
    %1956 = vmatpush1.msra.mxu0 0.0
    %1957 = vmatprep.subr.mxu0 0.0
    %1958 = vmatpush1.msra.mxu0 0.0
    %1959 = vmatprep.subr.mxu0 0.0
    %1960 = vmatpush1.msra.mxu0 0.0
    %1961 = vmatprep.subr.mxu0 0.0
    %1962 = vmatpush1.msra.mxu0 0.0
    %1963 = vmatprep.subr.mxu0 0.0
    %1964 = vmatpush1.msra.mxu0 0.0
    %1965 = vmatprep.subr.mxu0 0.0
    %1966 = vmatpush1.msra.mxu0 0.0
    %1967 = vmatprep.subr.mxu0 0.0
    %1968 = vmatpush1.msra.mxu0 0.0
    %1969 = vmatprep.subr.mxu0 0.0
    %1970 = vmatpush1.msra.mxu0 0.0
    %1971 = vmatprep.subr.mxu0 0.0
    %1972 = vmatpush1.msra.mxu0 0.0
    %1973 = vmatprep.subr.mxu0 0.0
    %1974 = vmatpush1.msra.mxu0 0.0
    %1975 = vmatprep.subr.mxu0 0.0
    %1976 = vmatpush1.msra.mxu0 0.0
    %1977 = vmatprep.subr.mxu0 0.0
    %1978 = vmatpush1.msra.mxu0 0.0
    %1979 = vmatprep.subr.mxu0 0.0
    %1980 = vmatpush1.msra.mxu0 0.0
    %1981 = vmatprep.subr.mxu0 0.0
    %1982 = vmatpush1.msra.mxu0 0.0
    %1983 = vmatprep.subr.mxu0 0.0
    %1984 = vmatpush1.msra.mxu0 0.0
    %1985 = vmatprep.subr.mxu0 0.0
    %1986 = vmatpush1.msra.mxu0 0.0
    %1987 = vmatprep.subr.mxu0 0.0
    %1988 = vmatpush1.msra.mxu0 0.0
    %1989 = vmatprep.subr.mxu0 0.0
    %1990 = vmatpush1.msra.mxu0 0.0
    %1991 = vmatprep.subr.mxu0 0.0
    %1992 = vmatpush1.msra.mxu0 0.0
    %1993 = vmatprep.subr.mxu0 0.0
    %1994 = vmatpush1.msra.mxu0 0.0
    %1995 = vmatprep.subr.mxu0 0.0
    %1996 = vmatpush1.msra.mxu0 0.0
    %1997 = vmatprep.subr.mxu0 0.0
    %1998 = vmatpush1.msra.mxu0 0.0
    %1999 = vmatprep.subr.mxu0 0.0
    %2000 = vmatpush1.msra.mxu0 0.0
    %2001 = vmatprep.subr.mxu0 0.0
    %2002 = vmatpush1.msra.mxu0 0.0
    %2003 = vmatprep.subr.mxu0 0.0
    %2004 = vmatpush1.msra.mxu0 0.0
    %2005 = vmatprep.subr.mxu0 0.0
    %2006 = vmatpush1.msra.mxu0 0.0
    %2007 = vmatprep.subr.mxu0 0.0
    %2008 = vmatpush1.msra.mxu0 0.0
    %2009 = vmatprep.subr.mxu0 0.0
    %2010 = vmatpush1.msra.mxu0 0.0
    %2011 = vmatprep.mubr.f32.mxu0 0.0
    %2012 = vmatmul.mubr.f32.gmra.mrb[0].mxu0 %v1945
    %v2013 = vpop.f32.mrb[0].mxu0
    %v2014 = vadd.f32 0.0, %v2013
    %v2015 = vpop.f32.mrb[0].mxu0
    %2016 = vdwg.mxu0
    %v2017 = vadd.f32 %v1941, %v2014
    %v2018 = vxor.u32 %v2017, 2147483648
    %v2019 = vmul.f32 %v2018, 1.442695
    %v2020 = vpow.pop %v2019
    %v2021 = vadd.f32 %v2020, 1.0
    %v2022 = vrcp.pop %v2021
    %v2023 = vmul.f32 1.0, %v2022
    %v2024 = vtanh.pop %v2017
    %v2025 = vmul.f32 %v2023, %v1923
    %2027 = vrot.lane.b32.xlu0 %v2024, 64
    %v2028 = vpop.permute.xlu0 %2027
    %v2030 = vmul.f32 %v2023, %v2028
    %2032 = vrot.lane.b32.xlu0 %v2030, 32
    %v2033 = vpop.permute.xlu0 %2032
    %v2035 = vadd.f32 %v2025, %v2033
    %v2036 = vtanh.pop %v2035
    %2038 = vrot.lane.b32.xlu0 %v2036, 64
    %v2039 = vpop.permute.xlu0 %2038
    %v2041 = vmul.f32 %v2023, %v2039
    %v2042 = vld [vmem:[#allocation2 + $0xe] sm:$0x3]
    %2044 = vrot.lane.b32.xlu0 %v2042, 96
    %v2045 = vpop.permute.xlu0 %2044
    %v2047 = vadd.f32 %v2041, %v2045
    %2049 = vrot.lane.b32.xlu0 %v2047, 32
    %v2050 = vpop.permute.xlu0 %2049
    %2052 = vst.msk [vmem:[#allocation2 + $0xe] sm:$0x3] %vm273, %v2050
    %s2053 = scalar_lea.vmem [#allocation9], 64
    %v2054 = vld [vmem:[%s2053] sm:$0xff]
    %v2055 = vld [vmem:[%s2053 + $0x8] sm:$0xff]
    %v2056 = vld [vmem:[%s2053 + $0x10] sm:$0xff]
    %v2057 = vld [vmem:[%s2053 + $0x18] sm:$0xff]
    %v2058 = vld [vmem:[#allocation2] sm:$0xff]
    %v2059 = vld [vmem:[#allocation2 + $0x8] sm:$0xff]
    %s2060 = scalar_lea.vmem [#allocation7], 64
    %v2061 = vld [vmem:[%s2060] sm:$0xff]
    %v2062 = vld [vmem:[%s2060 + $0x8] sm:$0xff]
    %v2063 = vld [vmem:[%s2060 + $0x10] sm:$0xff]
    %v2064 = vld [vmem:[%s2060 + $0x18] sm:$0xff]
    %s2065 = scalar_lea.vmem %s3, 2
    %v2066 = vld [vmem:[%s2065] sm:$0x1]
    %v2068 = vlaneseq
    %v2069 = vshrl.u32 %v2068, 7
    %v2070 = vsub.s32 0, %v2069
    %v2071 = vrot.slane %v2066, %v2070
    %v2074 = vsel %vm61, %v2058, 0
    %v2077 = vsel %vm61, %v2059, 0
    %2079 = vmatprep.subr.mxu0 0.0
    %2080 = vmatpush1.msra.mxu0 %v2061
    %2081 = vmatprep.subr.mxu0 0.0
    %2082 = vmatpush1.msra.mxu0 %v2062
    %2083 = vmatprep.subr.mxu0 0.0
    %2084 = vmatpush1.msra.mxu0 %v2063
    %2085 = vmatprep.subr.mxu0 0.0
    %2086 = vmatpush1.msra.mxu0 %v2064
    %2087 = vmatprep.subr.mxu0 0.0
    %2088 = vmatpush1.msra.mxu0 0.0
    %2089 = vmatprep.subr.mxu0 0.0
    %2090 = vmatpush1.msra.mxu0 0.0
    %2091 = vmatprep.subr.mxu0 0.0
    %2092 = vmatpush1.msra.mxu0 0.0
    %2093 = vmatprep.subr.mxu0 0.0
    %2094 = vmatpush1.msra.mxu0 0.0
    %2095 = vmatprep.subr.mxu0 0.0
    %2096 = vmatpush1.msra.mxu0 0.0
    %2097 = vmatprep.subr.mxu0 0.0
    %2098 = vmatpush1.msra.mxu0 0.0
    %2099 = vmatprep.subr.mxu0 0.0
    %2100 = vmatpush1.msra.mxu0 0.0
    %2101 = vmatprep.subr.mxu0 0.0
    %2102 = vmatpush1.msra.mxu0 0.0
    %2103 = vmatprep.subr.mxu0 0.0
    %2104 = vmatpush1.msra.mxu0 0.0
    %2105 = vmatprep.subr.mxu0 0.0
    %2106 = vmatpush1.msra.mxu0 0.0
    %2107 = vmatprep.subr.mxu0 0.0
    %2108 = vmatpush1.msra.mxu0 0.0
    %2109 = vmatprep.subr.mxu0 0.0
    %2110 = vmatpush1.msra.mxu0 0.0
    %2111 = vmatprep.subr.mxu0 0.0
    %2112 = vmatpush1.msra.mxu0 0.0
    %2113 = vmatprep.subr.mxu0 0.0
    %2114 = vmatpush1.msra.mxu0 0.0
    %2115 = vmatprep.subr.mxu0 0.0
    %2116 = vmatpush1.msra.mxu0 0.0
    %2117 = vmatprep.subr.mxu0 0.0
    %2118 = vmatpush1.msra.mxu0 0.0
    %2119 = vmatprep.subr.mxu0 0.0
    %2120 = vmatpush1.msra.mxu0 0.0
    %2121 = vmatprep.subr.mxu0 0.0
    %2122 = vmatpush1.msra.mxu0 0.0
    %2123 = vmatprep.subr.mxu0 0.0
    %2124 = vmatpush1.msra.mxu0 0.0
    %2125 = vmatprep.subr.mxu0 0.0
    %2126 = vmatpush1.msra.mxu0 0.0
    %2127 = vmatprep.subr.mxu0 0.0
    %2128 = vmatpush1.msra.mxu0 0.0
    %2129 = vmatprep.subr.mxu0 0.0
    %2130 = vmatpush1.msra.mxu0 0.0
    %2131 = vmatprep.subr.mxu0 0.0
    %2132 = vmatpush1.msra.mxu0 0.0
    %2133 = vmatprep.subr.mxu0 0.0
    %2134 = vmatpush1.msra.mxu0 0.0
    %2135 = vmatprep.subr.mxu0 0.0
    %2136 = vmatpush1.msra.mxu0 0.0
    %2137 = vmatprep.subr.mxu0 0.0
    %2138 = vmatpush1.msra.mxu0 0.0
    %2139 = vmatprep.subr.mxu0 0.0
    %2140 = vmatpush1.msra.mxu0 0.0
    %2141 = vmatprep.subr.mxu0 0.0
    %2142 = vmatpush1.msra.mxu0 0.0
    %2143 = vmatprep.mubr.f32.mxu0 0.0
    %2144 = vmatmul.mubr.f32.gmra.mrb[0].mxu0 %v2074
    %v2145 = vpop.f32.mrb[0].mxu0
    %v2146 = vadd.f32 %v2071, %v2145
    %v2147 = vpop.f32.mrb[0].mxu0
    %2148 = vmatprep.mubr.f32.mxu0 0.0
    %2149 = vmatmul.mubr.f32.gmra.mrb[0].mxu0 %v2077
    %v2150 = vpop.f32.mrb[0].mxu0
    %v2151 = vadd.f32 %v2071, %v2150
    %v2152 = vpop.f32.mrb[0].mxu0
    %2153 = vdwg.mxu0
    %2154 = vst [vmem:[#allocation3] sm:$0xff] %v2146
    %2155 = vst [vmem:[#allocation3 + $0x8] sm:$0xff] %v2151
    %v2156 = vld [vmem:[#allocation3] sm:$0x3]
    %2157 = vmatprep.subr.mxu0 0.0
    %2158 = vmatpush1.msra.mxu0 %v2054
    %2159 = vmatprep.subr.mxu0 0.0
    %2160 = vmatpush1.msra.mxu0 %v2055
    %2161 = vmatprep.subr.mxu0 0.0
    %2162 = vmatpush1.msra.mxu0 %v2056
    %2163 = vmatprep.subr.mxu0 0.0
    %2164 = vmatpush1.msra.mxu0 %v2057
    %2165 = vmatprep.subr.mxu0 0.0
    %2166 = vmatpush1.msra.mxu0 0.0
    %2167 = vmatprep.subr.mxu0 0.0
    %2168 = vmatpush1.msra.mxu0 0.0
    %2169 = vmatprep.subr.mxu0 0.0
    %2170 = vmatpush1.msra.mxu0 0.0
    %2171 = vmatprep.subr.mxu0 0.0
    %2172 = vmatpush1.msra.mxu0 0.0
    %2173 = vmatprep.subr.mxu0 0.0
    %2174 = vmatpush1.msra.mxu0 0.0
    %2175 = vmatprep.subr.mxu0 0.0
    %2176 = vmatpush1.msra.mxu0 0.0
    %2177 = vmatprep.subr.mxu0 0.0
    %2178 = vmatpush1.msra.mxu0 0.0
    %2179 = vmatprep.subr.mxu0 0.0
    %2180 = vmatpush1.msra.mxu0 0.0
    %2181 = vmatprep.subr.mxu0 0.0
    %2182 = vmatpush1.msra.mxu0 0.0
    %2183 = vmatprep.subr.mxu0 0.0
    %2184 = vmatpush1.msra.mxu0 0.0
    %2185 = vmatprep.subr.mxu0 0.0
    %2186 = vmatpush1.msra.mxu0 0.0
    %2187 = vmatprep.subr.mxu0 0.0
    %2188 = vmatpush1.msra.mxu0 0.0
    %2189 = vmatprep.subr.mxu0 0.0
    %2190 = vmatpush1.msra.mxu0 0.0
    %2191 = vmatprep.subr.mxu0 0.0
    %2192 = vmatpush1.msra.mxu0 0.0
    %2193 = vmatprep.subr.mxu0 0.0
    %2194 = vmatpush1.msra.mxu0 0.0
    %2195 = vmatprep.subr.mxu0 0.0
    %2196 = vmatpush1.msra.mxu0 0.0
    %2197 = vmatprep.subr.mxu0 0.0
    %2198 = vmatpush1.msra.mxu0 0.0
    %2199 = vmatprep.subr.mxu0 0.0
    %2200 = vmatpush1.msra.mxu0 0.0
    %2201 = vmatprep.subr.mxu0 0.0
    %2202 = vmatpush1.msra.mxu0 0.0
    %2203 = vmatprep.subr.mxu0 0.0
    %2204 = vmatpush1.msra.mxu0 0.0
    %2205 = vmatprep.subr.mxu0 0.0
    %2206 = vmatpush1.msra.mxu0 0.0
    %2207 = vmatprep.subr.mxu0 0.0
    %2208 = vmatpush1.msra.mxu0 0.0
    %2209 = vmatprep.subr.mxu0 0.0
    %2210 = vmatpush1.msra.mxu0 0.0
    %2211 = vmatprep.subr.mxu0 0.0
    %2212 = vmatpush1.msra.mxu0 0.0
    %2213 = vmatprep.subr.mxu0 0.0
    %2214 = vmatpush1.msra.mxu0 0.0
    %2215 = vmatprep.subr.mxu0 0.0
    %2216 = vmatpush1.msra.mxu0 0.0
    %2217 = vmatprep.subr.mxu0 0.0
    %2218 = vmatpush1.msra.mxu0 0.0
    %2219 = vmatprep.subr.mxu0 0.0
    %2220 = vmatpush1.msra.mxu0 0.0
    %2221 = vmatprep.mubr.f32.mxu0 0.0
    %2222 = vmatmul.mubr.f32.gmra.mrb[0].mxu0 %v166
    %v2223 = vpop.f32.mrb[0].mxu0
    %v2224 = vadd.f32 0.0, %v2223
    %v2225 = vpop.f32.mrb[0].mxu0
    %2226 = vdwg.mxu0
    %v2227 = vadd.f32 %v2156, %v2224
    %v2228 = vxor.u32 %v2227, 2147483648
    %v2229 = vmul.f32 %v2228, 1.442695
    %v2230 = vpow.pop %v2229
    %v2231 = vadd.f32 %v2230, 1.0
    %v2232 = vrcp.pop %v2231
    %v2233 = vmul.f32 1.0, %v2232
    %v2234 = vtanh.pop %v2227
    %v2235 = vmul.f32 %v2233, 0.0
    %2237 = vrot.lane.b32.xlu0 %v2234, 64
    %v2238 = vpop.permute.xlu0 %2237
    %v2240 = vmul.f32 %v2233, %v2238
    %2242 = vrot.lane.b32.xlu0 %v2240, 32
    %v2243 = vpop.permute.xlu0 %2242
    %v2245 = vadd.f32 %v2235, %v2243
    %v2246 = vtanh.pop %v2245
    %2248 = vrot.lane.b32.xlu0 %v2246, 64
    %v2249 = vpop.permute.xlu0 %2248
    %v2251 = vmul.f32 %v2233, %v2249
    %v2252 = vld [vmem:[#allocation2] sm:$0x3]
    %2254 = vrot.lane.b32.xlu0 %v2252, 96
    %v2255 = vpop.permute.xlu0 %2254
    %v2257 = vadd.f32 %v2251, %v2255
    %2259 = vrot.lane.b32.xlu0 %v2257, 32
    %v2260 = vpop.permute.xlu0 %2259
    %2262 = vst.msk [vmem:[#allocation2] sm:$0x3] %vm273, %v2260
    %v2263 = vld [vmem:[#allocation3 + $0x2] sm:$0x3]
    %2265 = vrot.lane.b32.xlu0 %v2251, 32
    %v2266 = vpop.permute.xlu0 %2265
    %v2267 = vsel %vm61, %v2266, 0
    %2269 = vmatprep.subr.mxu0 0.0
    %2270 = vmatpush1.msra.mxu0 %v2054
    %2271 = vmatprep.subr.mxu0 0.0
    %2272 = vmatpush1.msra.mxu0 %v2055
    %2273 = vmatprep.subr.mxu0 0.0
    %2274 = vmatpush1.msra.mxu0 %v2056
    %2275 = vmatprep.subr.mxu0 0.0
    %2276 = vmatpush1.msra.mxu0 %v2057
    %2277 = vmatprep.subr.mxu0 0.0
    %2278 = vmatpush1.msra.mxu0 0.0
    %2279 = vmatprep.subr.mxu0 0.0
    %2280 = vmatpush1.msra.mxu0 0.0
    %2281 = vmatprep.subr.mxu0 0.0
    %2282 = vmatpush1.msra.mxu0 0.0
    %2283 = vmatprep.subr.mxu0 0.0
    %2284 = vmatpush1.msra.mxu0 0.0
    %2285 = vmatprep.subr.mxu0 0.0
    %2286 = vmatpush1.msra.mxu0 0.0
    %2287 = vmatprep.subr.mxu0 0.0
    %2288 = vmatpush1.msra.mxu0 0.0
    %2289 = vmatprep.subr.mxu0 0.0
    %2290 = vmatpush1.msra.mxu0 0.0
    %2291 = vmatprep.subr.mxu0 0.0
    %2292 = vmatpush1.msra.mxu0 0.0
    %2293 = vmatprep.subr.mxu0 0.0
    %2294 = vmatpush1.msra.mxu0 0.0
    %2295 = vmatprep.subr.mxu0 0.0
    %2296 = vmatpush1.msra.mxu0 0.0
    %2297 = vmatprep.subr.mxu0 0.0
    %2298 = vmatpush1.msra.mxu0 0.0
    %2299 = vmatprep.subr.mxu0 0.0
    %2300 = vmatpush1.msra.mxu0 0.0
    %2301 = vmatprep.subr.mxu0 0.0
    %2302 = vmatpush1.msra.mxu0 0.0
    %2303 = vmatprep.subr.mxu0 0.0
    %2304 = vmatpush1.msra.mxu0 0.0
    %2305 = vmatprep.subr.mxu0 0.0
    %2306 = vmatpush1.msra.mxu0 0.0
    %2307 = vmatprep.subr.mxu0 0.0
    %2308 = vmatpush1.msra.mxu0 0.0
    %2309 = vmatprep.subr.mxu0 0.0
    %2310 = vmatpush1.msra.mxu0 0.0
    %2311 = vmatprep.subr.mxu0 0.0
    %2312 = vmatpush1.msra.mxu0 0.0
    %2313 = vmatprep.subr.mxu0 0.0
    %2314 = vmatpush1.msra.mxu0 0.0
    %2315 = vmatprep.subr.mxu0 0.0
    %2316 = vmatpush1.msra.mxu0 0.0
    %2317 = vmatprep.subr.mxu0 0.0
    %2318 = vmatpush1.msra.mxu0 0.0
    %2319 = vmatprep.subr.mxu0 0.0
    %2320 = vmatpush1.msra.mxu0 0.0
    %2321 = vmatprep.subr.mxu0 0.0
    %2322 = vmatpush1.msra.mxu0 0.0
    %2323 = vmatprep.subr.mxu0 0.0
    %2324 = vmatpush1.msra.mxu0 0.0
    %2325 = vmatprep.subr.mxu0 0.0
    %2326 = vmatpush1.msra.mxu0 0.0
    %2327 = vmatprep.subr.mxu0 0.0
    %2328 = vmatpush1.msra.mxu0 0.0
    %2329 = vmatprep.subr.mxu0 0.0
    %2330 = vmatpush1.msra.mxu0 0.0
    %2331 = vmatprep.subr.mxu0 0.0
    %2332 = vmatpush1.msra.mxu0 0.0
    %2333 = vmatprep.mubr.f32.mxu0 0.0
    %2334 = vmatmul.mubr.f32.gmra.mrb[0].mxu0 %v2267
    %v2335 = vpop.f32.mrb[0].mxu0
    %v2336 = vadd.f32 0.0, %v2335
    %v2337 = vpop.f32.mrb[0].mxu0
    %2338 = vdwg.mxu0
    %v2339 = vadd.f32 %v2263, %v2336
    %v2340 = vxor.u32 %v2339, 2147483648
    %v2341 = vmul.f32 %v2340, 1.442695
    %v2342 = vpow.pop %v2341
    %v2343 = vadd.f32 %v2342, 1.0
    %v2344 = vrcp.pop %v2343
    %v2345 = vmul.f32 1.0, %v2344
    %v2346 = vtanh.pop %v2339
    %v2347 = vmul.f32 %v2345, %v2245
    %2349 = vrot.lane.b32.xlu0 %v2346, 64
    %v2350 = vpop.permute.xlu0 %2349
    %v2352 = vmul.f32 %v2345, %v2350
    %2354 = vrot.lane.b32.xlu0 %v2352, 32
    %v2355 = vpop.permute.xlu0 %2354
    %v2357 = vadd.f32 %v2347, %v2355
    %v2358 = vtanh.pop %v2357
    %2360 = vrot.lane.b32.xlu0 %v2358, 64
    %v2361 = vpop.permute.xlu0 %2360
    %v2363 = vmul.f32 %v2345, %v2361
    %v2364 = vld [vmem:[#allocation2 + $0x2] sm:$0x3]
    %2366 = vrot.lane.b32.xlu0 %v2364, 96
    %v2367 = vpop.permute.xlu0 %2366
    %v2369 = vadd.f32 %v2363, %v2367
    %2371 = vrot.lane.b32.xlu0 %v2369, 32
    %v2372 = vpop.permute.xlu0 %2371
    %2374 = vst.msk [vmem:[#allocation2 + $0x2] sm:$0x3] %vm273, %v2372
    %v2375 = vld [vmem:[#allocation3 + $0x4] sm:$0x3]
    %2377 = vrot.lane.b32.xlu0 %v2363, 32
    %v2378 = vpop.permute.xlu0 %2377
    %v2379 = vsel %vm61, %v2378, 0
    %2381 = vmatprep.subr.mxu0 0.0
    %2382 = vmatpush1.msra.mxu0 %v2054
    %2383 = vmatprep.subr.mxu0 0.0
    %2384 = vmatpush1.msra.mxu0 %v2055
    %2385 = vmatprep.subr.mxu0 0.0
    %2386 = vmatpush1.msra.mxu0 %v2056
    %2387 = vmatprep.subr.mxu0 0.0
    %2388 = vmatpush1.msra.mxu0 %v2057
    %2389 = vmatprep.subr.mxu0 0.0
    %2390 = vmatpush1.msra.mxu0 0.0
    %2391 = vmatprep.subr.mxu0 0.0
    %2392 = vmatpush1.msra.mxu0 0.0
    %2393 = vmatprep.subr.mxu0 0.0
    %2394 = vmatpush1.msra.mxu0 0.0
    %2395 = vmatprep.subr.mxu0 0.0
    %2396 = vmatpush1.msra.mxu0 0.0
    %2397 = vmatprep.subr.mxu0 0.0
    %2398 = vmatpush1.msra.mxu0 0.0
    %2399 = vmatprep.subr.mxu0 0.0
    %2400 = vmatpush1.msra.mxu0 0.0
    %2401 = vmatprep.subr.mxu0 0.0
    %2402 = vmatpush1.msra.mxu0 0.0
    %2403 = vmatprep.subr.mxu0 0.0
    %2404 = vmatpush1.msra.mxu0 0.0
    %2405 = vmatprep.subr.mxu0 0.0
    %2406 = vmatpush1.msra.mxu0 0.0
    %2407 = vmatprep.subr.mxu0 0.0
    %2408 = vmatpush1.msra.mxu0 0.0
    %2409 = vmatprep.subr.mxu0 0.0
    %2410 = vmatpush1.msra.mxu0 0.0
    %2411 = vmatprep.subr.mxu0 0.0
    %2412 = vmatpush1.msra.mxu0 0.0
    %2413 = vmatprep.subr.mxu0 0.0
    %2414 = vmatpush1.msra.mxu0 0.0
    %2415 = vmatprep.subr.mxu0 0.0
    %2416 = vmatpush1.msra.mxu0 0.0
    %2417 = vmatprep.subr.mxu0 0.0
    %2418 = vmatpush1.msra.mxu0 0.0
    %2419 = vmatprep.subr.mxu0 0.0
    %2420 = vmatpush1.msra.mxu0 0.0
    %2421 = vmatprep.subr.mxu0 0.0
    %2422 = vmatpush1.msra.mxu0 0.0
    %2423 = vmatprep.subr.mxu0 0.0
    %2424 = vmatpush1.msra.mxu0 0.0
    %2425 = vmatprep.subr.mxu0 0.0
    %2426 = vmatpush1.msra.mxu0 0.0
    %2427 = vmatprep.subr.mxu0 0.0
    %2428 = vmatpush1.msra.mxu0 0.0
    %2429 = vmatprep.subr.mxu0 0.0
    %2430 = vmatpush1.msra.mxu0 0.0
    %2431 = vmatprep.subr.mxu0 0.0
    %2432 = vmatpush1.msra.mxu0 0.0
    %2433 = vmatprep.subr.mxu0 0.0
    %2434 = vmatpush1.msra.mxu0 0.0
    %2435 = vmatprep.subr.mxu0 0.0
    %2436 = vmatpush1.msra.mxu0 0.0
    %2437 = vmatprep.subr.mxu0 0.0
    %2438 = vmatpush1.msra.mxu0 0.0
    %2439 = vmatprep.subr.mxu0 0.0
    %2440 = vmatpush1.msra.mxu0 0.0
    %2441 = vmatprep.subr.mxu0 0.0
    %2442 = vmatpush1.msra.mxu0 0.0
    %2443 = vmatprep.subr.mxu0 0.0
    %2444 = vmatpush1.msra.mxu0 0.0
    %2445 = vmatprep.mubr.f32.mxu0 0.0
    %2446 = vmatmul.mubr.f32.gmra.mrb[0].mxu0 %v2379
    %v2447 = vpop.f32.mrb[0].mxu0
    %v2448 = vadd.f32 0.0, %v2447
    %v2449 = vpop.f32.mrb[0].mxu0
    %2450 = vdwg.mxu0
    %v2451 = vadd.f32 %v2375, %v2448
    %v2452 = vxor.u32 %v2451, 2147483648
    %v2453 = vmul.f32 %v2452, 1.442695
    %v2454 = vpow.pop %v2453
    %v2455 = vadd.f32 %v2454, 1.0
    %v2456 = vrcp.pop %v2455
    %v2457 = vmul.f32 1.0, %v2456
    %v2458 = vtanh.pop %v2451
    %v2459 = vmul.f32 %v2457, %v2357
    %2461 = vrot.lane.b32.xlu0 %v2458, 64
    %v2462 = vpop.permute.xlu0 %2461
    %v2464 = vmul.f32 %v2457, %v2462
    %2466 = vrot.lane.b32.xlu0 %v2464, 32
    %v2467 = vpop.permute.xlu0 %2466
    %v2469 = vadd.f32 %v2459, %v2467
    %v2470 = vtanh.pop %v2469
    %2472 = vrot.lane.b32.xlu0 %v2470, 64
    %v2473 = vpop.permute.xlu0 %2472
    %v2475 = vmul.f32 %v2457, %v2473
    %v2476 = vld [vmem:[#allocation2 + $0x4] sm:$0x3]
    %2478 = vrot.lane.b32.xlu0 %v2476, 96
    %v2479 = vpop.permute.xlu0 %2478
    %v2481 = vadd.f32 %v2475, %v2479
    %2483 = vrot.lane.b32.xlu0 %v2481, 32
    %v2484 = vpop.permute.xlu0 %2483
    %2486 = vst.msk [vmem:[#allocation2 + $0x4] sm:$0x3] %vm273, %v2484
    %v2487 = vld [vmem:[#allocation3 + $0x6] sm:$0x3]
    %2489 = vrot.lane.b32.xlu0 %v2475, 32
    %v2490 = vpop.permute.xlu0 %2489
    %v2491 = vsel %vm61, %v2490, 0
    %2493 = vmatprep.subr.mxu0 0.0
    %2494 = vmatpush1.msra.mxu0 %v2054
    %2495 = vmatprep.subr.mxu0 0.0
    %2496 = vmatpush1.msra.mxu0 %v2055
    %2497 = vmatprep.subr.mxu0 0.0
    %2498 = vmatpush1.msra.mxu0 %v2056
    %2499 = vmatprep.subr.mxu0 0.0
    %2500 = vmatpush1.msra.mxu0 %v2057
    %2501 = vmatprep.subr.mxu0 0.0
    %2502 = vmatpush1.msra.mxu0 0.0
    %2503 = vmatprep.subr.mxu0 0.0
    %2504 = vmatpush1.msra.mxu0 0.0
    %2505 = vmatprep.subr.mxu0 0.0
    %2506 = vmatpush1.msra.mxu0 0.0
    %2507 = vmatprep.subr.mxu0 0.0
    %2508 = vmatpush1.msra.mxu0 0.0
    %2509 = vmatprep.subr.mxu0 0.0
    %2510 = vmatpush1.msra.mxu0 0.0
    %2511 = vmatprep.subr.mxu0 0.0
    %2512 = vmatpush1.msra.mxu0 0.0
    %2513 = vmatprep.subr.mxu0 0.0
    %2514 = vmatpush1.msra.mxu0 0.0
    %2515 = vmatprep.subr.mxu0 0.0
    %2516 = vmatpush1.msra.mxu0 0.0
    %2517 = vmatprep.subr.mxu0 0.0
    %2518 = vmatpush1.msra.mxu0 0.0
    %2519 = vmatprep.subr.mxu0 0.0
    %2520 = vmatpush1.msra.mxu0 0.0
    %2521 = vmatprep.subr.mxu0 0.0
    %2522 = vmatpush1.msra.mxu0 0.0
    %2523 = vmatprep.subr.mxu0 0.0
    %2524 = vmatpush1.msra.mxu0 0.0
    %2525 = vmatprep.subr.mxu0 0.0
    %2526 = vmatpush1.msra.mxu0 0.0
    %2527 = vmatprep.subr.mxu0 0.0
    %2528 = vmatpush1.msra.mxu0 0.0
    %2529 = vmatprep.subr.mxu0 0.0
    %2530 = vmatpush1.msra.mxu0 0.0
    %2531 = vmatprep.subr.mxu0 0.0
    %2532 = vmatpush1.msra.mxu0 0.0
    %2533 = vmatprep.subr.mxu0 0.0
    %2534 = vmatpush1.msra.mxu0 0.0
    %2535 = vmatprep.subr.mxu0 0.0
    %2536 = vmatpush1.msra.mxu0 0.0
    %2537 = vmatprep.subr.mxu0 0.0
    %2538 = vmatpush1.msra.mxu0 0.0
    %2539 = vmatprep.subr.mxu0 0.0
    %2540 = vmatpush1.msra.mxu0 0.0
    %2541 = vmatprep.subr.mxu0 0.0
    %2542 = vmatpush1.msra.mxu0 0.0
    %2543 = vmatprep.subr.mxu0 0.0
    %2544 = vmatpush1.msra.mxu0 0.0
    %2545 = vmatprep.subr.mxu0 0.0
    %2546 = vmatpush1.msra.mxu0 0.0
    %2547 = vmatprep.subr.mxu0 0.0
    %2548 = vmatpush1.msra.mxu0 0.0
    %2549 = vmatprep.subr.mxu0 0.0
    %2550 = vmatpush1.msra.mxu0 0.0
    %2551 = vmatprep.subr.mxu0 0.0
    %2552 = vmatpush1.msra.mxu0 0.0
    %2553 = vmatprep.subr.mxu0 0.0
    %2554 = vmatpush1.msra.mxu0 0.0
    %2555 = vmatprep.subr.mxu0 0.0
    %2556 = vmatpush1.msra.mxu0 0.0
    %2557 = vmatprep.mubr.f32.mxu0 0.0
    %2558 = vmatmul.mubr.f32.gmra.mrb[0].mxu0 %v2491
    %v2559 = vpop.f32.mrb[0].mxu0
    %v2560 = vadd.f32 0.0, %v2559
    %v2561 = vpop.f32.mrb[0].mxu0
    %2562 = vdwg.mxu0
    %v2563 = vadd.f32 %v2487, %v2560
    %v2564 = vxor.u32 %v2563, 2147483648
    %v2565 = vmul.f32 %v2564, 1.442695
    %v2566 = vpow.pop %v2565
    %v2567 = vadd.f32 %v2566, 1.0
    %v2568 = vrcp.pop %v2567
    %v2569 = vmul.f32 1.0, %v2568
    %v2570 = vtanh.pop %v2563
    %v2571 = vmul.f32 %v2569, %v2469
    %2573 = vrot.lane.b32.xlu0 %v2570, 64
    %v2574 = vpop.permute.xlu0 %2573
    %v2576 = vmul.f32 %v2569, %v2574
    %2578 = vrot.lane.b32.xlu0 %v2576, 32
    %v2579 = vpop.permute.xlu0 %2578
    %v2581 = vadd.f32 %v2571, %v2579
    %v2582 = vtanh.pop %v2581
    %2584 = vrot.lane.b32.xlu0 %v2582, 64
    %v2585 = vpop.permute.xlu0 %2584
    %v2587 = vmul.f32 %v2569, %v2585
    %v2588 = vld [vmem:[#allocation2 + $0x6] sm:$0x3]
    %2590 = vrot.lane.b32.xlu0 %v2588, 96
    %v2591 = vpop.permute.xlu0 %2590
    %v2593 = vadd.f32 %v2587, %v2591
    %2595 = vrot.lane.b32.xlu0 %v2593, 32
    %v2596 = vpop.permute.xlu0 %2595
    %2598 = vst.msk [vmem:[#allocation2 + $0x6] sm:$0x3] %vm273, %v2596
    %v2599 = vld [vmem:[#allocation3 + $0x8] sm:$0x3]
    %2601 = vrot.lane.b32.xlu0 %v2587, 32
    %v2602 = vpop.permute.xlu0 %2601
    %v2603 = vsel %vm61, %v2602, 0
    %2605 = vmatprep.subr.mxu0 0.0
    %2606 = vmatpush1.msra.mxu0 %v2054
    %2607 = vmatprep.subr.mxu0 0.0
    %2608 = vmatpush1.msra.mxu0 %v2055
    %2609 = vmatprep.subr.mxu0 0.0
    %2610 = vmatpush1.msra.mxu0 %v2056
    %2611 = vmatprep.subr.mxu0 0.0
    %2612 = vmatpush1.msra.mxu0 %v2057
    %2613 = vmatprep.subr.mxu0 0.0
    %2614 = vmatpush1.msra.mxu0 0.0
    %2615 = vmatprep.subr.mxu0 0.0
    %2616 = vmatpush1.msra.mxu0 0.0
    %2617 = vmatprep.subr.mxu0 0.0
    %2618 = vmatpush1.msra.mxu0 0.0
    %2619 = vmatprep.subr.mxu0 0.0
    %2620 = vmatpush1.msra.mxu0 0.0
    %2621 = vmatprep.subr.mxu0 0.0
    %2622 = vmatpush1.msra.mxu0 0.0
    %2623 = vmatprep.subr.mxu0 0.0
    %2624 = vmatpush1.msra.mxu0 0.0
    %2625 = vmatprep.subr.mxu0 0.0
    %2626 = vmatpush1.msra.mxu0 0.0
    %2627 = vmatprep.subr.mxu0 0.0
    %2628 = vmatpush1.msra.mxu0 0.0
    %2629 = vmatprep.subr.mxu0 0.0
    %2630 = vmatpush1.msra.mxu0 0.0
    %2631 = vmatprep.subr.mxu0 0.0
    %2632 = vmatpush1.msra.mxu0 0.0
    %2633 = vmatprep.subr.mxu0 0.0
    %2634 = vmatpush1.msra.mxu0 0.0
    %2635 = vmatprep.subr.mxu0 0.0
    %2636 = vmatpush1.msra.mxu0 0.0
    %2637 = vmatprep.subr.mxu0 0.0
    %2638 = vmatpush1.msra.mxu0 0.0
    %2639 = vmatprep.subr.mxu0 0.0
    %2640 = vmatpush1.msra.mxu0 0.0
    %2641 = vmatprep.subr.mxu0 0.0
    %2642 = vmatpush1.msra.mxu0 0.0
    %2643 = vmatprep.subr.mxu0 0.0
    %2644 = vmatpush1.msra.mxu0 0.0
    %2645 = vmatprep.subr.mxu0 0.0
    %2646 = vmatpush1.msra.mxu0 0.0
    %2647 = vmatprep.subr.mxu0 0.0
    %2648 = vmatpush1.msra.mxu0 0.0
    %2649 = vmatprep.subr.mxu0 0.0
    %2650 = vmatpush1.msra.mxu0 0.0
    %2651 = vmatprep.subr.mxu0 0.0
    %2652 = vmatpush1.msra.mxu0 0.0
    %2653 = vmatprep.subr.mxu0 0.0
    %2654 = vmatpush1.msra.mxu0 0.0
    %2655 = vmatprep.subr.mxu0 0.0
    %2656 = vmatpush1.msra.mxu0 0.0
    %2657 = vmatprep.subr.mxu0 0.0
    %2658 = vmatpush1.msra.mxu0 0.0
    %2659 = vmatprep.subr.mxu0 0.0
    %2660 = vmatpush1.msra.mxu0 0.0
    %2661 = vmatprep.subr.mxu0 0.0
    %2662 = vmatpush1.msra.mxu0 0.0
    %2663 = vmatprep.subr.mxu0 0.0
    %2664 = vmatpush1.msra.mxu0 0.0
    %2665 = vmatprep.subr.mxu0 0.0
    %2666 = vmatpush1.msra.mxu0 0.0
    %2667 = vmatprep.subr.mxu0 0.0
    %2668 = vmatpush1.msra.mxu0 0.0
    %2669 = vmatprep.mubr.f32.mxu0 0.0
    %2670 = vmatmul.mubr.f32.gmra.mrb[0].mxu0 %v2603
    %v2671 = vpop.f32.mrb[0].mxu0
    %v2672 = vadd.f32 0.0, %v2671
    %v2673 = vpop.f32.mrb[0].mxu0
    %2674 = vdwg.mxu0
    %v2675 = vadd.f32 %v2599, %v2672
    %v2676 = vxor.u32 %v2675, 2147483648
    %v2677 = vmul.f32 %v2676, 1.442695
    %v2678 = vpow.pop %v2677
    %v2679 = vadd.f32 %v2678, 1.0
    %v2680 = vrcp.pop %v2679
    %v2681 = vmul.f32 1.0, %v2680
    %v2682 = vtanh.pop %v2675
    %v2683 = vmul.f32 %v2681, %v2581
    %2685 = vrot.lane.b32.xlu0 %v2682, 64
    %v2686 = vpop.permute.xlu0 %2685
    %v2688 = vmul.f32 %v2681, %v2686
    %2690 = vrot.lane.b32.xlu0 %v2688, 32
    %v2691 = vpop.permute.xlu0 %2690
    %v2693 = vadd.f32 %v2683, %v2691
    %v2694 = vtanh.pop %v2693
    %2696 = vrot.lane.b32.xlu0 %v2694, 64
    %v2697 = vpop.permute.xlu0 %2696
    %v2699 = vmul.f32 %v2681, %v2697
    %v2700 = vld [vmem:[#allocation2 + $0x8] sm:$0x3]
    %2702 = vrot.lane.b32.xlu0 %v2700, 96
    %v2703 = vpop.permute.xlu0 %2702
    %v2705 = vadd.f32 %v2699, %v2703
    %2707 = vrot.lane.b32.xlu0 %v2705, 32
    %v2708 = vpop.permute.xlu0 %2707
    %2710 = vst.msk [vmem:[#allocation2 + $0x8] sm:$0x3] %vm273, %v2708
    %v2711 = vld [vmem:[#allocation3 + $0xa] sm:$0x3]
    %2713 = vrot.lane.b32.xlu0 %v2699, 32
    %v2714 = vpop.permute.xlu0 %2713
    %v2715 = vsel %vm61, %v2714, 0
    %2717 = vmatprep.subr.mxu0 0.0
    %2718 = vmatpush1.msra.mxu0 %v2054
    %2719 = vmatprep.subr.mxu0 0.0
    %2720 = vmatpush1.msra.mxu0 %v2055
    %2721 = vmatprep.subr.mxu0 0.0
    %2722 = vmatpush1.msra.mxu0 %v2056
    %2723 = vmatprep.subr.mxu0 0.0
    %2724 = vmatpush1.msra.mxu0 %v2057
    %2725 = vmatprep.subr.mxu0 0.0
    %2726 = vmatpush1.msra.mxu0 0.0
    %2727 = vmatprep.subr.mxu0 0.0
    %2728 = vmatpush1.msra.mxu0 0.0
    %2729 = vmatprep.subr.mxu0 0.0
    %2730 = vmatpush1.msra.mxu0 0.0
    %2731 = vmatprep.subr.mxu0 0.0
    %2732 = vmatpush1.msra.mxu0 0.0
    %2733 = vmatprep.subr.mxu0 0.0
    %2734 = vmatpush1.msra.mxu0 0.0
    %2735 = vmatprep.subr.mxu0 0.0
    %2736 = vmatpush1.msra.mxu0 0.0
    %2737 = vmatprep.subr.mxu0 0.0
    %2738 = vmatpush1.msra.mxu0 0.0
    %2739 = vmatprep.subr.mxu0 0.0
    %2740 = vmatpush1.msra.mxu0 0.0
    %2741 = vmatprep.subr.mxu0 0.0
    %2742 = vmatpush1.msra.mxu0 0.0
    %2743 = vmatprep.subr.mxu0 0.0
    %2744 = vmatpush1.msra.mxu0 0.0
    %2745 = vmatprep.subr.mxu0 0.0
    %2746 = vmatpush1.msra.mxu0 0.0
    %2747 = vmatprep.subr.mxu0 0.0
    %2748 = vmatpush1.msra.mxu0 0.0
    %2749 = vmatprep.subr.mxu0 0.0
    %2750 = vmatpush1.msra.mxu0 0.0
    %2751 = vmatprep.subr.mxu0 0.0
    %2752 = vmatpush1.msra.mxu0 0.0
    %2753 = vmatprep.subr.mxu0 0.0
    %2754 = vmatpush1.msra.mxu0 0.0
    %2755 = vmatprep.subr.mxu0 0.0
    %2756 = vmatpush1.msra.mxu0 0.0
    %2757 = vmatprep.subr.mxu0 0.0
    %2758 = vmatpush1.msra.mxu0 0.0
    %2759 = vmatprep.subr.mxu0 0.0
    %2760 = vmatpush1.msra.mxu0 0.0
    %2761 = vmatprep.subr.mxu0 0.0
    %2762 = vmatpush1.msra.mxu0 0.0
    %2763 = vmatprep.subr.mxu0 0.0
    %2764 = vmatpush1.msra.mxu0 0.0
    %2765 = vmatprep.subr.mxu0 0.0
    %2766 = vmatpush1.msra.mxu0 0.0
    %2767 = vmatprep.subr.mxu0 0.0
    %2768 = vmatpush1.msra.mxu0 0.0
    %2769 = vmatprep.subr.mxu0 0.0
    %2770 = vmatpush1.msra.mxu0 0.0
    %2771 = vmatprep.subr.mxu0 0.0
    %2772 = vmatpush1.msra.mxu0 0.0
    %2773 = vmatprep.subr.mxu0 0.0
    %2774 = vmatpush1.msra.mxu0 0.0
    %2775 = vmatprep.subr.mxu0 0.0
    %2776 = vmatpush1.msra.mxu0 0.0
    %2777 = vmatprep.subr.mxu0 0.0
    %2778 = vmatpush1.msra.mxu0 0.0
    %2779 = vmatprep.subr.mxu0 0.0
    %2780 = vmatpush1.msra.mxu0 0.0
    %2781 = vmatprep.mubr.f32.mxu0 0.0
    %2782 = vmatmul.mubr.f32.gmra.mrb[0].mxu0 %v2715
    %v2783 = vpop.f32.mrb[0].mxu0
    %v2784 = vadd.f32 0.0, %v2783
    %v2785 = vpop.f32.mrb[0].mxu0
    %2786 = vdwg.mxu0
    %v2787 = vadd.f32 %v2711, %v2784
    %v2788 = vxor.u32 %v2787, 2147483648
    %v2789 = vmul.f32 %v2788, 1.442695
    %v2790 = vpow.pop %v2789
    %v2791 = vadd.f32 %v2790, 1.0
    %v2792 = vrcp.pop %v2791
    %v2793 = vmul.f32 1.0, %v2792
    %v2794 = vtanh.pop %v2787
    %v2795 = vmul.f32 %v2793, %v2693
    %2797 = vrot.lane.b32.xlu0 %v2794, 64
    %v2798 = vpop.permute.xlu0 %2797
    %v2800 = vmul.f32 %v2793, %v2798
    %2802 = vrot.lane.b32.xlu0 %v2800, 32
    %v2803 = vpop.permute.xlu0 %2802
    %v2805 = vadd.f32 %v2795, %v2803
    %v2806 = vtanh.pop %v2805
    %2808 = vrot.lane.b32.xlu0 %v2806, 64
    %v2809 = vpop.permute.xlu0 %2808
    %v2811 = vmul.f32 %v2793, %v2809
    %v2812 = vld [vmem:[#allocation2 + $0xa] sm:$0x3]
    %2814 = vrot.lane.b32.xlu0 %v2812, 96
    %v2815 = vpop.permute.xlu0 %2814
    %v2817 = vadd.f32 %v2811, %v2815
    %2819 = vrot.lane.b32.xlu0 %v2817, 32
    %v2820 = vpop.permute.xlu0 %2819
    %2822 = vst.msk [vmem:[#allocation2 + $0xa] sm:$0x3] %vm273, %v2820
    %v2823 = vld [vmem:[#allocation3 + $0xc] sm:$0x3]
    %2825 = vrot.lane.b32.xlu0 %v2811, 32
    %v2826 = vpop.permute.xlu0 %2825
    %v2827 = vsel %vm61, %v2826, 0
    %2829 = vmatprep.subr.mxu0 0.0
    %2830 = vmatpush1.msra.mxu0 %v2054
    %2831 = vmatprep.subr.mxu0 0.0
    %2832 = vmatpush1.msra.mxu0 %v2055
    %2833 = vmatprep.subr.mxu0 0.0
    %2834 = vmatpush1.msra.mxu0 %v2056
    %2835 = vmatprep.subr.mxu0 0.0
    %2836 = vmatpush1.msra.mxu0 %v2057
    %2837 = vmatprep.subr.mxu0 0.0
    %2838 = vmatpush1.msra.mxu0 0.0
    %2839 = vmatprep.subr.mxu0 0.0
    %2840 = vmatpush1.msra.mxu0 0.0
    %2841 = vmatprep.subr.mxu0 0.0
    %2842 = vmatpush1.msra.mxu0 0.0
    %2843 = vmatprep.subr.mxu0 0.0
    %2844 = vmatpush1.msra.mxu0 0.0
    %2845 = vmatprep.subr.mxu0 0.0
    %2846 = vmatpush1.msra.mxu0 0.0
    %2847 = vmatprep.subr.mxu0 0.0
    %2848 = vmatpush1.msra.mxu0 0.0
    %2849 = vmatprep.subr.mxu0 0.0
    %2850 = vmatpush1.msra.mxu0 0.0
    %2851 = vmatprep.subr.mxu0 0.0
    %2852 = vmatpush1.msra.mxu0 0.0
    %2853 = vmatprep.subr.mxu0 0.0
    %2854 = vmatpush1.msra.mxu0 0.0
    %2855 = vmatprep.subr.mxu0 0.0
    %2856 = vmatpush1.msra.mxu0 0.0
    %2857 = vmatprep.subr.mxu0 0.0
    %2858 = vmatpush1.msra.mxu0 0.0
    %2859 = vmatprep.subr.mxu0 0.0
    %2860 = vmatpush1.msra.mxu0 0.0
    %2861 = vmatprep.subr.mxu0 0.0
    %2862 = vmatpush1.msra.mxu0 0.0
    %2863 = vmatprep.subr.mxu0 0.0
    %2864 = vmatpush1.msra.mxu0 0.0
    %2865 = vmatprep.subr.mxu0 0.0
    %2866 = vmatpush1.msra.mxu0 0.0
    %2867 = vmatprep.subr.mxu0 0.0
    %2868 = vmatpush1.msra.mxu0 0.0
    %2869 = vmatprep.subr.mxu0 0.0
    %2870 = vmatpush1.msra.mxu0 0.0
    %2871 = vmatprep.subr.mxu0 0.0
    %2872 = vmatpush1.msra.mxu0 0.0
    %2873 = vmatprep.subr.mxu0 0.0
    %2874 = vmatpush1.msra.mxu0 0.0
    %2875 = vmatprep.subr.mxu0 0.0
    %2876 = vmatpush1.msra.mxu0 0.0
    %2877 = vmatprep.subr.mxu0 0.0
    %2878 = vmatpush1.msra.mxu0 0.0
    %2879 = vmatprep.subr.mxu0 0.0
    %2880 = vmatpush1.msra.mxu0 0.0
    %2881 = vmatprep.subr.mxu0 0.0
    %2882 = vmatpush1.msra.mxu0 0.0
    %2883 = vmatprep.subr.mxu0 0.0
    %2884 = vmatpush1.msra.mxu0 0.0
    %2885 = vmatprep.subr.mxu0 0.0
    %2886 = vmatpush1.msra.mxu0 0.0
    %2887 = vmatprep.subr.mxu0 0.0
    %2888 = vmatpush1.msra.mxu0 0.0
    %2889 = vmatprep.subr.mxu0 0.0
    %2890 = vmatpush1.msra.mxu0 0.0
    %2891 = vmatprep.subr.mxu0 0.0
    %2892 = vmatpush1.msra.mxu0 0.0
    %2893 = vmatprep.mubr.f32.mxu0 0.0
    %2894 = vmatmul.mubr.f32.gmra.mrb[0].mxu0 %v2827
    %v2895 = vpop.f32.mrb[0].mxu0
    %v2896 = vadd.f32 0.0, %v2895
    %v2897 = vpop.f32.mrb[0].mxu0
    %2898 = vdwg.mxu0
    %v2899 = vadd.f32 %v2823, %v2896
    %v2900 = vxor.u32 %v2899, 2147483648
    %v2901 = vmul.f32 %v2900, 1.442695
    %v2902 = vpow.pop %v2901
    %v2903 = vadd.f32 %v2902, 1.0
    %v2904 = vrcp.pop %v2903
    %v2905 = vmul.f32 1.0, %v2904
    %v2906 = vtanh.pop %v2899
    %v2907 = vmul.f32 %v2905, %v2805
    %2909 = vrot.lane.b32.xlu0 %v2906, 64
    %v2910 = vpop.permute.xlu0 %2909
    %v2912 = vmul.f32 %v2905, %v2910
    %2914 = vrot.lane.b32.xlu0 %v2912, 32
    %v2915 = vpop.permute.xlu0 %2914
    %v2917 = vadd.f32 %v2907, %v2915
    %v2918 = vtanh.pop %v2917
    %2920 = vrot.lane.b32.xlu0 %v2918, 64
    %v2921 = vpop.permute.xlu0 %2920
    %v2923 = vmul.f32 %v2905, %v2921
    %v2924 = vld [vmem:[#allocation2 + $0xc] sm:$0x3]
    %2926 = vrot.lane.b32.xlu0 %v2924, 96
    %v2927 = vpop.permute.xlu0 %2926
    %v2929 = vadd.f32 %v2923, %v2927
    %2931 = vrot.lane.b32.xlu0 %v2929, 32
    %v2932 = vpop.permute.xlu0 %2931
    %2934 = vst.msk [vmem:[#allocation2 + $0xc] sm:$0x3] %vm273, %v2932
    %v2935 = vld [vmem:[#allocation3 + $0xe] sm:$0x3]
    %2937 = vrot.lane.b32.xlu0 %v2923, 32
    %v2938 = vpop.permute.xlu0 %2937
    %v2939 = vsel %vm61, %v2938, 0
    %2941 = vmatprep.subr.mxu0 0.0
    %2942 = vmatpush1.msra.mxu0 %v2054
    %2943 = vmatprep.subr.mxu0 0.0
    %2944 = vmatpush1.msra.mxu0 %v2055
    %2945 = vmatprep.subr.mxu0 0.0
    %2946 = vmatpush1.msra.mxu0 %v2056
    %2947 = vmatprep.subr.mxu0 0.0
    %2948 = vmatpush1.msra.mxu0 %v2057
    %2949 = vmatprep.subr.mxu0 0.0
    %2950 = vmatpush1.msra.mxu0 0.0
    %2951 = vmatprep.subr.mxu0 0.0
    %2952 = vmatpush1.msra.mxu0 0.0
    %2953 = vmatprep.subr.mxu0 0.0
    %2954 = vmatpush1.msra.mxu0 0.0
    %2955 = vmatprep.subr.mxu0 0.0
    %2956 = vmatpush1.msra.mxu0 0.0
    %2957 = vmatprep.subr.mxu0 0.0
    %2958 = vmatpush1.msra.mxu0 0.0
    %2959 = vmatprep.subr.mxu0 0.0
    %2960 = vmatpush1.msra.mxu0 0.0
    %2961 = vmatprep.subr.mxu0 0.0
    %2962 = vmatpush1.msra.mxu0 0.0
    %2963 = vmatprep.subr.mxu0 0.0
    %2964 = vmatpush1.msra.mxu0 0.0
    %2965 = vmatprep.subr.mxu0 0.0
    %2966 = vmatpush1.msra.mxu0 0.0
    %2967 = vmatprep.subr.mxu0 0.0
    %2968 = vmatpush1.msra.mxu0 0.0
    %2969 = vmatprep.subr.mxu0 0.0
    %2970 = vmatpush1.msra.mxu0 0.0
    %2971 = vmatprep.subr.mxu0 0.0
    %2972 = vmatpush1.msra.mxu0 0.0
    %2973 = vmatprep.subr.mxu0 0.0
    %2974 = vmatpush1.msra.mxu0 0.0
    %2975 = vmatprep.subr.mxu0 0.0
    %2976 = vmatpush1.msra.mxu0 0.0
    %2977 = vmatprep.subr.mxu0 0.0
    %2978 = vmatpush1.msra.mxu0 0.0
    %2979 = vmatprep.subr.mxu0 0.0
    %2980 = vmatpush1.msra.mxu0 0.0
    %2981 = vmatprep.subr.mxu0 0.0
    %2982 = vmatpush1.msra.mxu0 0.0
    %2983 = vmatprep.subr.mxu0 0.0
    %2984 = vmatpush1.msra.mxu0 0.0
    %2985 = vmatprep.subr.mxu0 0.0
    %2986 = vmatpush1.msra.mxu0 0.0
    %2987 = vmatprep.subr.mxu0 0.0
    %2988 = vmatpush1.msra.mxu0 0.0
    %2989 = vmatprep.subr.mxu0 0.0
    %2990 = vmatpush1.msra.mxu0 0.0
    %2991 = vmatprep.subr.mxu0 0.0
    %2992 = vmatpush1.msra.mxu0 0.0
    %2993 = vmatprep.subr.mxu0 0.0
    %2994 = vmatpush1.msra.mxu0 0.0
    %2995 = vmatprep.subr.mxu0 0.0
    %2996 = vmatpush1.msra.mxu0 0.0
    %2997 = vmatprep.subr.mxu0 0.0
    %2998 = vmatpush1.msra.mxu0 0.0
    %2999 = vmatprep.subr.mxu0 0.0
    %3000 = vmatpush1.msra.mxu0 0.0
    %3001 = vmatprep.subr.mxu0 0.0
    %3002 = vmatpush1.msra.mxu0 0.0
    %3003 = vmatprep.subr.mxu0 0.0
    %3004 = vmatpush1.msra.mxu0 0.0
    %3005 = vmatprep.mubr.f32.mxu0 0.0
    %3006 = vmatmul.mubr.f32.gmra.mrb[0].mxu0 %v2939
    %v3007 = vpop.f32.mrb[0].mxu0
    %v3008 = vadd.f32 0.0, %v3007
    %v3009 = vpop.f32.mrb[0].mxu0
    %3010 = vdwg.mxu0
    %v3011 = vadd.f32 %v2935, %v3008
    %v3012 = vxor.u32 %v3011, 2147483648
    %v3013 = vmul.f32 %v3012, 1.442695
    %v3014 = vpow.pop %v3013
    %v3015 = vadd.f32 %v3014, 1.0
    %v3016 = vrcp.pop %v3015
    %v3017 = vmul.f32 1.0, %v3016
    %v3018 = vtanh.pop %v3011
    %v3019 = vmul.f32 %v3017, %v2917
    %3021 = vrot.lane.b32.xlu0 %v3018, 64
    %v3022 = vpop.permute.xlu0 %3021
    %v3024 = vmul.f32 %v3017, %v3022
    %3026 = vrot.lane.b32.xlu0 %v3024, 32
    %v3027 = vpop.permute.xlu0 %3026
    %v3029 = vadd.f32 %v3019, %v3027
    %v3030 = vtanh.pop %v3029
    %3032 = vrot.lane.b32.xlu0 %v3030, 64
    %v3033 = vpop.permute.xlu0 %3032
    %v3035 = vmul.f32 %v3017, %v3033
    %v3036 = vld [vmem:[#allocation2 + $0xe] sm:$0x3]
    %3038 = vrot.lane.b32.xlu0 %v3036, 96
    %v3039 = vpop.permute.xlu0 %3038
    %v3041 = vadd.f32 %v3035, %v3039
    %3043 = vrot.lane.b32.xlu0 %v3041, 32
    %v3044 = vpop.permute.xlu0 %3043
    %3046 = vst.msk [vmem:[#allocation2 + $0xe] sm:$0x3] %vm273, %v3044
    %v3047 = vld [vmem:[#allocation2] sm:$0xff]
    %v3048 = vld [vmem:[#allocation2 + $0x8] sm:$0xff]
    %3049 = vst.msk [vmem:[#allocation10] sm:$0xff] %vm61, %v3047
    %3050 = vst.msk [vmem:[#allocation10 + $0x8] sm:$0xff] %vm61, %v3048
    // Predicated region
    $region30: #{residual_lstm_forward.1} parent=1 // pred_check
      _
    $region31: #{residual_lstm_forward.1} parent=1 // pred_check_branch
      %3052 = sbr.rel (0) target = $region33
    $region32: #{residual_lstm_forward.1} parent=1 // pred_region
      %s3054 = ssub.s32 256, 256
      %3055 = vsyncadd [#allocation6], %s3054
      %s3056 = sshll.u32 [#allocation10], 4
      %s3057 = int_to_ptr.vmem [resolvable:$true] %s3056
      %3062 = dma.vmem_to_hbm [thread:$0]  %s3057, 256, %s4, [#allocation6], 128, 128, 8
    $region33: #{residual_lstm_forward.1} parent=1 // pred_fallthru
      _
    // Predicated region
    $region34: #{residual_lstm_forward.1} parent=1 // pred_check
      _
    $region35: #{residual_lstm_forward.1} parent=1 // pred_check_branch
      %3064 = sbr.rel (0) target = $region37
    $region36: #{residual_lstm_forward.1} parent=1 // pred_region
      %3065 = dma.done [#allocation6], 256
    $region37: #{residual_lstm_forward.1} parent=1 // pred_fallthru
      _
    %3066 = vsyncpa [#allocation5], 1
    %3067 = vsyncpa [#allocation8], 1
    %3068 = vsyncpa [#allocation6], 1

</llo_original>
